<compile_context>
chip_gen: v7x
topology: tpu7x:2x2x1
jax: 0.10.0
libtpu: 0.0.40
codegen_flags: <defaults>
</compile_context>

<pallas_src>
import functools

import jax
import jax.numpy as jnp
from jax.experimental import pallas as pl
from jax.experimental.pallas import tpu as pltpu

NUM_HEADS = 8
NUM_LAYERS = 4
LN_EPS = 1e-5
NEG_INF = -1e30
SENT_CLASSES = 3
SENT_PAD = 128  # lane-dense padded width for the sentiment output


def _bf(x):
    return x.astype(jnp.bfloat16)


def _layernorm(x, w, b, eps=LN_EPS):
    m = jnp.mean(x, axis=-1, keepdims=True)
    v = jnp.mean((x - m) ** 2, axis=-1, keepdims=True)
    return (x - m) * jax.lax.rsqrt(v + eps) * w + b


# ----------------------------------------------------------------------------
# Fused kernel: encoder stub + sentiment + 4 transformer layers + comm MLP
# ----------------------------------------------------------------------------
def empath_kernel(
    # resident inputs (constant block index)
    x_ref, rep_ref, colmask_ref, batchbias_ref, blockdiag_ref,
    ew_ref, eb_ref, sw1_ref, sb1_ref, sw2_ref, sb2_ref,
    # per-layer stacked weights (block index == layer)
    inw_ref, inb_ref, outw_ref, outb_ref, ln1w_ref, ln1b_ref,
    fw1_ref, fb1_ref, fw2_ref, fb2_ref, ln2w_ref, ln2b_ref,
    # communication_optimizer (resident)
    cw1_ref, cb1_ref, cw2_ref, cb2_ref,
    # outputs (all resident across the layer grid)
    behav_ref, sent_ref, pref_ref, comm_ref,
):
    layer = pl.program_id(0)

    # ------------------ layer-0 prologue ------------------------------------
    @pl.when(layer == 0)
    def _():
        # TODO(synk): pretrained 'bert-base-uncased' cannot be reproduced
        # in-script; replaced by a deterministic Linear(H,H)+tanh encoder.
        behav = jnp.tanh(
            jnp.dot(_bf(x_ref[...]), ew_ref[...],
                    preferred_element_type=jnp.float32) + eb_ref[...])
        behav_ref[...] = behav
        pref_ref[...] = behav
        # sentiment_analyzer: Linear(H,2H) -> ReLU -> Linear(2H,3) (padded).
        s = jnp.dot(_bf(behav), sw1_ref[...],
                    preferred_element_type=jnp.float32) + sb1_ref[...]
        s = jnp.maximum(s, 0.0)
        sent_ref[...] = jnp.dot(_bf(s), sw2_ref[...],
                                preferred_element_type=jnp.float32) + sb2_ref[...]
        comm_ref[...] = jnp.zeros_like(comm_ref)   # no uninitialized writeback

    SB, H = pref_ref.shape
    dH = H // NUM_HEADS
    scale = 1.0 / float(dH) ** 0.5

    x = pref_ref[...]                                          # (SB, H) f32

    # ------------------ multi-head self-attention ---------------------------
    qkv = jnp.dot(_bf(x), inw_ref[...],
                  preferred_element_type=jnp.float32) + inb_ref[...]
    q = qkv[:, 0 * H:1 * H] * scale
    k = qkv[:, 1 * H:2 * H]
    v = qkv[:, 2 * H:3 * H]

    # K_exp[m, c] = k[m // NH, c] * (c // dH == m % NH)   (m = j*NH + h)
    # Row repeat is a constant (SB*NH, SB) 0/1 matmul; head selection is a
    # constant (SB*NH, H) 0/1 mask.  Same construction for V_exp.
    colmask = colmask_ref[...]                                 # (SB*NH, H) f32
    k_rep = jnp.dot(rep_ref[...], _bf(k), preferred_element_type=jnp.float32)
    v_rep = jnp.dot(rep_ref[...], _bf(v), preferred_element_type=jnp.float32)
    k_exp = _bf(k_rep * colmask)                               # (SB*NH, H) bf16
    v_exp = _bf(v_rep * colmask)

    # scores[i, j*NH + h] = <q[i, head h], k[j, head h]>  -> (SB, SB*NH)
    scores = jax.lax.dot_general(
        _bf(q), k_exp, (((1,), (1,)), ((), ())),
        preferred_element_type=jnp.float32)
    scores = scores + batchbias_ref[...]       # -1e30 for cross-batch pairs

    # Softmax over same-(batch, head) keys.  A per-row max is a valid shift
    # (softmax is shift-invariant per group); the per-(row, head) denominator
    # is a constant block-diagonal (128,128) matmul, kept in f32.
    row_max = jnp.max(scores, axis=-1, keepdims=True)
    e = jnp.exp(scores - row_max)               # masked entries underflow to 0
    denom = jnp.dot(e, blockdiag_ref[...], preferred_element_type=jnp.float32)
    denom = jnp.maximum(denom, 1e-30)
    p = e * pl.reciprocal(denom, approx=True)   # (SB, SB*NH)

    ctx = jnp.dot(_bf(p), v_exp, preferred_element_type=jnp.float32)  # (SB, H)
    attn = jnp.dot(_bf(ctx), outw_ref[...],
                   preferred_element_type=jnp.float32) + outb_ref[...]
    h1 = _layernorm(x + attn, ln1w_ref[...], ln1b_ref[...])

    # ------------------ feed-forward -----------------------------------------
    ff = jnp.dot(_bf(h1), fw1_ref[...],
                 preferred_element_type=jnp.float32) + fb1_ref[...]
    ff = jnp.maximum(ff, 0.0)
    ff = jnp.dot(_bf(ff), fw2_ref[...],
                 preferred_element_type=jnp.float32) + fb2_ref[...]
    out = _layernorm(h1 + ff, ln2w_ref[...], ln2b_ref[...])
    pref_ref[...] = out

    # ------------------ last-layer epilogue ----------------------------------
    @pl.when(layer == NUM_LAYERS - 1)
    def _():
        c = jnp.dot(_bf(out), cw1_ref[...],
                    preferred_element_type=jnp.float32) + cb1_ref[...]
        c = jnp.maximum(c, 0.0)
        comm_ref[...] = jnp.dot(_bf(c), cw2_ref[...],
                                preferred_element_type=jnp.float32) + cb2_ref[...]


# ----------------------------------------------------------------------------
# Wrapper: one pallas_call for the whole model
# ----------------------------------------------------------------------------
def empath_fused(x2d, params, consts):
    SB, H = x2d.shape

    def full_spec(shape):
        nd = len(shape)
        return pl.BlockSpec(tuple(shape), lambda l, _n=nd: (0,) * _n)

    def stacked_spec(shape):
        inner = tuple(shape[1:])
        nd = len(inner)
        return pl.BlockSpec((None,) + inner, lambda l, _n=nd: (l,) + (0,) * _n)

    enc = params["behavior_model"]
    sent = params["sentiment_analyzer"]
    layers = params["preference_learner"]
    comm = params["communication_optimizer"]

    pre_inputs = (x2d, *consts, *enc, *sent)
    post_inputs = tuple(comm)

    in_specs = ([full_spec(a.shape) for a in pre_inputs]
                + [stacked_spec(a.shape) for a in layers]
                + [full_spec(a.shape) for a in post_inputs])

    out_shape = (jax.ShapeDtypeStruct((SB, H), jnp.float32),        # behavior
                 jax.ShapeDtypeStruct((SB, SENT_PAD), jnp.float32),  # sentiment
                 jax.ShapeDtypeStruct((SB, H), jnp.float32),        # preference
                 jax.ShapeDtypeStruct((SB, H), jnp.float32))        # comm
    out_specs = tuple(full_spec(s.shape) for s in out_shape)

    return pl.pallas_call(
        empath_kernel,
        grid=(NUM_LAYERS,),
        in_specs=in_specs,
        out_specs=out_specs,
        out_shape=out_shape,
        compiler_params=pltpu.CompilerParams(
            dimension_semantics=("arbitrary",),      # layers are sequential
            vmem_limit_bytes=32 * 1024 * 1024),      # explicit budget (v7x)
    )(*pre_inputs, *layers, *post_inputs)


# ----------------------------------------------------------------------------
# Host-side constants for the lane-dense attention formulation
# ----------------------------------------------------------------------------
def build_constants(SB, B, H):
    NH = NUM_HEADS
    dH = H // NH
    m = jnp.arange(SB * NH)
    c = jnp.arange(H)
    i = jnp.arange(SB)
    # row-repeat: rep[m, j] = (m // NH == j)
    rep = (m[:, None] // NH == jnp.arange(SB)[None, :]).astype(jnp.bfloat16)
    # head column mask: colmask[m, c] = (c // dH == m % NH)
    colmask = ((c[None, :] // dH) == (m[:, None] % NH)).astype(jnp.float32)
    # additive cross-batch mask (rows flattened s-major, b-minor)
    batchbias = jnp.where((i[:, None] % B) == ((m[None, :] // NH) % B),
                          0.0, NEG_INF).astype(jnp.float32)
    # block-diagonal head pooling: blockdiag[m, m'] = (m % NH == m' % NH)
    blockdiag = ((m[:, None] % NH) == (m[None, :] % NH)).astype(jnp.float32)
    return rep, colmask, batchbias, blockdiag


# ----------------------------------------------------------------------------
# Parameter init (deterministic, synthetic; weights bf16, biases/LN f32)
# ----------------------------------------------------------------------------
def init_params(key, H):
    scale = 0.02
    keys = iter(jax.random.split(key, 64))

    def w(i, o):
        return (scale * jax.random.normal(next(keys), (i, o), jnp.float32)
                ).astype(jnp.bfloat16)

    def b(o):
        return scale * jax.random.normal(next(keys), (1, o), jnp.float32)

    params = {}

    # behavior_model stub (BERT replacement): Linear(H, H) + tanh.
    params["behavior_model"] = (w(H, H), b(H))

    # sentiment_analyzer: Linear(H,2H) -> ReLU -> Linear(2H,3); the 3-wide
    # output is zero-padded to SENT_PAD columns for a lane-dense store.
    sw2 = w(2 * H, SENT_CLASSES)
    sb2 = b(SENT_CLASSES)
    sw2p = jnp.pad(sw2, ((0, 0), (0, SENT_PAD - SENT_CLASSES)))
    sb2p = jnp.pad(sb2, ((0, 0), (0, SENT_PAD - SENT_CLASSES)))
    params["sentiment_analyzer"] = (w(H, 2 * H), b(2 * H), sw2p, sb2p)

    # preference_learner: 4 post-norm encoder layers, weights stacked along a
    # leading layer axis so one pallas_call streams them with the grid.
    per_layer = []
    for _ in range(NUM_LAYERS):
        inw, inb = w(H, 3 * H), b(3 * H)       # in_proj (q|k|v)
        outw, outb = w(H, H), b(H)             # out_proj
        fw1, fb1 = w(H, 4 * H), b(4 * H)       # FFN
        fw2, fb2 = w(4 * H, H), b(H)
        ln1w = jnp.ones((1, H), jnp.float32)
        ln1b = jnp.zeros((1, H), jnp.float32)
        ln2w = jnp.ones((1, H), jnp.float32)
        ln2b = jnp.zeros((1, H), jnp.float32)
        per_layer.append((inw, inb, outw, outb, ln1w, ln1b,
                          fw1, fb1, fw2, fb2, ln2w, ln2b))
    params["preference_learner"] = tuple(
        jnp.stack([layer[i] for layer in per_layer], axis=0) for i in range(12))

    # communication_optimizer: Linear(H,2H) -> ReLU -> Linear(2H,H).
    params["communication_optimizer"] = (w(H, 2 * H), b(2 * H),
                                         w(2 * H, H), b(H))
    return params


# ----------------------------------------------------------------------------
# Full forward
# ----------------------------------------------------------------------------
@jax.jit
def empath_model_forward(x, params, consts):
    S, B, H = x.shape
    x2d = x.reshape(S * B, H)
    behav2d, sent2d_p, pref2d, comm2d = empath_fused(x2d, params, consts)
    return {
        "behavior_features": behav2d.reshape(S, B, H),
        "sentiment_scores": sent2d_p[:, :SENT_CLASSES].reshape(S, B, SENT_CLASSES),
        "preference_features": pref2d.reshape(S, B, H),
        "communication_features": comm2d.reshape(S, B, H),
    }


if __name__ == "__main__":
    S, B, H = 8, 2, 128   # seq, batch, hidden (H divisible by nhead=8)
    key = jax.random.PRNGKey(0)
    k_x, k_p = jax.random.split(key)
    x = jax.random.normal(k_x, (S, B, H), jnp.float32)
    params = init_params(k_p, H)
    consts = build_constants(S * B, B, H)

    out = jax.block_until_ready(empath_model_forward(x, params, consts))

    assert out["behavior_features"].shape == (S, B, H)
    assert out["sentiment_scores"].shape == (S, B, SENT_CLASSES)
    assert out["preference_features"].shape == (S, B, H)
    assert out["communication_features"].shape == (S, B, H)
    for v in out.values():
        assert bool(jnp.all(jnp.isfinite(v)))

    print("KERNEL_OK")
</pallas_src>

<mosaic_0001>
module attributes {stable_mosaic.version = 11 : i64} {
  func.func @empath_kernel(%arg0: i32, %arg1: memref<16x128xf32, #tpu.memory_space<vmem>>, %arg2: memref<128x16xbf16, #tpu.memory_space<vmem>>, %arg3: memref<128x128xf32, #tpu.memory_space<vmem>>, %arg4: memref<16x128xf32, #tpu.memory_space<vmem>>, %arg5: memref<128x128xf32, #tpu.memory_space<vmem>>, %arg6: memref<128x128xbf16, #tpu.memory_space<vmem>>, %arg7: memref<1x128xf32, #tpu.memory_space<vmem>>, %arg8: memref<128x256xbf16, #tpu.memory_space<vmem>>, %arg9: memref<1x256xf32, #tpu.memory_space<vmem>>, %arg10: memref<256x128xbf16, #tpu.memory_space<vmem>>, %arg11: memref<1x128xf32, #tpu.memory_space<vmem>>, %arg12: memref<1x128x384xbf16, #tpu.memory_space<vmem>>, %arg13: memref<1x1x384xf32, #tpu.memory_space<vmem>>, %arg14: memref<1x128x128xbf16, #tpu.memory_space<vmem>>, %arg15: memref<1x1x128xf32, #tpu.memory_space<vmem>>, %arg16: memref<1x1x128xf32, #tpu.memory_space<vmem>>, %arg17: memref<1x1x128xf32, #tpu.memory_space<vmem>>, %arg18: memref<1x128x512xbf16, #tpu.memory_space<vmem>>, %arg19: memref<1x1x512xf32, #tpu.memory_space<vmem>>, %arg20: memref<1x512x128xbf16, #tpu.memory_space<vmem>>, %arg21: memref<1x1x128xf32, #tpu.memory_space<vmem>>, %arg22: memref<1x1x128xf32, #tpu.memory_space<vmem>>, %arg23: memref<1x1x128xf32, #tpu.memory_space<vmem>>, %arg24: memref<128x256xbf16, #tpu.memory_space<vmem>>, %arg25: memref<1x256xf32, #tpu.memory_space<vmem>>, %arg26: memref<256x128xbf16, #tpu.memory_space<vmem>>, %arg27: memref<1x128xf32, #tpu.memory_space<vmem>>, %arg28: memref<16x128xf32, #tpu.memory_space<vmem>>, %arg29: memref<16x128xf32, #tpu.memory_space<vmem>>, %arg30: memref<16x128xf32, #tpu.memory_space<vmem>>, %arg31: memref<16x128xf32, #tpu.memory_space<vmem>>) attributes {dimension_semantics = [#tpu.dimension_semantics<arbitrary>], iteration_bounds = array<i64: 4>, scalar_prefetch = 0 : i64, scratch_operands = 0 : i64, tpu.core_type = #tpu.core_type<tc>, window_params = [{pipeline_mode = #tpu.pipeline_mode<synchronous>, transform_indices = @transform_0, window_bounds = array<i64: 16, 128>}, {pipeline_mode = #tpu.pipeline_mode<synchronous>, transform_indices = @transform_1, window_bounds = array<i64: 128, 16>}, {pipeline_mode = #tpu.pipeline_mode<synchronous>, transform_indices = @transform_2, window_bounds = array<i64: 128, 128>}, {pipeline_mode = #tpu.pipeline_mode<synchronous>, transform_indices = @transform_3, window_bounds = array<i64: 16, 128>}, {pipeline_mode = #tpu.pipeline_mode<synchronous>, transform_indices = @transform_4, window_bounds = array<i64: 128, 128>}, {pipeline_mode = #tpu.pipeline_mode<synchronous>, transform_indices = @transform_5, window_bounds = array<i64: 128, 128>}, {pipeline_mode = #tpu.pipeline_mode<synchronous>, transform_indices = @transform_6, window_bounds = array<i64: 1, 128>}, {pipeline_mode = #tpu.pipeline_mode<synchronous>, transform_indices = @transform_7, window_bounds = array<i64: 128, 256>}, {pipeline_mode = #tpu.pipeline_mode<synchronous>, transform_indices = @transform_8, window_bounds = array<i64: 1, 256>}, {pipeline_mode = #tpu.pipeline_mode<synchronous>, transform_indices = @transform_9, window_bounds = array<i64: 256, 128>}, {pipeline_mode = #tpu.pipeline_mode<synchronous>, transform_indices = @transform_10, window_bounds = array<i64: 1, 128>}, {transform_indices = @transform_11, window_bounds = array<i64: 1, 128, 384>}, {transform_indices = @transform_12, window_bounds = array<i64: 1, 1, 384>}, {transform_indices = @transform_13, window_bounds = array<i64: 1, 128, 128>}, {transform_indices = @transform_14, window_bounds = array<i64: 1, 1, 128>}, {transform_indices = @transform_15, window_bounds = array<i64: 1, 1, 128>}, {transform_indices = @transform_16, window_bounds = array<i64: 1, 1, 128>}, {transform_indices = @transform_17, window_bounds = array<i64: 1, 128, 512>}, {transform_indices = @transform_18, window_bounds = array<i64: 1, 1, 512>}, {transform_indices = @transform_19, window_bounds = array<i64: 1, 512, 128>}, {transform_indices = @transform_20, window_bounds = array<i64: 1, 1, 128>}, {transform_indices = @transform_21, window_bounds = array<i64: 1, 1, 128>}, {transform_indices = @transform_22, window_bounds = array<i64: 1, 1, 128>}, {pipeline_mode = #tpu.pipeline_mode<synchronous>, transform_indices = @transform_23, window_bounds = array<i64: 128, 256>}, {pipeline_mode = #tpu.pipeline_mode<synchronous>, transform_indices = @transform_24, window_bounds = array<i64: 1, 256>}, {pipeline_mode = #tpu.pipeline_mode<synchronous>, transform_indices = @transform_25, window_bounds = array<i64: 256, 128>}, {pipeline_mode = #tpu.pipeline_mode<synchronous>, transform_indices = @transform_26, window_bounds = array<i64: 1, 128>}, {pipeline_mode = #tpu.pipeline_mode<synchronous>, transform_indices = @transform_27, window_bounds = array<i64: 16, 128>}, {pipeline_mode = #tpu.pipeline_mode<synchronous>, transform_indices = @transform_28, window_bounds = array<i64: 16, 128>}, {pipeline_mode = #tpu.pipeline_mode<synchronous>, transform_indices = @transform_29, window_bounds = array<i64: 16, 128>}, {pipeline_mode = #tpu.pipeline_mode<synchronous>, transform_indices = @transform_30, window_bounds = array<i64: 16, 128>}]} {
    %c0_i32 = arith.constant 0 : i32
    %0 = arith.cmpi eq, %arg0, %c0_i32 : i32
    %1 = arith.extui %0 : i1 to i32
    %c0_i32_0 = arith.constant 0 : i32
    %2 = arith.cmpi ne, %1, %c0_i32_0 : i32
    scf.if %2 {
      %c0_73 = arith.constant 0 : index
      %c0_74 = arith.constant 0 : index
      %129 = vector.load %arg1[%c0_73, %c0_74] : memref<16x128xf32, #tpu.memory_space<vmem>>, vector<16x128xf32>
      %130 = arith.truncf %129 : vector<16x128xf32> to vector<16x128xbf16>
      %c0_75 = arith.constant 0 : index
      %c0_76 = arith.constant 0 : index
      %131 = vector.load %arg6[%c0_75, %c0_76] : memref<128x128xbf16, #tpu.memory_space<vmem>>, vector<128x128xbf16>
      %cst_77 = arith.constant dense<0.000000e+00> : vector<16x128xf32>
      %132 = tpu.matmul %130, %131, %cst_77 {dimension_numbers = #tpu.dot_dimension_numbers<[1], [0], [0], [1], [0, 0, 1, 1], [], []>} : vector<16x128xbf16>, vector<128x128xbf16>, vector<16x128xf32> -> vector<16x128xf32>
      %c0_78 = arith.constant 0 : index
      %c0_79 = arith.constant 0 : index
      %133 = vector.load %arg7[%c0_78, %c0_79] : memref<1x128xf32, #tpu.memory_space<vmem>>, vector<1x128xf32>
      %134 = vector.broadcast %133 : vector<1x128xf32> to vector<16x128xf32>
      %135 = arith.addf %132, %134 : vector<16x128xf32>
      %136 = math.tanh %135 : vector<16x128xf32>
      %c0_80 = arith.constant 0 : index
      %c0_81 = arith.constant 0 : index
      %137 = vector.load %arg28[%c0_80, %c0_81] : memref<16x128xf32, #tpu.memory_space<vmem>>, vector<16x128xf32>
      tpu.vector_store %arg28[%c0_80, %c0_81], %136 {strides = array<i32>} : memref<16x128xf32, #tpu.memory_space<vmem>>, vector<16x128xf32>,
      %c0_82 = arith.constant 0 : index
      %c0_83 = arith.constant 0 : index
      %138 = vector.load %arg30[%c0_82, %c0_83] : memref<16x128xf32, #tpu.memory_space<vmem>>, vector<16x128xf32>
      tpu.vector_store %arg30[%c0_82, %c0_83], %136 {strides = array<i32>} : memref<16x128xf32, #tpu.memory_space<vmem>>, vector<16x128xf32>,
      %139 = arith.truncf %136 : vector<16x128xf32> to vector<16x128xbf16>
      %c0_84 = arith.constant 0 : index
      %c0_85 = arith.constant 0 : index
      %140 = vector.load %arg8[%c0_84, %c0_85] : memref<128x256xbf16, #tpu.memory_space<vmem>>, vector<128x256xbf16>
      %cst_86 = arith.constant dense<0.000000e+00> : vector<16x256xf32>
      %141 = tpu.matmul %139, %140, %cst_86 {dimension_numbers = #tpu.dot_dimension_numbers<[1], [0], [0], [1], [0, 0, 1, 1], [], []>} : vector<16x128xbf16>, vector<128x256xbf16>, vector<16x256xf32> -> vector<16x256xf32>
      %c0_87 = arith.constant 0 : index
      %c0_88 = arith.constant 0 : index
      %142 = vector.load %arg9[%c0_87, %c0_88] : memref<1x256xf32, #tpu.memory_space<vmem>>, vector<1x256xf32>
      %143 = vector.broadcast %142 : vector<1x256xf32> to vector<16x256xf32>
      %144 = arith.addf %141, %143 : vector<16x256xf32>
      %cst_89 = arith.constant 0.000000e+00 : f32
      %145 = vector.broadcast %cst_89 : f32 to vector<16x256xf32>
      %146 = arith.maximumf %144, %145 : vector<16x256xf32>
      %147 = arith.truncf %146 : vector<16x256xf32> to vector<16x256xbf16>
      %c0_90 = arith.constant 0 : index
      %c0_91 = arith.constant 0 : index
      %148 = vector.load %arg10[%c0_90, %c0_91] : memref<256x128xbf16, #tpu.memory_space<vmem>>, vector<256x128xbf16>
      %cst_92 = arith.constant dense<0.000000e+00> : vector<16x128xf32>
      %149 = tpu.matmul %147, %148, %cst_92 {dimension_numbers = #tpu.dot_dimension_numbers<[1], [0], [0], [1], [0, 0, 1, 1], [], []>} : vector<16x256xbf16>, vector<256x128xbf16>, vector<16x128xf32> -> vector<16x128xf32>
      %c0_93 = arith.constant 0 : index
      %c0_94 = arith.constant 0 : index
      %150 = vector.load %arg11[%c0_93, %c0_94] : memref<1x128xf32, #tpu.memory_space<vmem>>, vector<1x128xf32>
      %151 = vector.broadcast %150 : vector<1x128xf32> to vector<16x128xf32>
      %152 = arith.addf %149, %151 : vector<16x128xf32>
      %c0_95 = arith.constant 0 : index
      %c0_96 = arith.constant 0 : index
      %153 = vector.load %arg29[%c0_95, %c0_96] : memref<16x128xf32, #tpu.memory_space<vmem>>, vector<16x128xf32>
      tpu.vector_store %arg29[%c0_95, %c0_96], %152 {strides = array<i32>} : memref<16x128xf32, #tpu.memory_space<vmem>>, vector<16x128xf32>,
      %cst_97 = arith.constant 0.000000e+00 : f32
      %154 = vector.broadcast %cst_97 : f32 to vector<16x128xf32>
      %c0_98 = arith.constant 0 : index
      %c0_99 = arith.constant 0 : index
      %155 = vector.load %arg31[%c0_98, %c0_99] : memref<16x128xf32, #tpu.memory_space<vmem>>, vector<16x128xf32>
      tpu.vector_store %arg31[%c0_98, %c0_99], %154 {strides = array<i32>} : memref<16x128xf32, #tpu.memory_space<vmem>>, vector<16x128xf32>,
    } else {
    }
    %c0 = arith.constant 0 : index
    %c0_1 = arith.constant 0 : index
    %3 = vector.load %arg30[%c0, %c0_1] : memref<16x128xf32, #tpu.memory_space<vmem>>, vector<16x128xf32>
    %4 = arith.truncf %3 : vector<16x128xf32> to vector<16x128xbf16>
    %c0_2 = arith.constant 0 : index
    %c0_3 = arith.constant 0 : index
    %c0_4 = arith.constant 0 : index
    %5 = vector.load %arg12[%c0_2, %c0_3, %c0_4] : memref<1x128x384xbf16, #tpu.memory_space<vmem>>, vector<1x128x384xbf16>
    %6 = vector.shape_cast %5 : vector<1x128x384xbf16> to vector<128x384xbf16>
    %cst = arith.constant dense<0.000000e+00> : vector<16x384xf32>
    %7 = tpu.matmul %4, %6, %cst {dimension_numbers = #tpu.dot_dimension_numbers<[1], [0], [0], [1], [0, 0, 1, 1], [], []>} : vector<16x128xbf16>, vector<128x384xbf16>, vector<16x384xf32> -> vector<16x384xf32>
    %c0_5 = arith.constant 0 : index
    %c0_6 = arith.constant 0 : index
    %c0_7 = arith.constant 0 : index
    %8 = vector.load %arg13[%c0_5, %c0_6, %c0_7] : memref<1x1x384xf32, #tpu.memory_space<vmem>>, vector<1x1x384xf32>
    %9 = vector.shape_cast %8 : vector<1x1x384xf32> to vector<1x384xf32>
    %10 = vector.broadcast %9 : vector<1x384xf32> to vector<16x384xf32>
    %11 = arith.addf %7, %10 : vector<16x384xf32>
    %12 = vector.extract_strided_slice %11 {offsets = [0, 0], sizes = [16, 128], strides = [1, 1]} : vector<16x384xf32> to vector<16x128xf32>
    %cst_8 = arith.constant 2.500000e-01 : f32
    %13 = vector.broadcast %cst_8 : f32 to vector<16x128xf32>
    %14 = arith.mulf %12, %13 : vector<16x128xf32>
    %15 = vector.extract_strided_slice %11 {offsets = [0, 128], sizes = [16, 128], strides = [1, 1]} : vector<16x384xf32> to vector<16x128xf32>
    %16 = vector.extract_strided_slice %11 {offsets = [0, 256], sizes = [16, 128], strides = [1, 1]} : vector<16x384xf32> to vector<16x128xf32>
    %c0_9 = arith.constant 0 : index
    %c0_10 = arith.constant 0 : index
    %17 = vector.load %arg3[%c0_9, %c0_10] : memref<128x128xf32, #tpu.memory_space<vmem>>, vector<128x128xf32>
    %c0_11 = arith.constant 0 : index
    %c0_12 = arith.constant 0 : index
    %18 = vector.load %arg2[%c0_11, %c0_12] : memref<128x16xbf16, #tpu.memory_space<vmem>>, vector<128x16xbf16>
    %19 = arith.truncf %15 : vector<16x128xf32> to vector<16x128xbf16>
    %cst_13 = arith.constant dense<0.000000e+00> : vector<128x128xf32>
    %20 = tpu.matmul %18, %19, %cst_13 {dimension_numbers = #tpu.dot_dimension_numbers<[1], [0], [0], [1], [0, 0, 1, 1], [], []>} : vector<128x16xbf16>, vector<16x128xbf16>, vector<128x128xf32> -> vector<128x128xf32>
    %c0_14 = arith.constant 0 : index
    %c0_15 = arith.constant 0 : index
    %21 = vector.load %arg2[%c0_14, %c0_15] : memref<128x16xbf16, #tpu.memory_space<vmem>>, vector<128x16xbf16>
    %22 = arith.truncf %16 : vector<16x128xf32> to vector<16x128xbf16>
    %cst_16 = arith.constant dense<0.000000e+00> : vector<128x128xf32>
    %23 = tpu.matmul %21, %22, %cst_16 {dimension_numbers = #tpu.dot_dimension_numbers<[1], [0], [0], [1], [0, 0, 1, 1], [], []>} : vector<128x16xbf16>, vector<16x128xbf16>, vector<128x128xf32> -> vector<128x128xf32>
    %24 = arith.mulf %20, %17 : vector<128x128xf32>
    %25 = arith.truncf %24 : vector<128x128xf32> to vector<128x128xbf16>
    %26 = arith.mulf %23, %17 : vector<128x128xf32>
    %27 = arith.truncf %26 : vector<128x128xf32> to vector<128x128xbf16>
    %28 = arith.truncf %14 : vector<16x128xf32> to vector<16x128xbf16>
    %cst_17 = arith.constant dense<0.000000e+00> : vector<16x128xf32>
    %29 = tpu.matmul %28, %25, %cst_17 {dimension_numbers = #tpu.dot_dimension_numbers<[1], [1], [0], [0], [0, 0, 1, 0], [], []>} : vector<16x128xbf16>, vector<128x128xbf16>, vector<16x128xf32> -> vector<16x128xf32>
    %c0_18 = arith.constant 0 : index
    %c0_19 = arith.constant 0 : index
    %30 = vector.load %arg4[%c0_18, %c0_19] : memref<16x128xf32, #tpu.memory_space<vmem>>, vector<16x128xf32>
    %31 = arith.addf %29, %30 : vector<16x128xf32>
    %cst_20 = arith.constant dense<0xFF800000> : vector<16xf32>
    %32 = vector.multi_reduction <maximumf>, %31, %cst_20 [1] : vector<16x128xf32> to vector<16xf32>
    %33 = vector.shape_cast %32 : vector<16xf32> to vector<16x1xf32>
    %34 = vector.broadcast %33 : vector<16x1xf32> to vector<16x128xf32>
    %35 = arith.subf %31, %34 : vector<16x128xf32>
    %36 = math.exp %35 : vector<16x128xf32>
    %c0_21 = arith.constant 0 : index
    %c0_22 = arith.constant 0 : index
    %37 = vector.load %arg5[%c0_21, %c0_22] : memref<128x128xf32, #tpu.memory_space<vmem>>, vector<128x128xf32>
    %cst_23 = arith.constant dense<0.000000e+00> : vector<16x128xf32>
    %38 = tpu.matmul %36, %37, %cst_23 {dimension_numbers = #tpu.dot_dimension_numbers<[1], [0], [0], [1], [0, 0, 1, 1], [], []>} : vector<16x128xf32>, vector<128x128xf32>, vector<16x128xf32> -> vector<16x128xf32>
    %cst_24 = arith.constant 1.000000e-30 : f32
    %39 = vector.broadcast %cst_24 : f32 to vector<16x128xf32>
    %40 = arith.maximumf %38, %39 : vector<16x128xf32>
    %41 = tpu.reciprocal %40 {approx = true} : vector<16x128xf32> -> vector<16x128xf32>
    %42 = arith.mulf %36, %41 : vector<16x128xf32>
    %43 = arith.truncf %42 : vector<16x128xf32> to vector<16x128xbf16>
    %cst_25 = arith.constant dense<0.000000e+00> : vector<16x128xf32>
    %44 = tpu.matmul %43, %27, %cst_25 {dimension_numbers = #tpu.dot_dimension_numbers<[1], [0], [0], [1], [0, 0, 1, 1], [], []>} : vector<16x128xbf16>, vector<128x128xbf16>, vector<16x128xf32> -> vector<16x128xf32>
    %45 = arith.truncf %44 : vector<16x128xf32> to vector<16x128xbf16>
    %c0_26 = arith.constant 0 : index
    %c0_27 = arith.constant 0 : index
    %c0_28 = arith.constant 0 : index
    %46 = vector.load %arg14[%c0_26, %c0_27, %c0_28] : memref<1x128x128xbf16, #tpu.memory_space<vmem>>, vector<1x128x128xbf16>
    %47 = vector.shape_cast %46 : vector<1x128x128xbf16> to vector<128x128xbf16>
    %cst_29 = arith.constant dense<0.000000e+00> : vector<16x128xf32>
    %48 = tpu.matmul %45, %47, %cst_29 {dimension_numbers = #tpu.dot_dimension_numbers<[1], [0], [0], [1], [0, 0, 1, 1], [], []>} : vector<16x128xbf16>, vector<128x128xbf16>, vector<16x128xf32> -> vector<16x128xf32>
    %c0_30 = arith.constant 0 : index
    %c0_31 = arith.constant 0 : index
    %c0_32 = arith.constant 0 : index
    %49 = vector.load %arg15[%c0_30, %c0_31, %c0_32] : memref<1x1x128xf32, #tpu.memory_space<vmem>>, vector<1x1x128xf32>
    %50 = vector.shape_cast %49 : vector<1x1x128xf32> to vector<1x128xf32>
    %51 = vector.broadcast %50 : vector<1x128xf32> to vector<16x128xf32>
    %52 = arith.addf %48, %51 : vector<16x128xf32>
    %53 = arith.addf %3, %52 : vector<16x128xf32>
    %c0_33 = arith.constant 0 : index
    %c0_34 = arith.constant 0 : index
    %c0_35 = arith.constant 0 : index
    %54 = vector.load %arg16[%c0_33, %c0_34, %c0_35] : memref<1x1x128xf32, #tpu.memory_space<vmem>>, vector<1x1x128xf32>
    %55 = vector.shape_cast %54 : vector<1x1x128xf32> to vector<1x128xf32>
    %c0_36 = arith.constant 0 : index
    %c0_37 = arith.constant 0 : index
    %c0_38 = arith.constant 0 : index
    %56 = vector.load %arg17[%c0_36, %c0_37, %c0_38] : memref<1x1x128xf32, #tpu.memory_space<vmem>>, vector<1x1x128xf32>
    %57 = vector.shape_cast %56 : vector<1x1x128xf32> to vector<1x128xf32>
    %cst_39 = arith.constant dense<0.000000e+00> : vector<16xf32>
    %58 = vector.multi_reduction <add>, %53, %cst_39 [1] : vector<16x128xf32> to vector<16xf32>
    %59 = vector.shape_cast %58 : vector<16xf32> to vector<16x1xf32>
    %cst_40 = arith.constant 1.280000e+02 : f32
    %60 = vector.broadcast %cst_40 : f32 to vector<16x1xf32>
    %61 = arith.divf %59, %60 : vector<16x1xf32>
    %62 = vector.broadcast %61 : vector<16x1xf32> to vector<16x128xf32>
    %63 = arith.subf %53, %62 : vector<16x128xf32>
    %64 = arith.mulf %63, %63 : vector<16x128xf32>
    %cst_41 = arith.constant dense<0.000000e+00> : vector<16xf32>
    %65 = vector.multi_reduction <add>, %64, %cst_41 [1] : vector<16x128xf32> to vector<16xf32>
    %66 = vector.shape_cast %65 : vector<16xf32> to vector<16x1xf32>
    %cst_42 = arith.constant 1.280000e+02 : f32
    %67 = vector.broadcast %cst_42 : f32 to vector<16x1xf32>
    %68 = arith.divf %66, %67 : vector<16x1xf32>
    %69 = vector.broadcast %61 : vector<16x1xf32> to vector<16x128xf32>
    %70 = arith.subf %53, %69 : vector<16x128xf32>
    %cst_43 = arith.constant 9.99999974E-6 : f32
    %71 = vector.broadcast %cst_43 : f32 to vector<16x1xf32>
    %72 = arith.addf %68, %71 : vector<16x1xf32>
    %73 = math.rsqrt %72 : vector<16x1xf32>
    %74 = vector.broadcast %73 : vector<16x1xf32> to vector<16x128xf32>
    %75 = arith.mulf %70, %74 : vector<16x128xf32>
    %76 = vector.broadcast %55 : vector<1x128xf32> to vector<16x128xf32>
    %77 = arith.mulf %75, %76 : vector<16x128xf32>
    %78 = vector.broadcast %57 : vector<1x128xf32> to vector<16x128xf32>
    %79 = arith.addf %77, %78 : vector<16x128xf32>
    %80 = arith.truncf %79 : vector<16x128xf32> to vector<16x128xbf16>
    %c0_44 = arith.constant 0 : index
    %c0_45 = arith.constant 0 : index
    %c0_46 = arith.constant 0 : index
    %81 = vector.load %arg18[%c0_44, %c0_45, %c0_46] : memref<1x128x512xbf16, #tpu.memory_space<vmem>>, vector<1x128x512xbf16>
    %82 = vector.shape_cast %81 : vector<1x128x512xbf16> to vector<128x512xbf16>
    %cst_47 = arith.constant dense<0.000000e+00> : vector<16x512xf32>
    %83 = tpu.matmul %80, %82, %cst_47 {dimension_numbers = #tpu.dot_dimension_numbers<[1], [0], [0], [1], [0, 0, 1, 1], [], []>} : vector<16x128xbf16>, vector<128x512xbf16>, vector<16x512xf32> -> vector<16x512xf32>
    %c0_48 = arith.constant 0 : index
    %c0_49 = arith.constant 0 : index
    %c0_50 = arith.constant 0 : index
    %84 = vector.load %arg19[%c0_48, %c0_49, %c0_50] : memref<1x1x512xf32, #tpu.memory_space<vmem>>, vector<1x1x512xf32>
    %85 = vector.shape_cast %84 : vector<1x1x512xf32> to vector<1x512xf32>
    %86 = vector.broadcast %85 : vector<1x512xf32> to vector<16x512xf32>
    %87 = arith.addf %83, %86 : vector<16x512xf32>
    %cst_51 = arith.constant 0.000000e+00 : f32
    %88 = vector.broadcast %cst_51 : f32 to vector<16x512xf32>
    %89 = arith.maximumf %87, %88 : vector<16x512xf32>
    %90 = arith.truncf %89 : vector<16x512xf32> to vector<16x512xbf16>
    %c0_52 = arith.constant 0 : index
    %c0_53 = arith.constant 0 : index
    %c0_54 = arith.constant 0 : index
    %91 = vector.load %arg20[%c0_52, %c0_53, %c0_54] : memref<1x512x128xbf16, #tpu.memory_space<vmem>>, vector<1x512x128xbf16>
    %92 = vector.shape_cast %91 : vector<1x512x128xbf16> to vector<512x128xbf16>
    %cst_55 = arith.constant dense<0.000000e+00> : vector<16x128xf32>
    %93 = tpu.matmul %90, %92, %cst_55 {dimension_numbers = #tpu.dot_dimension_numbers<[1], [0], [0], [1], [0, 0, 1, 1], [], []>} : vector<16x512xbf16>, vector<512x128xbf16>, vector<16x128xf32> -> vector<16x128xf32>
    %c0_56 = arith.constant 0 : index
    %c0_57 = arith.constant 0 : index
    %c0_58 = arith.constant 0 : index
    %94 = vector.load %arg21[%c0_56, %c0_57, %c0_58] : memref<1x1x128xf32, #tpu.memory_space<vmem>>, vector<1x1x128xf32>
    %95 = vector.shape_cast %94 : vector<1x1x128xf32> to vector<1x128xf32>
    %96 = vector.broadcast %95 : vector<1x128xf32> to vector<16x128xf32>
    %97 = arith.addf %93, %96 : vector<16x128xf32>
    %98 = arith.addf %79, %97 : vector<16x128xf32>
    %c0_59 = arith.constant 0 : index
    %c0_60 = arith.constant 0 : index
    %c0_61 = arith.constant 0 : index
    %99 = vector.load %arg22[%c0_59, %c0_60, %c0_61] : memref<1x1x128xf32, #tpu.memory_space<vmem>>, vector<1x1x128xf32>
    %100 = vector.shape_cast %99 : vector<1x1x128xf32> to vector<1x128xf32>
    %c0_62 = arith.constant 0 : index
    %c0_63 = arith.constant 0 : index
    %c0_64 = arith.constant 0 : index
    %101 = vector.load %arg23[%c0_62, %c0_63, %c0_64] : memref<1x1x128xf32, #tpu.memory_space<vmem>>, vector<1x1x128xf32>
    %102 = vector.shape_cast %101 : vector<1x1x128xf32> to vector<1x128xf32>
    %cst_65 = arith.constant dense<0.000000e+00> : vector<16xf32>
    %103 = vector.multi_reduction <add>, %98, %cst_65 [1] : vector<16x128xf32> to vector<16xf32>
    %104 = vector.shape_cast %103 : vector<16xf32> to vector<16x1xf32>
    %cst_66 = arith.constant 1.280000e+02 : f32
    %105 = vector.broadcast %cst_66 : f32 to vector<16x1xf32>
    %106 = arith.divf %104, %105 : vector<16x1xf32>
    %107 = vector.broadcast %106 : vector<16x1xf32> to vector<16x128xf32>
    %108 = arith.subf %98, %107 : vector<16x128xf32>
    %109 = arith.mulf %108, %108 : vector<16x128xf32>
    %cst_67 = arith.constant dense<0.000000e+00> : vector<16xf32>
    %110 = vector.multi_reduction <add>, %109, %cst_67 [1] : vector<16x128xf32> to vector<16xf32>
    %111 = vector.shape_cast %110 : vector<16xf32> to vector<16x1xf32>
    %cst_68 = arith.constant 1.280000e+02 : f32
    %112 = vector.broadcast %cst_68 : f32 to vector<16x1xf32>
    %113 = arith.divf %111, %112 : vector<16x1xf32>
    %114 = vector.broadcast %106 : vector<16x1xf32> to vector<16x128xf32>
    %115 = arith.subf %98, %114 : vector<16x128xf32>
    %cst_69 = arith.constant 9.99999974E-6 : f32
    %116 = vector.broadcast %cst_69 : f32 to vector<16x1xf32>
    %117 = arith.addf %113, %116 : vector<16x1xf32>
    %118 = math.rsqrt %117 : vector<16x1xf32>
    %119 = vector.broadcast %118 : vector<16x1xf32> to vector<16x128xf32>
    %120 = arith.mulf %115, %119 : vector<16x128xf32>
    %121 = vector.broadcast %100 : vector<1x128xf32> to vector<16x128xf32>
    %122 = arith.mulf %120, %121 : vector<16x128xf32>
    %123 = vector.broadcast %102 : vector<1x128xf32> to vector<16x128xf32>
    %124 = arith.addf %122, %123 : vector<16x128xf32>
    %c0_70 = arith.constant 0 : index
    %c0_71 = arith.constant 0 : index
    %125 = vector.load %arg30[%c0_70, %c0_71] : memref<16x128xf32, #tpu.memory_space<vmem>>, vector<16x128xf32>
    tpu.vector_store %arg30[%c0_70, %c0_71], %124 {strides = array<i32>} : memref<16x128xf32, #tpu.memory_space<vmem>>, vector<16x128xf32>,
    %c3_i32 = arith.constant 3 : i32
    %126 = arith.cmpi eq, %arg0, %c3_i32 : i32
    %127 = arith.extui %126 : i1 to i32
    %c0_i32_72 = arith.constant 0 : i32
    %128 = arith.cmpi ne, %127, %c0_i32_72 : i32
    scf.if %128 {
      %129 = arith.truncf %124 : vector<16x128xf32> to vector<16x128xbf16>
      %c0_73 = arith.constant 0 : index
      %c0_74 = arith.constant 0 : index
      %130 = vector.load %arg24[%c0_73, %c0_74] : memref<128x256xbf16, #tpu.memory_space<vmem>>, vector<128x256xbf16>
      %cst_75 = arith.constant dense<0.000000e+00> : vector<16x256xf32>
      %131 = tpu.matmul %129, %130, %cst_75 {dimension_numbers = #tpu.dot_dimension_numbers<[1], [0], [0], [1], [0, 0, 1, 1], [], []>} : vector<16x128xbf16>, vector<128x256xbf16>, vector<16x256xf32> -> vector<16x256xf32>
      %c0_76 = arith.constant 0 : index
      %c0_77 = arith.constant 0 : index
      %132 = vector.load %arg25[%c0_76, %c0_77] : memref<1x256xf32, #tpu.memory_space<vmem>>, vector<1x256xf32>
      %133 = vector.broadcast %132 : vector<1x256xf32> to vector<16x256xf32>
      %134 = arith.addf %131, %133 : vector<16x256xf32>
      %cst_78 = arith.constant 0.000000e+00 : f32
      %135 = vector.broadcast %cst_78 : f32 to vector<16x256xf32>
      %136 = arith.maximumf %134, %135 : vector<16x256xf32>
      %137 = arith.truncf %136 : vector<16x256xf32> to vector<16x256xbf16>
      %c0_79 = arith.constant 0 : index
      %c0_80 = arith.constant 0 : index
      %138 = vector.load %arg26[%c0_79, %c0_80] : memref<256x128xbf16, #tpu.memory_space<vmem>>, vector<256x128xbf16>
      %cst_81 = arith.constant dense<0.000000e+00> : vector<16x128xf32>
      %139 = tpu.matmul %137, %138, %cst_81 {dimension_numbers = #tpu.dot_dimension_numbers<[1], [0], [0], [1], [0, 0, 1, 1], [], []>} : vector<16x256xbf16>, vector<256x128xbf16>, vector<16x128xf32> -> vector<16x128xf32>
      %c0_82 = arith.constant 0 : index
      %c0_83 = arith.constant 0 : index
      %140 = vector.load %arg27[%c0_82, %c0_83] : memref<1x128xf32, #tpu.memory_space<vmem>>, vector<1x128xf32>
      %141 = vector.broadcast %140 : vector<1x128xf32> to vector<16x128xf32>
      %142 = arith.addf %139, %141 : vector<16x128xf32>
      %c0_84 = arith.constant 0 : index
      %c0_85 = arith.constant 0 : index
      %143 = vector.load %arg31[%c0_84, %c0_85] : memref<16x128xf32, #tpu.memory_space<vmem>>, vector<16x128xf32>
      tpu.vector_store %arg31[%c0_84, %c0_85], %142 {strides = array<i32>} : memref<16x128xf32, #tpu.memory_space<vmem>>, vector<16x128xf32>,
    } else {
    }
    return
  }
  func.func @transform_0(%arg0: i32) -> (i32, i32) {
    %c0_i32 = arith.constant 0 : i32
    %c0_i32_0 = arith.constant 0 : i32
    %c0_i32_1 = arith.constant 0 : i32
    return %c0_i32, %c0_i32_0 : i32, i32
  }
  func.func @transform_1(%arg0: i32) -> (i32, i32) {
    %c0_i32 = arith.constant 0 : i32
    %c0_i32_0 = arith.constant 0 : i32
    %c0_i32_1 = arith.constant 0 : i32
    return %c0_i32, %c0_i32_0 : i32, i32
  }
  func.func @transform_2(%arg0: i32) -> (i32, i32) {
    %c0_i32 = arith.constant 0 : i32
    %c0_i32_0 = arith.constant 0 : i32
    %c0_i32_1 = arith.constant 0 : i32
    return %c0_i32, %c0_i32_0 : i32, i32
  }
  func.func @transform_3(%arg0: i32) -> (i32, i32) {
    %c0_i32 = arith.constant 0 : i32
    %c0_i32_0 = arith.constant 0 : i32
    %c0_i32_1 = arith.constant 0 : i32
    return %c0_i32, %c0_i32_0 : i32, i32
  }
  func.func @transform_4(%arg0: i32) -> (i32, i32) {
    %c0_i32 = arith.constant 0 : i32
    %c0_i32_0 = arith.constant 0 : i32
    %c0_i32_1 = arith.constant 0 : i32
    return %c0_i32, %c0_i32_0 : i32, i32
  }
  func.func @transform_5(%arg0: i32) -> (i32, i32) {
    %c0_i32 = arith.constant 0 : i32
    %c0_i32_0 = arith.constant 0 : i32
    %c0_i32_1 = arith.constant 0 : i32
    return %c0_i32, %c0_i32_0 : i32, i32
  }
  func.func @transform_6(%arg0: i32) -> (i32, i32) {
    %c0_i32 = arith.constant 0 : i32
    %c0_i32_0 = arith.constant 0 : i32
    %c0_i32_1 = arith.constant 0 : i32
    return %c0_i32, %c0_i32_0 : i32, i32
  }
  func.func @transform_7(%arg0: i32) -> (i32, i32) {
    %c0_i32 = arith.constant 0 : i32
    %c0_i32_0 = arith.constant 0 : i32
    %c0_i32_1 = arith.constant 0 : i32
    return %c0_i32, %c0_i32_0 : i32, i32
  }
  func.func @transform_8(%arg0: i32) -> (i32, i32) {
    %c0_i32 = arith.constant 0 : i32
    %c0_i32_0 = arith.constant 0 : i32
    %c0_i32_1 = arith.constant 0 : i32
    return %c0_i32, %c0_i32_0 : i32, i32
  }
  func.func @transform_9(%arg0: i32) -> (i32, i32) {
    %c0_i32 = arith.constant 0 : i32
    %c0_i32_0 = arith.constant 0 : i32
    %c0_i32_1 = arith.constant 0 : i32
    return %c0_i32, %c0_i32_0 : i32, i32
  }
  func.func @transform_10(%arg0: i32) -> (i32, i32) {
    %c0_i32 = arith.constant 0 : i32
    %c0_i32_0 = arith.constant 0 : i32
    %c0_i32_1 = arith.constant 0 : i32
    return %c0_i32, %c0_i32_0 : i32, i32
  }
  func.func @transform_11(%arg0: i32) -> (i32, i32, i32) {
    %c0_i32 = arith.constant 0 : i32
    %c0_i32_0 = arith.constant 0 : i32
    %c0_i32_1 = arith.constant 0 : i32
    return %arg0, %c0_i32, %c0_i32_0 : i32, i32, i32
  }
  func.func @transform_12(%arg0: i32) -> (i32, i32, i32) {
    %c0_i32 = arith.constant 0 : i32
    %c0_i32_0 = arith.constant 0 : i32
    %c0_i32_1 = arith.constant 0 : i32
    return %arg0, %c0_i32, %c0_i32_0 : i32, i32, i32
  }
  func.func @transform_13(%arg0: i32) -> (i32, i32, i32) {
    %c0_i32 = arith.constant 0 : i32
    %c0_i32_0 = arith.constant 0 : i32
    %c0_i32_1 = arith.constant 0 : i32
    return %arg0, %c0_i32, %c0_i32_0 : i32, i32, i32
  }
  func.func @transform_14(%arg0: i32) -> (i32, i32, i32) {
    %c0_i32 = arith.constant 0 : i32
    %c0_i32_0 = arith.constant 0 : i32
    %c0_i32_1 = arith.constant 0 : i32
    return %arg0, %c0_i32, %c0_i32_0 : i32, i32, i32
  }
  func.func @transform_15(%arg0: i32) -> (i32, i32, i32) {
    %c0_i32 = arith.constant 0 : i32
    %c0_i32_0 = arith.constant 0 : i32
    %c0_i32_1 = arith.constant 0 : i32
    return %arg0, %c0_i32, %c0_i32_0 : i32, i32, i32
  }
  func.func @transform_16(%arg0: i32) -> (i32, i32, i32) {
    %c0_i32 = arith.constant 0 : i32
    %c0_i32_0 = arith.constant 0 : i32
    %c0_i32_1 = arith.constant 0 : i32
    return %arg0, %c0_i32, %c0_i32_0 : i32, i32, i32
  }
  func.func @transform_17(%arg0: i32) -> (i32, i32, i32) {
    %c0_i32 = arith.constant 0 : i32
    %c0_i32_0 = arith.constant 0 : i32
    %c0_i32_1 = arith.constant 0 : i32
    return %arg0, %c0_i32, %c0_i32_0 : i32, i32, i32
  }
  func.func @transform_18(%arg0: i32) -> (i32, i32, i32) {
    %c0_i32 = arith.constant 0 : i32
    %c0_i32_0 = arith.constant 0 : i32
    %c0_i32_1 = arith.constant 0 : i32
    return %arg0, %c0_i32, %c0_i32_0 : i32, i32, i32
  }
  func.func @transform_19(%arg0: i32) -> (i32, i32, i32) {
    %c0_i32 = arith.constant 0 : i32
    %c0_i32_0 = arith.constant 0 : i32
    %c0_i32_1 = arith.constant 0 : i32
    return %arg0, %c0_i32, %c0_i32_0 : i32, i32, i32
  }
  func.func @transform_20(%arg0: i32) -> (i32, i32, i32) {
    %c0_i32 = arith.constant 0 : i32
    %c0_i32_0 = arith.constant 0 : i32
    %c0_i32_1 = arith.constant 0 : i32
    return %arg0, %c0_i32, %c0_i32_0 : i32, i32, i32
  }
  func.func @transform_21(%arg0: i32) -> (i32, i32, i32) {
    %c0_i32 = arith.constant 0 : i32
    %c0_i32_0 = arith.constant 0 : i32
    %c0_i32_1 = arith.constant 0 : i32
    return %arg0, %c0_i32, %c0_i32_0 : i32, i32, i32
  }
  func.func @transform_22(%arg0: i32) -> (i32, i32, i32) {
    %c0_i32 = arith.constant 0 : i32
    %c0_i32_0 = arith.constant 0 : i32
    %c0_i32_1 = arith.constant 0 : i32
    return %arg0, %c0_i32, %c0_i32_0 : i32, i32, i32
  }
  func.func @transform_23(%arg0: i32) -> (i32, i32) {
    %c0_i32 = arith.constant 0 : i32
    %c0_i32_0 = arith.constant 0 : i32
    %c0_i32_1 = arith.constant 0 : i32
    return %c0_i32, %c0_i32_0 : i32, i32
  }
  func.func @transform_24(%arg0: i32) -> (i32, i32) {
    %c0_i32 = arith.constant 0 : i32
    %c0_i32_0 = arith.constant 0 : i32
    %c0_i32_1 = arith.constant 0 : i32
    return %c0_i32, %c0_i32_0 : i32, i32
  }
  func.func @transform_25(%arg0: i32) -> (i32, i32) {
    %c0_i32 = arith.constant 0 : i32
    %c0_i32_0 = arith.constant 0 : i32
    %c0_i32_1 = arith.constant 0 : i32
    return %c0_i32, %c0_i32_0 : i32, i32
  }
  func.func @transform_26(%arg0: i32) -> (i32, i32) {
    %c0_i32 = arith.constant 0 : i32
    %c0_i32_0 = arith.constant 0 : i32
    %c0_i32_1 = arith.constant 0 : i32
    return %c0_i32, %c0_i32_0 : i32, i32
  }
  func.func @transform_27(%arg0: i32) -> (i32, i32) {
    %c0_i32 = arith.constant 0 : i32
    %c0_i32_0 = arith.constant 0 : i32
    %c0_i32_1 = arith.constant 0 : i32
    return %c0_i32, %c0_i32_0 : i32, i32
  }
  func.func @transform_28(%arg0: i32) -> (i32, i32) {
    %c0_i32 = arith.constant 0 : i32
    %c0_i32_0 = arith.constant 0 : i32
    %c0_i32_1 = arith.constant 0 : i32
    return %c0_i32, %c0_i32_0 : i32, i32
  }
  func.func @transform_29(%arg0: i32) -> (i32, i32) {
    %c0_i32 = arith.constant 0 : i32
    %c0_i32_0 = arith.constant 0 : i32
    %c0_i32_1 = arith.constant 0 : i32
    return %c0_i32, %c0_i32_0 : i32, i32
  }
  func.func @transform_30(%arg0: i32) -> (i32, i32) {
    %c0_i32 = arith.constant 0 : i32
    %c0_i32_0 = arith.constant 0 : i32
    %c0_i32_1 = arith.constant 0 : i32
    return %c0_i32, %c0_i32_0 : i32, i32
  }
}

</mosaic_0001>

<llo_original>
// kernel: empath_model_forward.1
$region0: #{empath_model_forward.1}
  #allocation0 [shape = 'u32[]', space=smem, size = 0x4, offset = 0x4, fixed_abs, tag = 'smem constant byte address 0x4 - core index']
  #allocation1 [shape = 'u32[144,128]{1,0:T(1,128)}', space=vmem, size = 0x12000, scoped, tag = 'internal scratch']
  %s0 = inlined_call_operand.smem [shape: u32[31], index: -1, kind: input, shape index: {}]
  %s1 = sld [smem:[%s0]]
  %s2 = scalar_lea.smem %s0, 1
  %s3 = sld [smem:[%s2]]
  %s4 = scalar_lea.smem %s0, 2
  %s5 = sld [smem:[%s4]]
  %s6 = scalar_lea.smem %s0, 3
  %s7 = sld [smem:[%s6]]
  %s8 = scalar_lea.smem %s0, 4
  %s9 = sld [smem:[%s8]]
  %s10 = scalar_lea.smem %s0, 5
  %s11 = sld [smem:[%s10]]
  %s12 = scalar_lea.smem %s0, 6
  %s13 = sld [smem:[%s12]]
  %s14 = scalar_lea.smem %s0, 7
  %s15 = sld [smem:[%s14]]
  %s16 = scalar_lea.smem %s0, 8
  %s17 = sld [smem:[%s16]]
  %s18 = scalar_lea.smem %s0, 9
  %s19 = sld [smem:[%s18]]
  %s20 = scalar_lea.smem %s0, 10
  %s21 = sld [smem:[%s20]]
  %s22 = scalar_lea.smem %s0, 11
  %s23 = sld [smem:[%s22]]
  %s24 = scalar_lea.smem %s0, 12
  %s25 = sld [smem:[%s24]]
  %s26 = scalar_lea.smem %s0, 13
  %s27 = sld [smem:[%s26]]
  %s28 = scalar_lea.smem %s0, 14
  %s29 = sld [smem:[%s28]]
  %s30 = scalar_lea.smem %s0, 15
  %s31 = sld [smem:[%s30]]
  %s32 = scalar_lea.smem %s0, 16
  %s33 = sld [smem:[%s32]]
  %s34 = scalar_lea.smem %s0, 17
  %s35 = sld [smem:[%s34]]
  %s36 = scalar_lea.smem %s0, 18
  %s37 = sld [smem:[%s36]]
  %s38 = scalar_lea.smem %s0, 19
  %s39 = sld [smem:[%s38]]
  %s40 = scalar_lea.smem %s0, 20
  %s41 = sld [smem:[%s40]]
  %s42 = scalar_lea.smem %s0, 21
  %s43 = sld [smem:[%s42]]
  %s44 = scalar_lea.smem %s0, 22
  %s45 = sld [smem:[%s44]]
  %s46 = scalar_lea.smem %s0, 23
  %s47 = sld [smem:[%s46]]
  %s48 = scalar_lea.smem %s0, 24
  %s49 = sld [smem:[%s48]]
  %s50 = scalar_lea.smem %s0, 25
  %s51 = sld [smem:[%s50]]
  %s52 = scalar_lea.smem %s0, 26
  %s53 = sld [smem:[%s52]]
  %s54 = scalar_lea.smem %s0, 27
  %s55 = sld [smem:[%s54]]
  %s56 = scalar_lea.smem %s0, 28
  %s57 = sld [smem:[%s56]]
  %s58 = scalar_lea.smem %s0, 29
  %s59 = sld [smem:[%s58]]
  %s60 = scalar_lea.smem %s0, 30
  %s61 = sld [smem:[%s60]]
  %62 = xla_tuple %s55, %s57, %s59, %s61
  %s63 = sld [smem:[#allocation0]]
  $region257: #{empath_model_forward.1} parent=0
    _
  %s65 = ssub.s32 1, %s63
  %s66 = scalar_select 0, %s65, %s63
  $region1: #{empath_model_forward.1} parent=0
    #allocation2 [shape = 'u8[65536]{0}', space=vmem, size = 0x10000, scoped, tag = 'input window, operand 4, single buffered']
    #allocation3 [shape = 's32[2]{0}', space=sflag, size = 0x8, scoped, tag = 'scoped memory for empath_model_forward.1']
    #allocation4 [shape = 's32[2]{0}', space=sflag, size = 0x8, scoped, tag = 'scoped memory for empath_model_forward.1']
    #allocation5 [shape = 'u8[32768]{0}', space=vmem, size = 0x8000, scoped, tag = 'input window, operand 5, single buffered']
    #allocation6 [shape = 's32[1]{0}', space=sflag, size = 0x4, scoped, tag = 'scoped memory for empath_model_forward.1']
    #allocation7 [shape = 'u8[512]{0}', space=vmem, size = 0x400, scoped, tag = 'input window, operand 6, single buffered']
    #allocation8 [shape = 'u8[65536]{0}', space=vmem, size = 0x10000, scoped, tag = 'input window, operand 7, single buffered']
    #allocation9 [shape = 's32[1]{0}', space=sflag, size = 0x4, scoped, tag = 'scoped memory for empath_model_forward.1']
    #allocation10 [shape = 'u8[65536]{0}', space=vmem, size = 0x10000, scoped, tag = 'input window, operand 9, single buffered']
    #allocation11 [shape = 'u8[512]{0}', space=vmem, size = 0x400, scoped, tag = 'input window, operand 10, single buffered']
    #allocation12 [shape = 's32[1]{0}', space=sflag, size = 0x4, scoped, tag = 'scoped memory for empath_model_forward.1']
    #allocation13 [shape = 'u8[196608]{0}', space=vmem, size = 0x30000, scoped, tag = 'input window, operand 11']
    #allocation14 [shape = 'u8[3072]{0}', space=vmem, size = 0xc00, scoped, tag = 'input window, operand 12']
    #allocation15 [shape = 'u8[65536]{0}', space=vmem, size = 0x10000, scoped, tag = 'input window, operand 13']
    #allocation16 [shape = 'u8[1024]{0}', space=vmem, size = 0x400, scoped, tag = 'input window, operand 15']
    #allocation17 [shape = 'u8[1024]{0}', space=vmem, size = 0x400, scoped, tag = 'input window, operand 16']
    #allocation18 [shape = 'u8[262144]{0}', space=vmem, size = 0x40000, scoped, tag = 'input window, operand 17']
    #allocation19 [shape = 'u8[4096]{0}', space=vmem, size = 0x1000, scoped, tag = 'input window, operand 18']
    #allocation20 [shape = 'u8[262144]{0}', space=vmem, size = 0x40000, scoped, tag = 'input window, operand 19']
    #allocation21 [shape = 'u8[1024]{0}', space=vmem, size = 0x400, scoped, tag = 'input window, operand 20']
    #allocation22 [shape = 'u8[1024]{0}', space=vmem, size = 0x400, scoped, tag = 'input window, operand 21']
    #allocation23 [shape = 'u8[1024]{0}', space=vmem, size = 0x400, scoped, tag = 'input window, operand 22']
    #allocation24 [shape = 'u8[65536]{0}', space=vmem, size = 0x10000, scoped, tag = 'input window, operand 23, single buffered']
    #allocation25 [shape = 'u8[1024]{0}', space=vmem, size = 0x400, scoped, tag = 'input window, operand 24, single buffered']
    #allocation26 [shape = 'u8[65536]{0}', space=vmem, size = 0x10000, scoped, tag = 'input window, operand 25, single buffered']
    #allocation27 [shape = 'u8[512]{0}', space=vmem, size = 0x400, scoped, tag = 'input window, operand 26, single buffered']
    #allocation28 [shape = 's32[1]{0}', space=sflag, size = 0x4, scoped, tag = 'scoped memory for empath_model_forward.1']
    #allocation29 [shape = 'u8[8192]{0}', space=vmem, size = 0x2000, scoped, tag = 'output window, operand 0, single buffered']
    #allocation30 [shape = 'u8[8192]{0}', space=vmem, size = 0x2000, scoped, tag = 'output window, operand 2, single buffered']
    #allocation31 [shape = 's32[1]{0}', space=sflag, size = 0x4, scoped, tag = 'scoped memory for empath_model_forward.1']
    #allocation32 [shape = 'u8[8192]{0}', space=vmem, size = 0x2000, scoped, tag = 'output window, operand 3, single buffered']
    %67 = vsyncpa [#allocation3], 0
    %68 = vsyncpa [#allocation6], 0
    %69 = vsyncpa [#allocation9], 0
    %70 = vsyncpa [#allocation12], 0
    %71 = vsyncpa [#allocation28], 0
    %72 = vsyncpa [#allocation4], 0
    %73 = vsyncpa [#allocation31], 0
    loop: start=0, step=1, limit=6
    $region2: #{empath_model_forward.1} parent=1 // loop_pre_header
      _
    $region3: #{empath_model_forward.1} parent=1 // loop_header
      %s75 = sphi 0, %s79
      %p76 = scmp.ge.s32.totalorder %s75, 6
      %s83 = sphi 0, %s83
      %s85 = sphi 0, %s83
      %s86 = sphi 0, %s85
      %s100 = sphi 0, %s86
      %s104 = sphi 0, %s104
      %s106 = sphi 0, %s104
      %s107 = sphi 0, %s106
      %s121 = sphi 0, %s107
      %s125 = sphi 0, %s125
      %s127 = sphi 0, %s125
      %s128 = sphi 0, %s127
      %s142 = sphi 0, %s128
      %s146 = sphi 0, %s146
      %s148 = sphi 0, %s146
      %s149 = sphi 0, %s148
      %s163 = sphi 0, %s149
      %s167 = sphi 0, %s167
      %s169 = sphi 0, %s167
      %s170 = sphi 0, %s169
      %s184 = sphi 0, %s170
      %s188 = sphi 0, %s188
      %s190 = sphi 0, %s188
      %s191 = sphi 0, %s190
      %s205 = sphi 0, %s191
      %s209 = sphi 0, %s209
      %s211 = sphi 0, %s209
      %s212 = sphi 0, %s211
      %s226 = sphi 0, %s212
      %s230 = sphi 0, %s230
      %s232 = sphi 0, %s230
      %s233 = sphi 0, %s232
      %s247 = sphi 0, %s233
      %s251 = sphi 0, %s251
      %s253 = sphi 0, %s251
      %s254 = sphi 0, %s253
      %s268 = sphi 0, %s254
      %s272 = sphi 0, %s272
      %s274 = sphi 0, %s272
      %s275 = sphi 0, %s274
      %s289 = sphi 0, %s275
      %s293 = sphi 0, %s293
      %s295 = sphi 0, %s293
      %s296 = sphi 0, %s295
      %s310 = sphi 0, %s296
      %s316 = sphi 0, %s318
      %s319 = sphi 0, %s316
      %s320 = sphi 0, %s319
      %s336 = sphi 0, %s320
      %s342 = sphi 0, %s344
      %s345 = sphi 0, %s342
      %s346 = sphi 0, %s345
      %s362 = sphi 0, %s346
      %s368 = sphi 0, %s370
      %s371 = sphi 0, %s368
      %s372 = sphi 0, %s371
      %s388 = sphi 0, %s372
      %s394 = sphi 0, %s396
      %s397 = sphi 0, %s394
      %s398 = sphi 0, %s397
      %s414 = sphi 0, %s398
      %s420 = sphi 0, %s422
      %s423 = sphi 0, %s420
      %s424 = sphi 0, %s423
      %s440 = sphi 0, %s424
      %s446 = sphi 0, %s448
      %s449 = sphi 0, %s446
      %s450 = sphi 0, %s449
      %s466 = sphi 0, %s450
      %s472 = sphi 0, %s474
      %s475 = sphi 0, %s472
      %s476 = sphi 0, %s475
      %s492 = sphi 0, %s476
      %s498 = sphi 0, %s500
      %s501 = sphi 0, %s498
      %s502 = sphi 0, %s501
      %s518 = sphi 0, %s502
      %s524 = sphi 0, %s526
      %s527 = sphi 0, %s524
      %s528 = sphi 0, %s527
      %s544 = sphi 0, %s528
      %s550 = sphi 0, %s552
      %s553 = sphi 0, %s550
      %s554 = sphi 0, %s553
      %s570 = sphi 0, %s554
      %s576 = sphi 0, %s578
      %s579 = sphi 0, %s576
      %s580 = sphi 0, %s579
      %s596 = sphi 0, %s580
      %s602 = sphi 0, %s604
      %s605 = sphi 0, %s602
      %s606 = sphi 0, %s605
      %s622 = sphi 0, %s606
      %s626 = sphi 0, %s626
      %s628 = sphi 0, %s626
      %s629 = sphi 0, %s628
      %s643 = sphi 0, %s629
      %s647 = sphi 0, %s647
      %s649 = sphi 0, %s647
      %s650 = sphi 0, %s649
      %s664 = sphi 0, %s650
      %s668 = sphi 0, %s668
      %s670 = sphi 0, %s668
      %s671 = sphi 0, %s670
      %s685 = sphi 0, %s671
      %s689 = sphi 0, %s689
      %s691 = sphi 0, %s689
      %s692 = sphi 0, %s691
      %s706 = sphi 0, %s692
      %s710 = sphi 0, %s710
      %s712 = sphi 0, %s710
      %s713 = sphi 0, %s712
      %s727 = sphi 0, %s713
      %s731 = sphi 0, %s731
      %s733 = sphi 0, %s731
      %s734 = sphi 0, %s733
      %s748 = sphi 0, %s734
      %s752 = sphi 0, %s752
      %s754 = sphi 0, %s752
      %s755 = sphi 0, %s754
      %s769 = sphi 0, %s755
      %s773 = sphi 0, %s773
      %s775 = sphi 0, %s773
      %s776 = sphi 0, %s775
      %s790 = sphi 0, %s776
    $region4: #{empath_model_forward.1} parent=1 // loop_header_branch
      %78 = sbr.rel (%p76) target = $region8
    $region5: #{empath_model_forward.1} parent=1 // loop_body
      %s80 = ssub.s32 %s75, 1
      %s81 = ssub.s32 %s75, 2
      %s82 = sadd.s32 %s75, 1
      %s84 = sadd.s32 %s83, 1
      %p87 = scmp.eq.s32.totalorder %s75, 3
      %p88 = scmp.ne.s32.totalorder %s83, %s85
      %p89 = scmp.eq.s32.totalorder %s75, 0
      %p90 = por %p88, %p89
      %p91 = scmp.ne.s32.totalorder %s83, %s85
      %p92 = scmp.eq.s32.totalorder %s80, 3
      %p93 = por %p91, %p92
      %p94 = scmp.ne.s32.totalorder %s85, %s86
      %p95 = scmp.eq.s32.totalorder %s80, 0
      %p96 = por %p94, %p95
      %p97 = scmp.ne.s32.totalorder %s85, %s86
      %p98 = scmp.eq.s32.totalorder %s81, 3
      %p99 = por %p97, %p98
      %p101 = scmp.ne.s32.totalorder %s86, %s100
      %p102 = scmp.eq.s32.totalorder %s81, 0
      %p103 = por %p101, %p102
      %s105 = sadd.s32 %s104, 1
      %p108 = scmp.eq.s32.totalorder %s75, 3
      %p109 = scmp.ne.s32.totalorder %s104, %s106
      %p110 = scmp.eq.s32.totalorder %s75, 0
      %p111 = por %p109, %p110
      %p112 = scmp.ne.s32.totalorder %s104, %s106
      %p113 = scmp.eq.s32.totalorder %s80, 3
      %p114 = por %p112, %p113
      %p115 = scmp.ne.s32.totalorder %s106, %s107
      %p116 = scmp.eq.s32.totalorder %s80, 0
      %p117 = por %p115, %p116
      %p118 = scmp.ne.s32.totalorder %s106, %s107
      %p119 = scmp.eq.s32.totalorder %s81, 3
      %p120 = por %p118, %p119
      %p122 = scmp.ne.s32.totalorder %s107, %s121
      %p123 = scmp.eq.s32.totalorder %s81, 0
      %p124 = por %p122, %p123
      %s126 = sadd.s32 %s125, 1
      %p129 = scmp.eq.s32.totalorder %s75, 3
      %p130 = scmp.ne.s32.totalorder %s125, %s127
      %p131 = scmp.eq.s32.totalorder %s75, 0
      %p132 = por %p130, %p131
      %p133 = scmp.ne.s32.totalorder %s125, %s127
      %p134 = scmp.eq.s32.totalorder %s80, 3
      %p135 = por %p133, %p134
      %p136 = scmp.ne.s32.totalorder %s127, %s128
      %p137 = scmp.eq.s32.totalorder %s80, 0
      %p138 = por %p136, %p137
      %p139 = scmp.ne.s32.totalorder %s127, %s128
      %p140 = scmp.eq.s32.totalorder %s81, 3
      %p141 = por %p139, %p140
      %p143 = scmp.ne.s32.totalorder %s128, %s142
      %p144 = scmp.eq.s32.totalorder %s81, 0
      %p145 = por %p143, %p144
      %s147 = sadd.s32 %s146, 1
      %p150 = scmp.eq.s32.totalorder %s75, 3
      %p151 = scmp.ne.s32.totalorder %s146, %s148
      %p152 = scmp.eq.s32.totalorder %s75, 0
      %p153 = por %p151, %p152
      %p154 = scmp.ne.s32.totalorder %s146, %s148
      %p155 = scmp.eq.s32.totalorder %s80, 3
      %p156 = por %p154, %p155
      %p157 = scmp.ne.s32.totalorder %s148, %s149
      %p158 = scmp.eq.s32.totalorder %s80, 0
      %p159 = por %p157, %p158
      %p160 = scmp.ne.s32.totalorder %s148, %s149
      %p161 = scmp.eq.s32.totalorder %s81, 3
      %p162 = por %p160, %p161
      %p164 = scmp.ne.s32.totalorder %s149, %s163
      %p165 = scmp.eq.s32.totalorder %s81, 0
      %p166 = por %p164, %p165
      %s168 = sadd.s32 %s167, 1
      %p171 = scmp.eq.s32.totalorder %s75, 3
      %p172 = scmp.ne.s32.totalorder %s167, %s169
      %p173 = scmp.eq.s32.totalorder %s75, 0
      %p174 = por %p172, %p173
      %p175 = scmp.ne.s32.totalorder %s167, %s169
      %p176 = scmp.eq.s32.totalorder %s80, 3
      %p177 = por %p175, %p176
      %p178 = scmp.ne.s32.totalorder %s169, %s170
      %p179 = scmp.eq.s32.totalorder %s80, 0
      %p180 = por %p178, %p179
      %p181 = scmp.ne.s32.totalorder %s169, %s170
      %p182 = scmp.eq.s32.totalorder %s81, 3
      %p183 = por %p181, %p182
      %p185 = scmp.ne.s32.totalorder %s170, %s184
      %p186 = scmp.eq.s32.totalorder %s81, 0
      %p187 = por %p185, %p186
      %s189 = sadd.s32 %s188, 1
      %p192 = scmp.eq.s32.totalorder %s75, 3
      %p193 = scmp.ne.s32.totalorder %s188, %s190
      %p194 = scmp.eq.s32.totalorder %s75, 0
      %p195 = por %p193, %p194
      %p196 = scmp.ne.s32.totalorder %s188, %s190
      %p197 = scmp.eq.s32.totalorder %s80, 3
      %p198 = por %p196, %p197
      %p199 = scmp.ne.s32.totalorder %s190, %s191
      %p200 = scmp.eq.s32.totalorder %s80, 0
      %p201 = por %p199, %p200
      %p202 = scmp.ne.s32.totalorder %s190, %s191
      %p203 = scmp.eq.s32.totalorder %s81, 3
      %p204 = por %p202, %p203
      %p206 = scmp.ne.s32.totalorder %s191, %s205
      %p207 = scmp.eq.s32.totalorder %s81, 0
      %p208 = por %p206, %p207
      %s210 = sadd.s32 %s209, 1
      %p213 = scmp.eq.s32.totalorder %s75, 3
      %p214 = scmp.ne.s32.totalorder %s209, %s211
      %p215 = scmp.eq.s32.totalorder %s75, 0
      %p216 = por %p214, %p215
      %p217 = scmp.ne.s32.totalorder %s209, %s211
      %p218 = scmp.eq.s32.totalorder %s80, 3
      %p219 = por %p217, %p218
      %p220 = scmp.ne.s32.totalorder %s211, %s212
      %p221 = scmp.eq.s32.totalorder %s80, 0
      %p222 = por %p220, %p221
      %p223 = scmp.ne.s32.totalorder %s211, %s212
      %p224 = scmp.eq.s32.totalorder %s81, 3
      %p225 = por %p223, %p224
      %p227 = scmp.ne.s32.totalorder %s212, %s226
      %p228 = scmp.eq.s32.totalorder %s81, 0
      %p229 = por %p227, %p228
      %s231 = sadd.s32 %s230, 1
      %p234 = scmp.eq.s32.totalorder %s75, 3
      %p235 = scmp.ne.s32.totalorder %s230, %s232
      %p236 = scmp.eq.s32.totalorder %s75, 0
      %p237 = por %p235, %p236
      %p238 = scmp.ne.s32.totalorder %s230, %s232
      %p239 = scmp.eq.s32.totalorder %s80, 3
      %p240 = por %p238, %p239
      %p241 = scmp.ne.s32.totalorder %s232, %s233
      %p242 = scmp.eq.s32.totalorder %s80, 0
      %p243 = por %p241, %p242
      %p244 = scmp.ne.s32.totalorder %s232, %s233
      %p245 = scmp.eq.s32.totalorder %s81, 3
      %p246 = por %p244, %p245
      %p248 = scmp.ne.s32.totalorder %s233, %s247
      %p249 = scmp.eq.s32.totalorder %s81, 0
      %p250 = por %p248, %p249
      %s252 = sadd.s32 %s251, 1
      %p255 = scmp.eq.s32.totalorder %s75, 3
      %p256 = scmp.ne.s32.totalorder %s251, %s253
      %p257 = scmp.eq.s32.totalorder %s75, 0
      %p258 = por %p256, %p257
      %p259 = scmp.ne.s32.totalorder %s251, %s253
      %p260 = scmp.eq.s32.totalorder %s80, 3
      %p261 = por %p259, %p260
      %p262 = scmp.ne.s32.totalorder %s253, %s254
      %p263 = scmp.eq.s32.totalorder %s80, 0
      %p264 = por %p262, %p263
      %p265 = scmp.ne.s32.totalorder %s253, %s254
      %p266 = scmp.eq.s32.totalorder %s81, 3
      %p267 = por %p265, %p266
      %p269 = scmp.ne.s32.totalorder %s254, %s268
      %p270 = scmp.eq.s32.totalorder %s81, 0
      %p271 = por %p269, %p270
      %s273 = sadd.s32 %s272, 1
      %p276 = scmp.eq.s32.totalorder %s75, 3
      %p277 = scmp.ne.s32.totalorder %s272, %s274
      %p278 = scmp.eq.s32.totalorder %s75, 0
      %p279 = por %p277, %p278
      %p280 = scmp.ne.s32.totalorder %s272, %s274
      %p281 = scmp.eq.s32.totalorder %s80, 3
      %p282 = por %p280, %p281
      %p283 = scmp.ne.s32.totalorder %s274, %s275
      %p284 = scmp.eq.s32.totalorder %s80, 0
      %p285 = por %p283, %p284
      %p286 = scmp.ne.s32.totalorder %s274, %s275
      %p287 = scmp.eq.s32.totalorder %s81, 3
      %p288 = por %p286, %p287
      %p290 = scmp.ne.s32.totalorder %s275, %s289
      %p291 = scmp.eq.s32.totalorder %s81, 0
      %p292 = por %p290, %p291
      %s294 = sadd.s32 %s293, 1
      %p297 = scmp.eq.s32.totalorder %s75, 3
      %p298 = scmp.ne.s32.totalorder %s293, %s295
      %p299 = scmp.eq.s32.totalorder %s75, 0
      %p300 = por %p298, %p299
      %p301 = scmp.ne.s32.totalorder %s293, %s295
      %p302 = scmp.eq.s32.totalorder %s80, 3
      %p303 = por %p301, %p302
      %p304 = scmp.ne.s32.totalorder %s295, %s296
      %p305 = scmp.eq.s32.totalorder %s80, 0
      %p306 = por %p304, %p305
      %p307 = scmp.ne.s32.totalorder %s295, %s296
      %p308 = scmp.eq.s32.totalorder %s81, 3
      %p309 = por %p307, %p308
      %p311 = scmp.ne.s32.totalorder %s296, %s310
      %p312 = scmp.eq.s32.totalorder %s81, 0
      %p313 = por %p311, %p312
      %s314 = ssub.s32 %s75, %s82
      %p315 = scmp.eq.s32.totalorder %s314, 0
      %s317 = sadd.s32 %s316, 1
      %s318 = scalar_select %p315, %s316, %s317
      %p321 = pneg %p315
      %p322 = scmp.eq.s32.totalorder %s75, 3
      %p323 = por %p321, %p322
      %p324 = scmp.ne.s32.totalorder %s316, %s319
      %p325 = scmp.eq.s32.totalorder %s75, 0
      %p326 = por %p324, %p325
      %p327 = scmp.ne.s32.totalorder %s316, %s319
      %p328 = scmp.eq.s32.totalorder %s80, 3
      %p329 = por %p327, %p328
      %p330 = scmp.ne.s32.totalorder %s319, %s320
      %p331 = scmp.eq.s32.totalorder %s80, 0
      %p332 = por %p330, %p331
      %p333 = scmp.ne.s32.totalorder %s319, %s320
      %p334 = scmp.eq.s32.totalorder %s81, 3
      %p335 = por %p333, %p334
      %p337 = scmp.ne.s32.totalorder %s320, %s336
      %p338 = scmp.eq.s32.totalorder %s81, 0
      %p339 = por %p337, %p338
      %s340 = ssub.s32 %s75, %s82
      %p341 = scmp.eq.s32.totalorder %s340, 0
      %s343 = sadd.s32 %s342, 1
      %s344 = scalar_select %p341, %s342, %s343
      %p347 = pneg %p341
      %p348 = scmp.eq.s32.totalorder %s75, 3
      %p349 = por %p347, %p348
      %p350 = scmp.ne.s32.totalorder %s342, %s345
      %p351 = scmp.eq.s32.totalorder %s75, 0
      %p352 = por %p350, %p351
      %p353 = scmp.ne.s32.totalorder %s342, %s345
      %p354 = scmp.eq.s32.totalorder %s80, 3
      %p355 = por %p353, %p354
      %p356 = scmp.ne.s32.totalorder %s345, %s346
      %p357 = scmp.eq.s32.totalorder %s80, 0
      %p358 = por %p356, %p357
      %p359 = scmp.ne.s32.totalorder %s345, %s346
      %p360 = scmp.eq.s32.totalorder %s81, 3
      %p361 = por %p359, %p360
      %p363 = scmp.ne.s32.totalorder %s346, %s362
      %p364 = scmp.eq.s32.totalorder %s81, 0
      %p365 = por %p363, %p364
      %s366 = ssub.s32 %s75, %s82
      %p367 = scmp.eq.s32.totalorder %s366, 0
      %s369 = sadd.s32 %s368, 1
      %s370 = scalar_select %p367, %s368, %s369
      %p373 = pneg %p367
      %p374 = scmp.eq.s32.totalorder %s75, 3
      %p375 = por %p373, %p374
      %p376 = scmp.ne.s32.totalorder %s368, %s371
      %p377 = scmp.eq.s32.totalorder %s75, 0
      %p378 = por %p376, %p377
      %p379 = scmp.ne.s32.totalorder %s368, %s371
      %p380 = scmp.eq.s32.totalorder %s80, 3
      %p381 = por %p379, %p380
      %p382 = scmp.ne.s32.totalorder %s371, %s372
      %p383 = scmp.eq.s32.totalorder %s80, 0
      %p384 = por %p382, %p383
      %p385 = scmp.ne.s32.totalorder %s371, %s372
      %p386 = scmp.eq.s32.totalorder %s81, 3
      %p387 = por %p385, %p386
      %p389 = scmp.ne.s32.totalorder %s372, %s388
      %p390 = scmp.eq.s32.totalorder %s81, 0
      %p391 = por %p389, %p390
      %s392 = ssub.s32 %s75, %s82
      %p393 = scmp.eq.s32.totalorder %s392, 0
      %s395 = sadd.s32 %s394, 1
      %s396 = scalar_select %p393, %s394, %s395
      %p399 = pneg %p393
      %p400 = scmp.eq.s32.totalorder %s75, 3
      %p401 = por %p399, %p400
      %p402 = scmp.ne.s32.totalorder %s394, %s397
      %p403 = scmp.eq.s32.totalorder %s75, 0
      %p404 = por %p402, %p403
      %p405 = scmp.ne.s32.totalorder %s394, %s397
      %p406 = scmp.eq.s32.totalorder %s80, 3
      %p407 = por %p405, %p406
      %p408 = scmp.ne.s32.totalorder %s397, %s398
      %p409 = scmp.eq.s32.totalorder %s80, 0
      %p410 = por %p408, %p409
      %p411 = scmp.ne.s32.totalorder %s397, %s398
      %p412 = scmp.eq.s32.totalorder %s81, 3
      %p413 = por %p411, %p412
      %p415 = scmp.ne.s32.totalorder %s398, %s414
      %p416 = scmp.eq.s32.totalorder %s81, 0
      %p417 = por %p415, %p416
      %s418 = ssub.s32 %s75, %s82
      %p419 = scmp.eq.s32.totalorder %s418, 0
      %s421 = sadd.s32 %s420, 1
      %s422 = scalar_select %p419, %s420, %s421
      %p425 = pneg %p419
      %p426 = scmp.eq.s32.totalorder %s75, 3
      %p427 = por %p425, %p426
      %p428 = scmp.ne.s32.totalorder %s420, %s423
      %p429 = scmp.eq.s32.totalorder %s75, 0
      %p430 = por %p428, %p429
      %p431 = scmp.ne.s32.totalorder %s420, %s423
      %p432 = scmp.eq.s32.totalorder %s80, 3
      %p433 = por %p431, %p432
      %p434 = scmp.ne.s32.totalorder %s423, %s424
      %p435 = scmp.eq.s32.totalorder %s80, 0
      %p436 = por %p434, %p435
      %p437 = scmp.ne.s32.totalorder %s423, %s424
      %p438 = scmp.eq.s32.totalorder %s81, 3
      %p439 = por %p437, %p438
      %p441 = scmp.ne.s32.totalorder %s424, %s440
      %p442 = scmp.eq.s32.totalorder %s81, 0
      %p443 = por %p441, %p442
      %s444 = ssub.s32 %s75, %s82
      %p445 = scmp.eq.s32.totalorder %s444, 0
      %s447 = sadd.s32 %s446, 1
      %s448 = scalar_select %p445, %s446, %s447
      %p451 = pneg %p445
      %p452 = scmp.eq.s32.totalorder %s75, 3
      %p453 = por %p451, %p452
      %p454 = scmp.ne.s32.totalorder %s446, %s449
      %p455 = scmp.eq.s32.totalorder %s75, 0
      %p456 = por %p454, %p455
      %p457 = scmp.ne.s32.totalorder %s446, %s449
      %p458 = scmp.eq.s32.totalorder %s80, 3
      %p459 = por %p457, %p458
      %p460 = scmp.ne.s32.totalorder %s449, %s450
      %p461 = scmp.eq.s32.totalorder %s80, 0
      %p462 = por %p460, %p461
      %p463 = scmp.ne.s32.totalorder %s449, %s450
      %p464 = scmp.eq.s32.totalorder %s81, 3
      %p465 = por %p463, %p464
      %p467 = scmp.ne.s32.totalorder %s450, %s466
      %p468 = scmp.eq.s32.totalorder %s81, 0
      %p469 = por %p467, %p468
      %s470 = ssub.s32 %s75, %s82
      %p471 = scmp.eq.s32.totalorder %s470, 0
      %s473 = sadd.s32 %s472, 1
      %s474 = scalar_select %p471, %s472, %s473
      %p477 = pneg %p471
      %p478 = scmp.eq.s32.totalorder %s75, 3
      %p479 = por %p477, %p478
      %p480 = scmp.ne.s32.totalorder %s472, %s475
      %p481 = scmp.eq.s32.totalorder %s75, 0
      %p482 = por %p480, %p481
      %p483 = scmp.ne.s32.totalorder %s472, %s475
      %p484 = scmp.eq.s32.totalorder %s80, 3
      %p485 = por %p483, %p484
      %p486 = scmp.ne.s32.totalorder %s475, %s476
      %p487 = scmp.eq.s32.totalorder %s80, 0
      %p488 = por %p486, %p487
      %p489 = scmp.ne.s32.totalorder %s475, %s476
      %p490 = scmp.eq.s32.totalorder %s81, 3
      %p491 = por %p489, %p490
      %p493 = scmp.ne.s32.totalorder %s476, %s492
      %p494 = scmp.eq.s32.totalorder %s81, 0
      %p495 = por %p493, %p494
      %s496 = ssub.s32 %s75, %s82
      %p497 = scmp.eq.s32.totalorder %s496, 0
      %s499 = sadd.s32 %s498, 1
      %s500 = scalar_select %p497, %s498, %s499
      %p503 = pneg %p497
      %p504 = scmp.eq.s32.totalorder %s75, 3
      %p505 = por %p503, %p504
      %p506 = scmp.ne.s32.totalorder %s498, %s501
      %p507 = scmp.eq.s32.totalorder %s75, 0
      %p508 = por %p506, %p507
      %p509 = scmp.ne.s32.totalorder %s498, %s501
      %p510 = scmp.eq.s32.totalorder %s80, 3
      %p511 = por %p509, %p510
      %p512 = scmp.ne.s32.totalorder %s501, %s502
      %p513 = scmp.eq.s32.totalorder %s80, 0
      %p514 = por %p512, %p513
      %p515 = scmp.ne.s32.totalorder %s501, %s502
      %p516 = scmp.eq.s32.totalorder %s81, 3
      %p517 = por %p515, %p516
      %p519 = scmp.ne.s32.totalorder %s502, %s518
      %p520 = scmp.eq.s32.totalorder %s81, 0
      %p521 = por %p519, %p520
      %s522 = ssub.s32 %s75, %s82
      %p523 = scmp.eq.s32.totalorder %s522, 0
      %s525 = sadd.s32 %s524, 1
      %s526 = scalar_select %p523, %s524, %s525
      %p529 = pneg %p523
      %p530 = scmp.eq.s32.totalorder %s75, 3
      %p531 = por %p529, %p530
      %p532 = scmp.ne.s32.totalorder %s524, %s527
      %p533 = scmp.eq.s32.totalorder %s75, 0
      %p534 = por %p532, %p533
      %p535 = scmp.ne.s32.totalorder %s524, %s527
      %p536 = scmp.eq.s32.totalorder %s80, 3
      %p537 = por %p535, %p536
      %p538 = scmp.ne.s32.totalorder %s527, %s528
      %p539 = scmp.eq.s32.totalorder %s80, 0
      %p540 = por %p538, %p539
      %p541 = scmp.ne.s32.totalorder %s527, %s528
      %p542 = scmp.eq.s32.totalorder %s81, 3
      %p543 = por %p541, %p542
      %p545 = scmp.ne.s32.totalorder %s528, %s544
      %p546 = scmp.eq.s32.totalorder %s81, 0
      %p547 = por %p545, %p546
      %s548 = ssub.s32 %s75, %s82
      %p549 = scmp.eq.s32.totalorder %s548, 0
      %s551 = sadd.s32 %s550, 1
      %s552 = scalar_select %p549, %s550, %s551
      %p555 = pneg %p549
      %p556 = scmp.eq.s32.totalorder %s75, 3
      %p557 = por %p555, %p556
      %p558 = scmp.ne.s32.totalorder %s550, %s553
      %p559 = scmp.eq.s32.totalorder %s75, 0
      %p560 = por %p558, %p559
      %p561 = scmp.ne.s32.totalorder %s550, %s553
      %p562 = scmp.eq.s32.totalorder %s80, 3
      %p563 = por %p561, %p562
      %p564 = scmp.ne.s32.totalorder %s553, %s554
      %p565 = scmp.eq.s32.totalorder %s80, 0
      %p566 = por %p564, %p565
      %p567 = scmp.ne.s32.totalorder %s553, %s554
      %p568 = scmp.eq.s32.totalorder %s81, 3
      %p569 = por %p567, %p568
      %p571 = scmp.ne.s32.totalorder %s554, %s570
      %p572 = scmp.eq.s32.totalorder %s81, 0
      %p573 = por %p571, %p572
      %s574 = ssub.s32 %s75, %s82
      %p575 = scmp.eq.s32.totalorder %s574, 0
      %s577 = sadd.s32 %s576, 1
      %s578 = scalar_select %p575, %s576, %s577
      %p581 = pneg %p575
      %p582 = scmp.eq.s32.totalorder %s75, 3
      %p583 = por %p581, %p582
      %p584 = scmp.ne.s32.totalorder %s576, %s579
      %p585 = scmp.eq.s32.totalorder %s75, 0
      %p586 = por %p584, %p585
      %p587 = scmp.ne.s32.totalorder %s576, %s579
      %p588 = scmp.eq.s32.totalorder %s80, 3
      %p589 = por %p587, %p588
      %p590 = scmp.ne.s32.totalorder %s579, %s580
      %p591 = scmp.eq.s32.totalorder %s80, 0
      %p592 = por %p590, %p591
      %p593 = scmp.ne.s32.totalorder %s579, %s580
      %p594 = scmp.eq.s32.totalorder %s81, 3
      %p595 = por %p593, %p594
      %p597 = scmp.ne.s32.totalorder %s580, %s596
      %p598 = scmp.eq.s32.totalorder %s81, 0
      %p599 = por %p597, %p598
      %s600 = ssub.s32 %s75, %s82
      %p601 = scmp.eq.s32.totalorder %s600, 0
      %s603 = sadd.s32 %s602, 1
      %s604 = scalar_select %p601, %s602, %s603
      %p607 = pneg %p601
      %p608 = scmp.eq.s32.totalorder %s75, 3
      %p609 = por %p607, %p608
      %p610 = scmp.ne.s32.totalorder %s602, %s605
      %p611 = scmp.eq.s32.totalorder %s75, 0
      %p612 = por %p610, %p611
      %p613 = scmp.ne.s32.totalorder %s602, %s605
      %p614 = scmp.eq.s32.totalorder %s80, 3
      %p615 = por %p613, %p614
      %p616 = scmp.ne.s32.totalorder %s605, %s606
      %p617 = scmp.eq.s32.totalorder %s80, 0
      %p618 = por %p616, %p617
      %p619 = scmp.ne.s32.totalorder %s605, %s606
      %p620 = scmp.eq.s32.totalorder %s81, 3
      %p621 = por %p619, %p620
      %p623 = scmp.ne.s32.totalorder %s606, %s622
      %p624 = scmp.eq.s32.totalorder %s81, 0
      %p625 = por %p623, %p624
      %s627 = sadd.s32 %s626, 1
      %p630 = scmp.eq.s32.totalorder %s75, 3
      %p631 = scmp.ne.s32.totalorder %s626, %s628
      %p632 = scmp.eq.s32.totalorder %s75, 0
      %p633 = por %p631, %p632
      %p634 = scmp.ne.s32.totalorder %s626, %s628
      %p635 = scmp.eq.s32.totalorder %s80, 3
      %p636 = por %p634, %p635
      %p637 = scmp.ne.s32.totalorder %s628, %s629
      %p638 = scmp.eq.s32.totalorder %s80, 0
      %p639 = por %p637, %p638
      %p640 = scmp.ne.s32.totalorder %s628, %s629
      %p641 = scmp.eq.s32.totalorder %s81, 3
      %p642 = por %p640, %p641
      %p644 = scmp.ne.s32.totalorder %s629, %s643
      %p645 = scmp.eq.s32.totalorder %s81, 0
      %p646 = por %p644, %p645
      %s648 = sadd.s32 %s647, 1
      %p651 = scmp.eq.s32.totalorder %s75, 3
      %p652 = scmp.ne.s32.totalorder %s647, %s649
      %p653 = scmp.eq.s32.totalorder %s75, 0
      %p654 = por %p652, %p653
      %p655 = scmp.ne.s32.totalorder %s647, %s649
      %p656 = scmp.eq.s32.totalorder %s80, 3
      %p657 = por %p655, %p656
      %p658 = scmp.ne.s32.totalorder %s649, %s650
      %p659 = scmp.eq.s32.totalorder %s80, 0
      %p660 = por %p658, %p659
      %p661 = scmp.ne.s32.totalorder %s649, %s650
      %p662 = scmp.eq.s32.totalorder %s81, 3
      %p663 = por %p661, %p662
      %p665 = scmp.ne.s32.totalorder %s650, %s664
      %p666 = scmp.eq.s32.totalorder %s81, 0
      %p667 = por %p665, %p666
      %s669 = sadd.s32 %s668, 1
      %p672 = scmp.eq.s32.totalorder %s75, 3
      %p673 = scmp.ne.s32.totalorder %s668, %s670
      %p674 = scmp.eq.s32.totalorder %s75, 0
      %p675 = por %p673, %p674
      %p676 = scmp.ne.s32.totalorder %s668, %s670
      %p677 = scmp.eq.s32.totalorder %s80, 3
      %p678 = por %p676, %p677
      %p679 = scmp.ne.s32.totalorder %s670, %s671
      %p680 = scmp.eq.s32.totalorder %s80, 0
      %p681 = por %p679, %p680
      %p682 = scmp.ne.s32.totalorder %s670, %s671
      %p683 = scmp.eq.s32.totalorder %s81, 3
      %p684 = por %p682, %p683
      %p686 = scmp.ne.s32.totalorder %s671, %s685
      %p687 = scmp.eq.s32.totalorder %s81, 0
      %p688 = por %p686, %p687
      %s690 = sadd.s32 %s689, 1
      %p693 = scmp.eq.s32.totalorder %s75, 3
      %p694 = scmp.ne.s32.totalorder %s689, %s691
      %p695 = scmp.eq.s32.totalorder %s75, 0
      %p696 = por %p694, %p695
      %p697 = scmp.ne.s32.totalorder %s689, %s691
      %p698 = scmp.eq.s32.totalorder %s80, 3
      %p699 = por %p697, %p698
      %p700 = scmp.ne.s32.totalorder %s691, %s692
      %p701 = scmp.eq.s32.totalorder %s80, 0
      %p702 = por %p700, %p701
      %p703 = scmp.ne.s32.totalorder %s691, %s692
      %p704 = scmp.eq.s32.totalorder %s81, 3
      %p705 = por %p703, %p704
      %p707 = scmp.ne.s32.totalorder %s692, %s706
      %p708 = scmp.eq.s32.totalorder %s81, 0
      %p709 = por %p707, %p708
      %s711 = sadd.s32 %s710, 1
      %p714 = scmp.eq.s32.totalorder %s75, 3
      %p715 = scmp.ne.s32.totalorder %s710, %s712
      %p716 = scmp.eq.s32.totalorder %s75, 0
      %p717 = por %p715, %p716
      %p718 = scmp.ne.s32.totalorder %s710, %s712
      %p719 = scmp.eq.s32.totalorder %s80, 3
      %p720 = por %p718, %p719
      %p721 = scmp.ne.s32.totalorder %s712, %s713
      %p722 = scmp.eq.s32.totalorder %s80, 0
      %p723 = por %p721, %p722
      %p724 = scmp.ne.s32.totalorder %s712, %s713
      %p725 = scmp.eq.s32.totalorder %s81, 3
      %p726 = por %p724, %p725
      %p728 = scmp.ne.s32.totalorder %s713, %s727
      %p729 = scmp.eq.s32.totalorder %s81, 0
      %p730 = por %p728, %p729
      %s732 = sadd.s32 %s731, 1
      %p735 = scmp.eq.s32.totalorder %s75, 3
      %p736 = scmp.ne.s32.totalorder %s731, %s733
      %p737 = scmp.eq.s32.totalorder %s75, 0
      %p738 = por %p736, %p737
      %p739 = scmp.ne.s32.totalorder %s731, %s733
      %p740 = scmp.eq.s32.totalorder %s80, 3
      %p741 = por %p739, %p740
      %p742 = scmp.ne.s32.totalorder %s733, %s734
      %p743 = scmp.eq.s32.totalorder %s80, 0
      %p744 = por %p742, %p743
      %p745 = scmp.ne.s32.totalorder %s733, %s734
      %p746 = scmp.eq.s32.totalorder %s81, 3
      %p747 = por %p745, %p746
      %p749 = scmp.ne.s32.totalorder %s734, %s748
      %p750 = scmp.eq.s32.totalorder %s81, 0
      %p751 = por %p749, %p750
      %s753 = sadd.s32 %s752, 1
      %p756 = scmp.eq.s32.totalorder %s75, 3
      %p757 = scmp.ne.s32.totalorder %s752, %s754
      %p758 = scmp.eq.s32.totalorder %s75, 0
      %p759 = por %p757, %p758
      %p760 = scmp.ne.s32.totalorder %s752, %s754
      %p761 = scmp.eq.s32.totalorder %s80, 3
      %p762 = por %p760, %p761
      %p763 = scmp.ne.s32.totalorder %s754, %s755
      %p764 = scmp.eq.s32.totalorder %s80, 0
      %p765 = por %p763, %p764
      %p766 = scmp.ne.s32.totalorder %s754, %s755
      %p767 = scmp.eq.s32.totalorder %s81, 3
      %p768 = por %p766, %p767
      %p770 = scmp.ne.s32.totalorder %s755, %s769
      %p771 = scmp.eq.s32.totalorder %s81, 0
      %p772 = por %p770, %p771
      %s774 = sadd.s32 %s773, 1
      %p777 = scmp.eq.s32.totalorder %s75, 3
      %p778 = scmp.ne.s32.totalorder %s773, %s775
      %p779 = scmp.eq.s32.totalorder %s75, 0
      %p780 = por %p778, %p779
      %p781 = scmp.ne.s32.totalorder %s773, %s775
      %p782 = scmp.eq.s32.totalorder %s80, 3
      %p783 = por %p781, %p782
      %p784 = scmp.ne.s32.totalorder %s775, %s776
      %p785 = scmp.eq.s32.totalorder %s80, 0
      %p786 = por %p784, %p785
      %p787 = scmp.ne.s32.totalorder %s775, %s776
      %p788 = scmp.eq.s32.totalorder %s81, 3
      %p789 = por %p787, %p788
      %p791 = scmp.ne.s32.totalorder %s776, %s790
      %p792 = scmp.eq.s32.totalorder %s81, 0
      %p793 = por %p791, %p792
      %p794 = scmp.le.s32.totalorder 1, %s75
      %p795 = scmp.lt.s32.totalorder %s75, 5
      %p796 = pnand %p794, %p795
      %p797 = pneg %p796
      // Predicated region
      $region9: #{empath_model_forward.1} parent=5 // pred_check
        _
      $region10: #{empath_model_forward.1} parent=5 // pred_check_branch
        %799 = sbr.rel (%p796) target = $region12
      $region11: #{empath_model_forward.1} parent=5 // pred_region
        %s800 = ssub.s32 %s75, 1
        // Predicated region
        $region13: #{empath_model_forward.1} parent=11 // pred_check
          %p801 = pneg %p96
        $region14: #{empath_model_forward.1} parent=11 // pred_check_branch
          %803 = sbr.rel (%p801) target = $region16
        $region15: #{empath_model_forward.1} parent=11 // pred_region
          _
        $region16: #{empath_model_forward.1} parent=11 // pred_fallthru
          _
        // Predicated region
        $region17: #{empath_model_forward.1} parent=11 // pred_check
          %p804 = pneg %p117
        $region18: #{empath_model_forward.1} parent=11 // pred_check_branch
          %806 = sbr.rel (%p804) target = $region20
        $region19: #{empath_model_forward.1} parent=11 // pred_region
          _
        $region20: #{empath_model_forward.1} parent=11 // pred_fallthru
          _
        // Predicated region
        $region21: #{empath_model_forward.1} parent=11 // pred_check
          %p807 = pneg %p138
        $region22: #{empath_model_forward.1} parent=11 // pred_check_branch
          %809 = sbr.rel (%p807) target = $region24
        $region23: #{empath_model_forward.1} parent=11 // pred_region
          _
        $region24: #{empath_model_forward.1} parent=11 // pred_fallthru
          _
        // Predicated region
        $region25: #{empath_model_forward.1} parent=11 // pred_check
          %p810 = pneg %p159
        $region26: #{empath_model_forward.1} parent=11 // pred_check_branch
          %812 = sbr.rel (%p810) target = $region28
        $region27: #{empath_model_forward.1} parent=11 // pred_region
          _
        $region28: #{empath_model_forward.1} parent=11 // pred_fallthru
          _
        // Predicated region
        $region29: #{empath_model_forward.1} parent=11 // pred_check
          %p813 = pneg %p180
        $region30: #{empath_model_forward.1} parent=11 // pred_check_branch
          %815 = sbr.rel (%p813) target = $region32
        $region31: #{empath_model_forward.1} parent=11 // pred_region
          %s817 = ssub.s32 2048, 2048
          %818 = vsyncadd [#allocation3], %s817
          %s819 = sshll.u32 [#allocation2], 4
          %s820 = int_to_ptr.vmem [resolvable:$true] %s819
          %825 = dma.hbm_to_vmem [thread:$0]  %s9, 2048, %s820, [#allocation3], 128, 128, 8
        $region32: #{empath_model_forward.1} parent=11 // pred_fallthru
          _
        // Predicated region
        $region33: #{empath_model_forward.1} parent=11 // pred_check
          %p826 = pneg %p201
        $region34: #{empath_model_forward.1} parent=11 // pred_check_branch
          %828 = sbr.rel (%p826) target = $region36
        $region35: #{empath_model_forward.1} parent=11 // pred_region
          %s830 = ssub.s32 1024, 1024
          %831 = vsyncadd [#allocation6], %s830
          %s832 = sshll.u32 [#allocation5], 4
          %s833 = int_to_ptr.vmem [resolvable:$true] %s832
          %838 = dma.hbm_to_vmem [thread:$0]  %s11, 1024, %s833, [#allocation6], 64, 64, 4
        $region36: #{empath_model_forward.1} parent=11 // pred_fallthru
          _
        // Predicated region
        $region37: #{empath_model_forward.1} parent=11 // pred_check
          %p839 = pneg %p222
        $region38: #{empath_model_forward.1} parent=11 // pred_check_branch
          %841 = sbr.rel (%p839) target = $region40
        $region39: #{empath_model_forward.1} parent=11 // pred_region
          %s843 = ssub.s32 16, 16
          %844 = vsyncadd [#allocation6], %s843
          %s846 = sshll.u32 [#allocation7], 4
          %s847 = int_to_ptr.vmem [resolvable:$true] %s846
          %849 = dma.hbm_to_vmem [thread:$0]  %s13, 16, %s847, [#allocation6]
        $region40: #{empath_model_forward.1} parent=11 // pred_fallthru
          _
        // Predicated region
        $region41: #{empath_model_forward.1} parent=11 // pred_check
          %p850 = pneg %p243
        $region42: #{empath_model_forward.1} parent=11 // pred_check_branch
          %852 = sbr.rel (%p850) target = $region44
        $region43: #{empath_model_forward.1} parent=11 // pred_region
          %s854 = ssub.s32 2048, 2048
          %855 = vsyncadd [#allocation9], %s854
          %s856 = sshll.u32 [#allocation8], 4
          %s857 = int_to_ptr.vmem [resolvable:$true] %s856
          %862 = dma.hbm_to_vmem [thread:$0]  %s15, 2048, %s857, [#allocation9], 128, 128, 8
        $region44: #{empath_model_forward.1} parent=11 // pred_fallthru
          _
        // Predicated region
        $region45: #{empath_model_forward.1} parent=11 // pred_check
          %p863 = pneg %p264
        $region46: #{empath_model_forward.1} parent=11 // pred_check_branch
          %865 = sbr.rel (%p863) target = $region48
        $region47: #{empath_model_forward.1} parent=11 // pred_region
          _
        $region48: #{empath_model_forward.1} parent=11 // pred_fallthru
          _
        // Predicated region
        $region49: #{empath_model_forward.1} parent=11 // pred_check
          %p866 = pneg %p285
        $region50: #{empath_model_forward.1} parent=11 // pred_check_branch
          %868 = sbr.rel (%p866) target = $region52
        $region51: #{empath_model_forward.1} parent=11 // pred_region
          %s870 = ssub.s32 2048, 2048
          %871 = vsyncadd [#allocation9], %s870
          %s872 = sshll.u32 [#allocation10], 4
          %s873 = int_to_ptr.vmem [resolvable:$true] %s872
          %878 = dma.hbm_to_vmem [thread:$0]  %s19, 2048, %s873, [#allocation9], 64, 64, 4
        $region52: #{empath_model_forward.1} parent=11 // pred_fallthru
          _
        // Predicated region
        $region53: #{empath_model_forward.1} parent=11 // pred_check
          %p879 = pneg %p306
        $region54: #{empath_model_forward.1} parent=11 // pred_check_branch
          %881 = sbr.rel (%p879) target = $region56
        $region55: #{empath_model_forward.1} parent=11 // pred_region
          %s883 = ssub.s32 16, 16
          %884 = vsyncadd [#allocation12], %s883
          %s886 = sshll.u32 [#allocation11], 4
          %s887 = int_to_ptr.vmem [resolvable:$true] %s886
          %889 = dma.hbm_to_vmem [thread:$0]  %s21, 16, %s887, [#allocation12]
        $region56: #{empath_model_forward.1} parent=11 // pred_fallthru
          _
        // Predicated region
        $region57: #{empath_model_forward.1} parent=11 // pred_check
          %p890 = pneg %p639
        $region58: #{empath_model_forward.1} parent=11 // pred_check_branch
          %892 = sbr.rel (%p890) target = $region60
        $region59: #{empath_model_forward.1} parent=11 // pred_region
          %s894 = ssub.s32 2048, 2048
          %895 = vsyncadd [#allocation6], %s894
          %s896 = sshll.u32 [#allocation24], 4
          %s897 = int_to_ptr.vmem [resolvable:$true] %s896
          %902 = dma.hbm_to_vmem [thread:$0]  %s47, 2048, %s897, [#allocation6], 128, 128, 8
        $region60: #{empath_model_forward.1} parent=11 // pred_fallthru
          _
        // Predicated region
        $region61: #{empath_model_forward.1} parent=11 // pred_check
          %p903 = pneg %p660
        $region62: #{empath_model_forward.1} parent=11 // pred_check_branch
          %905 = sbr.rel (%p903) target = $region64
        $region63: #{empath_model_forward.1} parent=11 // pred_region
          %s907 = ssub.s32 32, 32
          %908 = vsyncadd [#allocation9], %s907
          %s910 = sshll.u32 [#allocation25], 4
          %s911 = int_to_ptr.vmem [resolvable:$true] %s910
          %913 = dma.hbm_to_vmem [thread:$0]  %s49, 32, %s911, [#allocation9]
        $region64: #{empath_model_forward.1} parent=11 // pred_fallthru
          _
        // Predicated region
        $region65: #{empath_model_forward.1} parent=11 // pred_check
          %p914 = pneg %p681
        $region66: #{empath_model_forward.1} parent=11 // pred_check_branch
          %916 = sbr.rel (%p914) target = $region68
        $region67: #{empath_model_forward.1} parent=11 // pred_region
          %s918 = ssub.s32 2048, 2048
          %919 = vsyncadd [#allocation12], %s918
          %s920 = sshll.u32 [#allocation26], 4
          %s921 = int_to_ptr.vmem [resolvable:$true] %s920
          %926 = dma.hbm_to_vmem [thread:$0]  %s51, 2048, %s921, [#allocation12], 64, 64, 4
        $region68: #{empath_model_forward.1} parent=11 // pred_fallthru
          _
        // Predicated region
        $region69: #{empath_model_forward.1} parent=11 // pred_check
          %p927 = pneg %p702
        $region70: #{empath_model_forward.1} parent=11 // pred_check_branch
          %929 = sbr.rel (%p927) target = $region72
        $region71: #{empath_model_forward.1} parent=11 // pred_region
          %s931 = ssub.s32 16, 16
          %932 = vsyncadd [#allocation28], %s931
          %s934 = sshll.u32 [#allocation27], 4
          %s935 = int_to_ptr.vmem [resolvable:$true] %s934
          %937 = dma.hbm_to_vmem [thread:$0]  %s53, 16, %s935, [#allocation28]
        $region72: #{empath_model_forward.1} parent=11 // pred_fallthru
          _
      $region12: #{empath_model_forward.1} parent=5 // pred_fallthru
        _
      %p938 = scmp.lt.s32.totalorder %s75, 4
      // Predicated region
      $region73: #{empath_model_forward.1} parent=5 // pred_check
        %p939 = pneg %p938
      $region74: #{empath_model_forward.1} parent=5 // pred_check_branch
        %941 = sbr.rel (%p939) target = $region76
      $region75: #{empath_model_forward.1} parent=5 // pred_region
        // Predicated region
        $region77: #{empath_model_forward.1} parent=75 // pred_check
          %p942 = pneg %p326
        $region78: #{empath_model_forward.1} parent=75 // pred_check_branch
          %944 = sbr.rel (%p942) target = $region80
        $region79: #{empath_model_forward.1} parent=75 // pred_region
          %s945 = sand.u32 %s75, 1
          %s946 = scalar_lea.sflag [#allocation3], %s945
          %s947 = sand.u32 %s316, 1
          %s948 = smul.addr %s947, 192
          %s949 = scalar_lea.vmem [#allocation13], %s948
          %s951 = ssub.s32 3072, 3072
          %952 = vsyncadd %s946, %s951
          %s953 = smul.addr %s75, 48
          %s954 = smul.addr %s953, 64
          %s955 = scalar_lea.hbm %s23, %s954
          %s956 = sshll.u32 %s949, 4
          %s957 = int_to_ptr.vmem [resolvable:$true] %s956
          %962 = dma.hbm_to_vmem [thread:$0]  %s955, 3072, %s957, %s946, 192, 192, 12
        $region80: #{empath_model_forward.1} parent=75 // pred_fallthru
          _
        // Predicated region
        $region81: #{empath_model_forward.1} parent=75 // pred_check
          %p963 = pneg %p352
        $region82: #{empath_model_forward.1} parent=75 // pred_check_branch
          %965 = sbr.rel (%p963) target = $region84
        $region83: #{empath_model_forward.1} parent=75 // pred_region
          %s966 = sand.u32 %s75, 1
          %s967 = scalar_lea.sflag [#allocation3], %s966
          %s968 = sand.u32 %s342, 1
          %s969 = smul.addr %s968, 3
          %s970 = scalar_lea.vmem [#allocation14], %s969
          %s972 = ssub.s32 48, 48
          %973 = vsyncadd %s967, %s972
          %s974 = smul.addr %s75, 3
          %s975 = smul.addr %s974, 16
          %s976 = scalar_lea.hbm %s25, %s975
          %s978 = sshll.u32 %s970, 4
          %s979 = int_to_ptr.vmem [resolvable:$true] %s978
          %981 = dma.hbm_to_vmem [thread:$0]  %s976, 48, %s979, %s967
        $region84: #{empath_model_forward.1} parent=75 // pred_fallthru
          _
        // Predicated region
        $region85: #{empath_model_forward.1} parent=75 // pred_check
          %p982 = pneg %p378
        $region86: #{empath_model_forward.1} parent=75 // pred_check_branch
          %984 = sbr.rel (%p982) target = $region88
        $region87: #{empath_model_forward.1} parent=75 // pred_region
          %s985 = sand.u32 %s75, 1
          %s986 = scalar_lea.sflag [#allocation3], %s985
          %s987 = sand.u32 %s368, 1
          %s988 = smul.addr %s987, 64
          %s989 = scalar_lea.vmem [#allocation15], %s988
          %s991 = ssub.s32 1024, 1024
          %992 = vsyncadd %s986, %s991
          %s993 = smul.addr %s75, 16
          %s994 = smul.addr %s993, 64
          %s995 = scalar_lea.hbm %s27, %s994
          %s996 = sshll.u32 %s989, 4
          %s997 = int_to_ptr.vmem [resolvable:$true] %s996
          %1002 = dma.hbm_to_vmem [thread:$0]  %s995, 1024, %s997, %s986, 64, 64, 4
        $region88: #{empath_model_forward.1} parent=75 // pred_fallthru
          _
        // Predicated region
        $region89: #{empath_model_forward.1} parent=75 // pred_check
          %p1003 = pneg %p404
        $region90: #{empath_model_forward.1} parent=75 // pred_check_branch
          %1005 = sbr.rel (%p1003) target = $region92
        $region91: #{empath_model_forward.1} parent=75 // pred_region
          %p1006 = scmp.lt.s32.totalorder %s75, 3
          %s1007 = scalar_select %p1006, %s75, 3
          %s1008 = scalar_lea.vmem %s29, %s1007
        $region92: #{empath_model_forward.1} parent=75 // pred_fallthru
          _
        // Predicated region
        $region93: #{empath_model_forward.1} parent=75 // pred_check
          %p1009 = pneg %p430
        $region94: #{empath_model_forward.1} parent=75 // pred_check_branch
          %1011 = sbr.rel (%p1009) target = $region96
        $region95: #{empath_model_forward.1} parent=75 // pred_region
          %s1012 = sand.u32 %s75, 1
          %s1013 = scalar_lea.sflag [#allocation3], %s1012
          %s1014 = sand.u32 %s420, 1
          %s1015 = scalar_lea.vmem [#allocation16], %s1014
          %s1017 = ssub.s32 16, 16
          %1018 = vsyncadd %s1013, %s1017
          %s1019 = smul.addr %s75, 16
          %s1020 = scalar_lea.hbm %s31, %s1019
          %s1022 = sshll.u32 %s1015, 4
          %s1023 = int_to_ptr.vmem [resolvable:$true] %s1022
          %1025 = dma.hbm_to_vmem [thread:$0]  %s1020, 16, %s1023, %s1013
        $region96: #{empath_model_forward.1} parent=75 // pred_fallthru
          _
        // Predicated region
        $region97: #{empath_model_forward.1} parent=75 // pred_check
          %p1026 = pneg %p456
        $region98: #{empath_model_forward.1} parent=75 // pred_check_branch
          %1028 = sbr.rel (%p1026) target = $region100
        $region99: #{empath_model_forward.1} parent=75 // pred_region
          %s1029 = sand.u32 %s75, 1
          %s1030 = scalar_lea.sflag [#allocation3], %s1029
          %s1031 = sand.u32 %s446, 1
          %s1032 = scalar_lea.vmem [#allocation17], %s1031
          %s1034 = ssub.s32 16, 16
          %1035 = vsyncadd %s1030, %s1034
          %s1036 = smul.addr %s75, 16
          %s1037 = scalar_lea.hbm %s33, %s1036
          %s1039 = sshll.u32 %s1032, 4
          %s1040 = int_to_ptr.vmem [resolvable:$true] %s1039
          %1042 = dma.hbm_to_vmem [thread:$0]  %s1037, 16, %s1040, %s1030
        $region100: #{empath_model_forward.1} parent=75 // pred_fallthru
          _
        // Predicated region
        $region101: #{empath_model_forward.1} parent=75 // pred_check
          %p1043 = pneg %p482
        $region102: #{empath_model_forward.1} parent=75 // pred_check_branch
          %1045 = sbr.rel (%p1043) target = $region104
        $region103: #{empath_model_forward.1} parent=75 // pred_region
          %s1046 = sand.u32 %s75, 1
          %s1047 = scalar_lea.sflag [#allocation3], %s1046
          %s1048 = sand.u32 %s472, 1
          %s1049 = smul.addr %s1048, 256
          %s1050 = scalar_lea.vmem [#allocation18], %s1049
          %s1052 = ssub.s32 4096, 4096
          %1053 = vsyncadd %s1047, %s1052
          %s1054 = smul.addr %s75, 64
          %s1055 = smul.addr %s1054, 64
          %s1056 = scalar_lea.hbm %s35, %s1055
          %s1057 = sshll.u32 %s1050, 4
          %s1058 = int_to_ptr.vmem [resolvable:$true] %s1057
          %1063 = dma.hbm_to_vmem [thread:$0]  %s1056, 4096, %s1058, %s1047, 256, 256, 16
        $region104: #{empath_model_forward.1} parent=75 // pred_fallthru
          _
        // Predicated region
        $region105: #{empath_model_forward.1} parent=75 // pred_check
          %p1064 = pneg %p508
        $region106: #{empath_model_forward.1} parent=75 // pred_check_branch
          %1066 = sbr.rel (%p1064) target = $region108
        $region107: #{empath_model_forward.1} parent=75 // pred_region
          %s1067 = sand.u32 %s75, 1
          %s1068 = scalar_lea.sflag [#allocation3], %s1067
          %s1069 = sand.u32 %s498, 1
          %s1070 = smul.addr %s1069, 4
          %s1071 = scalar_lea.vmem [#allocation19], %s1070
          %s1073 = ssub.s32 64, 64
          %1074 = vsyncadd %s1068, %s1073
          %s1075 = smul.addr %s75, 4
          %s1076 = smul.addr %s1075, 16
          %s1077 = scalar_lea.hbm %s37, %s1076
          %s1079 = sshll.u32 %s1071, 4
          %s1080 = int_to_ptr.vmem [resolvable:$true] %s1079
          %1082 = dma.hbm_to_vmem [thread:$0]  %s1077, 64, %s1080, %s1068
        $region108: #{empath_model_forward.1} parent=75 // pred_fallthru
          _
        // Predicated region
        $region109: #{empath_model_forward.1} parent=75 // pred_check
          %p1083 = pneg %p534
        $region110: #{empath_model_forward.1} parent=75 // pred_check_branch
          %1085 = sbr.rel (%p1083) target = $region112
        $region111: #{empath_model_forward.1} parent=75 // pred_region
          %s1086 = sand.u32 %s75, 1
          %s1087 = scalar_lea.sflag [#allocation3], %s1086
          %s1088 = sand.u32 %s524, 1
          %s1089 = smul.addr %s1088, 256
          %s1090 = scalar_lea.vmem [#allocation20], %s1089
          %s1092 = ssub.s32 4096, 4096
          %1093 = vsyncadd %s1087, %s1092
          %s1094 = smul.addr %s75, 64
          %s1095 = smul.addr %s1094, 64
          %s1096 = scalar_lea.hbm %s39, %s1095
          %s1097 = sshll.u32 %s1090, 4
          %s1098 = int_to_ptr.vmem [resolvable:$true] %s1097
          %1103 = dma.hbm_to_vmem [thread:$0]  %s1096, 4096, %s1098, %s1087, 64, 64, 4
        $region112: #{empath_model_forward.1} parent=75 // pred_fallthru
          _
        // Predicated region
        $region113: #{empath_model_forward.1} parent=75 // pred_check
          %p1104 = pneg %p560
        $region114: #{empath_model_forward.1} parent=75 // pred_check_branch
          %1106 = sbr.rel (%p1104) target = $region116
        $region115: #{empath_model_forward.1} parent=75 // pred_region
          %s1107 = sand.u32 %s75, 1
          %s1108 = scalar_lea.sflag [#allocation3], %s1107
          %s1109 = sand.u32 %s550, 1
          %s1110 = scalar_lea.vmem [#allocation21], %s1109
          %s1112 = ssub.s32 16, 16
          %1113 = vsyncadd %s1108, %s1112
          %s1114 = smul.addr %s75, 16
          %s1115 = scalar_lea.hbm %s41, %s1114
          %s1117 = sshll.u32 %s1110, 4
          %s1118 = int_to_ptr.vmem [resolvable:$true] %s1117
          %1120 = dma.hbm_to_vmem [thread:$0]  %s1115, 16, %s1118, %s1108
        $region116: #{empath_model_forward.1} parent=75 // pred_fallthru
          _
        // Predicated region
        $region117: #{empath_model_forward.1} parent=75 // pred_check
          %p1121 = pneg %p586
        $region118: #{empath_model_forward.1} parent=75 // pred_check_branch
          %1123 = sbr.rel (%p1121) target = $region120
        $region119: #{empath_model_forward.1} parent=75 // pred_region
          %s1124 = sand.u32 %s75, 1
          %s1125 = scalar_lea.sflag [#allocation3], %s1124
          %s1126 = sand.u32 %s576, 1
          %s1127 = scalar_lea.vmem [#allocation22], %s1126
          %s1129 = ssub.s32 16, 16
          %1130 = vsyncadd %s1125, %s1129
          %s1131 = smul.addr %s75, 16
          %s1132 = scalar_lea.hbm %s43, %s1131
          %s1134 = sshll.u32 %s1127, 4
          %s1135 = int_to_ptr.vmem [resolvable:$true] %s1134
          %1137 = dma.hbm_to_vmem [thread:$0]  %s1132, 16, %s1135, %s1125
        $region120: #{empath_model_forward.1} parent=75 // pred_fallthru
          _
        // Predicated region
        $region121: #{empath_model_forward.1} parent=75 // pred_check
          %p1138 = pneg %p612
        $region122: #{empath_model_forward.1} parent=75 // pred_check_branch
          %1140 = sbr.rel (%p1138) target = $region124
        $region123: #{empath_model_forward.1} parent=75 // pred_region
          %s1141 = sand.u32 %s75, 1
          %s1142 = scalar_lea.sflag [#allocation3], %s1141
          %s1143 = sand.u32 %s602, 1
          %s1144 = scalar_lea.vmem [#allocation23], %s1143
          %s1146 = ssub.s32 16, 16
          %1147 = vsyncadd %s1142, %s1146
          %s1148 = smul.addr %s75, 16
          %s1149 = scalar_lea.hbm %s45, %s1148
          %s1151 = sshll.u32 %s1144, 4
          %s1152 = int_to_ptr.vmem [resolvable:$true] %s1151
          %1154 = dma.hbm_to_vmem [thread:$0]  %s1149, 16, %s1152, %s1142
        $region124: #{empath_model_forward.1} parent=75 // pred_fallthru
          _
      $region76: #{empath_model_forward.1} parent=5 // pred_fallthru
        _
      %p1155 = scmp.le.s32.totalorder 1, %s75
      %p1156 = scmp.lt.s32.totalorder %s75, 5
      %p1157 = pnand %p1155, %p1156
      %p1158 = pneg %p1157
      // Predicated region
      $region125: #{empath_model_forward.1} parent=5 // pred_check
        _
      $region126: #{empath_model_forward.1} parent=5 // pred_check_branch
        %1160 = sbr.rel (%p1157) target = $region128
      $region127: #{empath_model_forward.1} parent=5 // pred_region
        %s1161 = ssub.s32 %s75, 1
        // Predicated region
        $region129: #{empath_model_forward.1} parent=127 // pred_check
          %p1162 = pneg %p180
        $region130: #{empath_model_forward.1} parent=127 // pred_check_branch
          %1164 = sbr.rel (%p1162) target = $region132
        $region131: #{empath_model_forward.1} parent=127 // pred_region
          %1165 = dma.done [#allocation3], 2048
        $region132: #{empath_model_forward.1} parent=127 // pred_fallthru
          _
        // Predicated region
        $region133: #{empath_model_forward.1} parent=127 // pred_check
          %p1166 = pneg %p201
        $region134: #{empath_model_forward.1} parent=127 // pred_check_branch
          %1168 = sbr.rel (%p1166) target = $region136
        $region135: #{empath_model_forward.1} parent=127 // pred_region
          %1169 = dma.done [#allocation6], 1024
        $region136: #{empath_model_forward.1} parent=127 // pred_fallthru
          _
        // Predicated region
        $region137: #{empath_model_forward.1} parent=127 // pred_check
          %p1170 = pneg %p222
        $region138: #{empath_model_forward.1} parent=127 // pred_check_branch
          %1172 = sbr.rel (%p1170) target = $region140
        $region139: #{empath_model_forward.1} parent=127 // pred_region
          %1173 = dma.done [#allocation6], 16
        $region140: #{empath_model_forward.1} parent=127 // pred_fallthru
          _
        // Predicated region
        $region141: #{empath_model_forward.1} parent=127 // pred_check
          %p1174 = pneg %p243
        $region142: #{empath_model_forward.1} parent=127 // pred_check_branch
          %1176 = sbr.rel (%p1174) target = $region144
        $region143: #{empath_model_forward.1} parent=127 // pred_region
          %1177 = dma.done [#allocation9], 2048
        $region144: #{empath_model_forward.1} parent=127 // pred_fallthru
          _
        // Predicated region
        $region145: #{empath_model_forward.1} parent=127 // pred_check
          %p1178 = pneg %p285
        $region146: #{empath_model_forward.1} parent=127 // pred_check_branch
          %1180 = sbr.rel (%p1178) target = $region148
        $region147: #{empath_model_forward.1} parent=127 // pred_region
          %1181 = dma.done [#allocation9], 2048
        $region148: #{empath_model_forward.1} parent=127 // pred_fallthru
          _
        // Predicated region
        $region149: #{empath_model_forward.1} parent=127 // pred_check
          %p1182 = pneg %p306
        $region150: #{empath_model_forward.1} parent=127 // pred_check_branch
          %1184 = sbr.rel (%p1182) target = $region152
        $region151: #{empath_model_forward.1} parent=127 // pred_region
          %1185 = dma.done [#allocation12], 16
        $region152: #{empath_model_forward.1} parent=127 // pred_fallthru
          _
        %s1186 = sand.u32 %s80, 1
        %s1187 = scalar_lea.sflag [#allocation3], %s1186
        %s1188 = sand.u32 %s319, 1
        %s1189 = smul.addr %s1188, 192
        %s1190 = scalar_lea.vmem [#allocation13], %s1189
        // Predicated region
        $region153: #{empath_model_forward.1} parent=127 // pred_check
          %p1191 = pneg %p332
        $region154: #{empath_model_forward.1} parent=127 // pred_check_branch
          %1193 = sbr.rel (%p1191) target = $region156
        $region155: #{empath_model_forward.1} parent=127 // pred_region
          %1194 = dma.done %s1187, 3072
        $region156: #{empath_model_forward.1} parent=127 // pred_fallthru
          _
        %s1195 = sand.u32 %s80, 1
        %s1196 = scalar_lea.sflag [#allocation3], %s1195
        %s1197 = sand.u32 %s345, 1
        %s1198 = smul.addr %s1197, 3
        %s1199 = scalar_lea.vmem [#allocation14], %s1198
        // Predicated region
        $region157: #{empath_model_forward.1} parent=127 // pred_check
          %p1200 = pneg %p358
        $region158: #{empath_model_forward.1} parent=127 // pred_check_branch
          %1202 = sbr.rel (%p1200) target = $region160
        $region159: #{empath_model_forward.1} parent=127 // pred_region
          %1203 = dma.done %s1196, 48
        $region160: #{empath_model_forward.1} parent=127 // pred_fallthru
          _
        %s1204 = sand.u32 %s80, 1
        %s1205 = scalar_lea.sflag [#allocation3], %s1204
        %s1206 = sand.u32 %s371, 1
        %s1207 = smul.addr %s1206, 64
        %s1208 = scalar_lea.vmem [#allocation15], %s1207
        // Predicated region
        $region161: #{empath_model_forward.1} parent=127 // pred_check
          %p1209 = pneg %p384
        $region162: #{empath_model_forward.1} parent=127 // pred_check_branch
          %1211 = sbr.rel (%p1209) target = $region164
        $region163: #{empath_model_forward.1} parent=127 // pred_region
          %1212 = dma.done %s1205, 1024
        $region164: #{empath_model_forward.1} parent=127 // pred_fallthru
          _
        %s1213 = sand.u32 %s80, 1
        %s1214 = scalar_lea.sflag [#allocation3], %s1213
        %s1215 = sand.u32 %s423, 1
        %s1216 = scalar_lea.vmem [#allocation16], %s1215
        // Predicated region
        $region165: #{empath_model_forward.1} parent=127 // pred_check
          %p1217 = pneg %p436
        $region166: #{empath_model_forward.1} parent=127 // pred_check_branch
          %1219 = sbr.rel (%p1217) target = $region168
        $region167: #{empath_model_forward.1} parent=127 // pred_region
          %1220 = dma.done %s1214, 16
        $region168: #{empath_model_forward.1} parent=127 // pred_fallthru
          _
        %s1221 = sand.u32 %s80, 1
        %s1222 = scalar_lea.sflag [#allocation3], %s1221
        %s1223 = sand.u32 %s449, 1
        %s1224 = scalar_lea.vmem [#allocation17], %s1223
        // Predicated region
        $region169: #{empath_model_forward.1} parent=127 // pred_check
          %p1225 = pneg %p462
        $region170: #{empath_model_forward.1} parent=127 // pred_check_branch
          %1227 = sbr.rel (%p1225) target = $region172
        $region171: #{empath_model_forward.1} parent=127 // pred_region
          %1228 = dma.done %s1222, 16
        $region172: #{empath_model_forward.1} parent=127 // pred_fallthru
          _
        %s1229 = sand.u32 %s80, 1
        %s1230 = scalar_lea.sflag [#allocation3], %s1229
        %s1231 = sand.u32 %s475, 1
        %s1232 = smul.addr %s1231, 256
        %s1233 = scalar_lea.vmem [#allocation18], %s1232
        // Predicated region
        $region173: #{empath_model_forward.1} parent=127 // pred_check
          %p1234 = pneg %p488
        $region174: #{empath_model_forward.1} parent=127 // pred_check_branch
          %1236 = sbr.rel (%p1234) target = $region176
        $region175: #{empath_model_forward.1} parent=127 // pred_region
          %1237 = dma.done %s1230, 4096
        $region176: #{empath_model_forward.1} parent=127 // pred_fallthru
          _
        %s1238 = sand.u32 %s80, 1
        %s1239 = scalar_lea.sflag [#allocation3], %s1238
        %s1240 = sand.u32 %s501, 1
        %s1241 = smul.addr %s1240, 4
        %s1242 = scalar_lea.vmem [#allocation19], %s1241
        // Predicated region
        $region177: #{empath_model_forward.1} parent=127 // pred_check
          %p1243 = pneg %p514
        $region178: #{empath_model_forward.1} parent=127 // pred_check_branch
          %1245 = sbr.rel (%p1243) target = $region180
        $region179: #{empath_model_forward.1} parent=127 // pred_region
          %1246 = dma.done %s1239, 64
        $region180: #{empath_model_forward.1} parent=127 // pred_fallthru
          _
        %s1247 = sand.u32 %s80, 1
        %s1248 = scalar_lea.sflag [#allocation3], %s1247
        %s1249 = sand.u32 %s527, 1
        %s1250 = smul.addr %s1249, 256
        %s1251 = scalar_lea.vmem [#allocation20], %s1250
        // Predicated region
        $region181: #{empath_model_forward.1} parent=127 // pred_check
          %p1252 = pneg %p540
        $region182: #{empath_model_forward.1} parent=127 // pred_check_branch
          %1254 = sbr.rel (%p1252) target = $region184
        $region183: #{empath_model_forward.1} parent=127 // pred_region
          %1255 = dma.done %s1248, 4096
        $region184: #{empath_model_forward.1} parent=127 // pred_fallthru
          _
        %s1256 = sand.u32 %s80, 1
        %s1257 = scalar_lea.sflag [#allocation3], %s1256
        %s1258 = sand.u32 %s553, 1
        %s1259 = scalar_lea.vmem [#allocation21], %s1258
        // Predicated region
        $region185: #{empath_model_forward.1} parent=127 // pred_check
          %p1260 = pneg %p566
        $region186: #{empath_model_forward.1} parent=127 // pred_check_branch
          %1262 = sbr.rel (%p1260) target = $region188
        $region187: #{empath_model_forward.1} parent=127 // pred_region
          %1263 = dma.done %s1257, 16
        $region188: #{empath_model_forward.1} parent=127 // pred_fallthru
          _
        %s1264 = sand.u32 %s80, 1
        %s1265 = scalar_lea.sflag [#allocation3], %s1264
        %s1266 = sand.u32 %s579, 1
        %s1267 = scalar_lea.vmem [#allocation22], %s1266
        // Predicated region
        $region189: #{empath_model_forward.1} parent=127 // pred_check
          %p1268 = pneg %p592
        $region190: #{empath_model_forward.1} parent=127 // pred_check_branch
          %1270 = sbr.rel (%p1268) target = $region192
        $region191: #{empath_model_forward.1} parent=127 // pred_region
          %1271 = dma.done %s1265, 16
        $region192: #{empath_model_forward.1} parent=127 // pred_fallthru
          _
        %s1272 = sand.u32 %s80, 1
        %s1273 = scalar_lea.sflag [#allocation3], %s1272
        %s1274 = sand.u32 %s605, 1
        %s1275 = scalar_lea.vmem [#allocation23], %s1274
        // Predicated region
        $region193: #{empath_model_forward.1} parent=127 // pred_check
          %p1276 = pneg %p618
        $region194: #{empath_model_forward.1} parent=127 // pred_check_branch
          %1278 = sbr.rel (%p1276) target = $region196
        $region195: #{empath_model_forward.1} parent=127 // pred_region
          %1279 = dma.done %s1273, 16
        $region196: #{empath_model_forward.1} parent=127 // pred_fallthru
          _
        // Predicated region
        $region197: #{empath_model_forward.1} parent=127 // pred_check
          %p1280 = pneg %p639
        $region198: #{empath_model_forward.1} parent=127 // pred_check_branch
          %1282 = sbr.rel (%p1280) target = $region200
        $region199: #{empath_model_forward.1} parent=127 // pred_region
          %1283 = dma.done [#allocation6], 2048
        $region200: #{empath_model_forward.1} parent=127 // pred_fallthru
          _
        // Predicated region
        $region201: #{empath_model_forward.1} parent=127 // pred_check
          %p1284 = pneg %p660
        $region202: #{empath_model_forward.1} parent=127 // pred_check_branch
          %1286 = sbr.rel (%p1284) target = $region204
        $region203: #{empath_model_forward.1} parent=127 // pred_region
          %1287 = dma.done [#allocation9], 32
        $region204: #{empath_model_forward.1} parent=127 // pred_fallthru
          _
        // Predicated region
        $region205: #{empath_model_forward.1} parent=127 // pred_check
          %p1288 = pneg %p681
        $region206: #{empath_model_forward.1} parent=127 // pred_check_branch
          %1290 = sbr.rel (%p1288) target = $region208
        $region207: #{empath_model_forward.1} parent=127 // pred_region
          %1291 = dma.done [#allocation12], 2048
        $region208: #{empath_model_forward.1} parent=127 // pred_fallthru
          _
        // Predicated region
        $region209: #{empath_model_forward.1} parent=127 // pred_check
          %p1292 = pneg %p702
        $region210: #{empath_model_forward.1} parent=127 // pred_check_branch
          %1294 = sbr.rel (%p1292) target = $region212
        $region211: #{empath_model_forward.1} parent=127 // pred_region
          %1295 = dma.done [#allocation28], 16
        $region212: #{empath_model_forward.1} parent=127 // pred_fallthru
          _
        %p1296 = pneg %p96
        %p1297 = pneg %p93
        %p1298 = pneg %p117
        %p1299 = pneg %p114
        %p1300 = pneg %p138
        %p1301 = pneg %p135
        %p1302 = pneg %p159
        %p1303 = pneg %p156
        %p1304 = pneg %p180
        %p1305 = pneg %p177
        %p1306 = pneg %p201
        %p1307 = pneg %p198
        %p1308 = pneg %p222
        %p1309 = pneg %p219
        %p1310 = pneg %p243
        %p1311 = pneg %p240
        %p1312 = pneg %p264
        %p1313 = pneg %p261
        %p1314 = pneg %p285
        %p1315 = pneg %p282
        %p1316 = pneg %p306
        %p1317 = pneg %p303
        %s1318 = sand.u32 %s80, 1
        %s1319 = scalar_lea.sflag [#allocation3], %s1318
        %s1320 = sand.u32 %s319, 1
        %s1321 = smul.addr %s1320, 192
        %s1322 = scalar_lea.vmem [#allocation13], %s1321
        %p1323 = pneg %p332
        %p1324 = pneg %p329
        %s1325 = sand.u32 %s80, 1
        %s1326 = scalar_lea.sflag [#allocation3], %s1325
        %s1327 = sand.u32 %s345, 1
        %s1328 = smul.addr %s1327, 3
        %s1329 = scalar_lea.vmem [#allocation14], %s1328
        %p1330 = pneg %p358
        %p1331 = pneg %p355
        %s1332 = sand.u32 %s80, 1
        %s1333 = scalar_lea.sflag [#allocation3], %s1332
        %s1334 = sand.u32 %s371, 1
        %s1335 = smul.addr %s1334, 64
        %s1336 = scalar_lea.vmem [#allocation15], %s1335
        %p1337 = pneg %p384
        %p1338 = pneg %p381
        %p1339 = scmp.lt.s32.totalorder %s80, 3
        %s1340 = scalar_select %p1339, %s80, 3
        %s1341 = scalar_lea.vmem %s29, %s1340
        %p1342 = pneg %p410
        %p1343 = pneg %p407
        %s1344 = sand.u32 %s80, 1
        %s1345 = scalar_lea.sflag [#allocation3], %s1344
        %s1346 = sand.u32 %s423, 1
        %s1347 = scalar_lea.vmem [#allocation16], %s1346
        %p1348 = pneg %p436
        %p1349 = pneg %p433
        %s1350 = sand.u32 %s80, 1
        %s1351 = scalar_lea.sflag [#allocation3], %s1350
        %s1352 = sand.u32 %s449, 1
        %s1353 = scalar_lea.vmem [#allocation17], %s1352
        %p1354 = pneg %p462
        %p1355 = pneg %p459
        %s1356 = sand.u32 %s80, 1
        %s1357 = scalar_lea.sflag [#allocation3], %s1356
        %s1358 = sand.u32 %s475, 1
        %s1359 = smul.addr %s1358, 256
        %s1360 = scalar_lea.vmem [#allocation18], %s1359
        %p1361 = pneg %p488
        %p1362 = pneg %p485
        %s1363 = sand.u32 %s80, 1
        %s1364 = scalar_lea.sflag [#allocation3], %s1363
        %s1365 = sand.u32 %s501, 1
        %s1366 = smul.addr %s1365, 4
        %s1367 = scalar_lea.vmem [#allocation19], %s1366
        %p1368 = pneg %p514
        %p1369 = pneg %p511
        %s1370 = sand.u32 %s80, 1
        %s1371 = scalar_lea.sflag [#allocation3], %s1370
        %s1372 = sand.u32 %s527, 1
        %s1373 = smul.addr %s1372, 256
        %s1374 = scalar_lea.vmem [#allocation20], %s1373
        %p1375 = pneg %p540
        %p1376 = pneg %p537
        %s1377 = sand.u32 %s80, 1
        %s1378 = scalar_lea.sflag [#allocation3], %s1377
        %s1379 = sand.u32 %s553, 1
        %s1380 = scalar_lea.vmem [#allocation21], %s1379
        %p1381 = pneg %p566
        %p1382 = pneg %p563
        %s1383 = sand.u32 %s80, 1
        %s1384 = scalar_lea.sflag [#allocation3], %s1383
        %s1385 = sand.u32 %s579, 1
        %s1386 = scalar_lea.vmem [#allocation22], %s1385
        %p1387 = pneg %p592
        %p1388 = pneg %p589
        %s1389 = sand.u32 %s80, 1
        %s1390 = scalar_lea.sflag [#allocation3], %s1389
        %s1391 = sand.u32 %s605, 1
        %s1392 = scalar_lea.vmem [#allocation23], %s1391
        %p1393 = pneg %p618
        %p1394 = pneg %p615
        %p1395 = pneg %p639
        %p1396 = pneg %p636
        %p1397 = pneg %p660
        %p1398 = pneg %p657
        %p1399 = pneg %p681
        %p1400 = pneg %p678
        %p1401 = pneg %p702
        %p1402 = pneg %p699
        %p1403 = pneg %p723
        %p1404 = pneg %p720
        %p1405 = pneg %p744
        %p1406 = pneg %p741
        %p1407 = pneg %p765
        %p1408 = pneg %p762
        %p1409 = pneg %p786
        %p1410 = pneg %p783
        %p1411 = scmp.lt.s32.totalorder %s80, 3
        %s1412 = scalar_select %p1411, %s80, 3
        %s1413 = scalar_lea.vmem %s29, %s1412
        %p1415 = scmp.eq.s32.totalorder %s80, 0
        // Predicated region
        $region213: #{empath_model_forward.1} parent=127 // pred_check
          %p1416 = pneg %p1415
        $region214: #{empath_model_forward.1} parent=127 // pred_check_branch
          %1418 = sbr.rel (%p1416) target = $region216
        $region215: #{empath_model_forward.1} parent=127 // pred_region
          %v1419 = vld [vmem:[%s1] sm:$0xff]
          %v1420 = vld [vmem:[%s1 + $0x8] sm:$0xff]
          %v1421 = vpack.c.bf16 %v1420, %v1419
          %v1422 = vld [vmem:[#allocation5] sm:$0xf]
          %v1423 = vld [vmem:[#allocation5 + $0x4] sm:$0xf]
          %v1424 = vld [vmem:[#allocation5 + $0x8] sm:$0xf]
          %v1425 = vld [vmem:[#allocation5 + $0xc] sm:$0xf]
          %v1426 = vld [vmem:[#allocation5 + $0x10] sm:$0xf]
          %v1427 = vld [vmem:[#allocation5 + $0x14] sm:$0xf]
          %v1428 = vld [vmem:[#allocation5 + $0x18] sm:$0xf]
          %v1429 = vld [vmem:[#allocation5 + $0x1c] sm:$0xf]
          %v1430 = vld [vmem:[#allocation5 + $0x20] sm:$0xf]
          %v1431 = vld [vmem:[#allocation5 + $0x24] sm:$0xf]
          %v1432 = vld [vmem:[#allocation5 + $0x28] sm:$0xf]
          %v1433 = vld [vmem:[#allocation5 + $0x2c] sm:$0xf]
          %v1434 = vld [vmem:[#allocation5 + $0x30] sm:$0xf]
          %v1435 = vld [vmem:[#allocation5 + $0x34] sm:$0xf]
          %v1436 = vld [vmem:[#allocation5 + $0x38] sm:$0xf]
          %v1437 = vld [vmem:[#allocation5 + $0x3c] sm:$0xf]
          %v1438 = vld [vmem:[#allocation7] sm:$0x1]
          %v1440 = vlaneseq
          %v1441 = vshrl.u32 %v1440, 7
          %v1442 = vsub.s32 0, %v1441
          %v1443 = vrot.slane %v1438, %v1442
          %v1461 = vunpack.c.l.b16 %v1422
          %v1462 = vunpack.c.l.b16 %v1423
          %v1463 = vunpack.c.l.b16 %v1424
          %v1464 = vunpack.c.l.b16 %v1425
          %v1465 = vunpack.c.l.b16 %v1426
          %v1466 = vunpack.c.l.b16 %v1427
          %v1467 = vunpack.c.l.b16 %v1428
          %v1468 = vunpack.c.l.b16 %v1429
          %v1469 = vunpack.c.l.b16 %v1430
          %v1470 = vunpack.c.l.b16 %v1431
          %v1471 = vunpack.c.l.b16 %v1432
          %v1472 = vunpack.c.l.b16 %v1433
          %v1473 = vunpack.c.l.b16 %v1434
          %v1474 = vunpack.c.l.b16 %v1435
          %v1475 = vunpack.c.l.b16 %v1436
          %v1476 = vunpack.c.l.b16 %v1437
          %v1477 = vpack.c.b16 %v1462, %v1461
          %v1478 = vpack.c.b16 %v1464, %v1463
          %v1479 = vpack.c.b16 %v1466, %v1465
          %v1480 = vpack.c.b16 %v1468, %v1467
          %v1481 = vpack.c.b16 %v1470, %v1469
          %v1482 = vpack.c.b16 %v1472, %v1471
          %v1483 = vpack.c.b16 %v1474, %v1473
          %v1484 = vpack.c.b16 %v1476, %v1475
          %1493 = vmatprep.subr.bf16.mxu0 0
          %1494 = vmatpush1.bf16.msra.mxu0 %v1477
          %1495 = vmatprep.subr.bf16.mxu0 0
          %1496 = vmatpush1.bf16.msra.mxu0 %v1478
          %1497 = vmatprep.subr.bf16.mxu0 0
          %1498 = vmatpush1.bf16.msra.mxu0 %v1479
          %1499 = vmatprep.subr.bf16.mxu0 0
          %1500 = vmatpush1.bf16.msra.mxu0 %v1480
          %1501 = vmatprep.subr.bf16.mxu0 0
          %1502 = vmatpush1.bf16.msra.mxu0 %v1481
          %1503 = vmatprep.subr.bf16.mxu0 0
          %1504 = vmatpush1.bf16.msra.mxu0 %v1482
          %1505 = vmatprep.subr.bf16.mxu0 0
          %1506 = vmatpush1.bf16.msra.mxu0 %v1483
          %1507 = vmatprep.subr.bf16.mxu0 0
          %1508 = vmatpush1.bf16.msra.mxu0 %v1484
          %1509 = vmatprep.subr.bf16.mxu0 0
          %1510 = vmatpush1.bf16.msra.mxu0 0
          %1511 = vmatprep.subr.bf16.mxu0 0
          %1512 = vmatpush1.bf16.msra.mxu0 0
          %1513 = vmatprep.subr.bf16.mxu0 0
          %1514 = vmatpush1.bf16.msra.mxu0 0
          %1515 = vmatprep.subr.bf16.mxu0 0
          %1516 = vmatpush1.bf16.msra.mxu0 0
          %1517 = vmatprep.subr.bf16.mxu0 0
          %1518 = vmatpush1.bf16.msra.mxu0 0
          %1519 = vmatprep.subr.bf16.mxu0 0
          %1520 = vmatpush1.bf16.msra.mxu0 0
          %1521 = vmatprep.subr.bf16.mxu0 0
          %1522 = vmatpush1.bf16.msra.mxu0 0
          %1523 = vmatprep.subr.bf16.mxu0 0
          %1524 = vmatpush1.bf16.msra.mxu0 0
          %1525 = vmatprep.mubr.bf16.mxu0 0
          %1526 = vmatmul.mubr.bf16.gmra.mrb[0].mxu0 %v1421
          %v1527 = vpop.f32.mrb[0].mxu0
          %v1528 = vadd.f32 %v1443, %v1527
          %v1529 = vpop.f32.mrb[0].mxu0
          %v1530 = vpop.f32.mrb[0].mxu0
          %v1531 = vadd.f32 %v1443, %v1530
          %v1532 = vpop.f32.mrb[0].mxu0
          %1533 = vdwg.mxu0
          %v1534 = vtanh.pop %v1528
          %v1535 = vtanh.pop %v1531
          %1536 = vst [vmem:[#allocation29] sm:$0xff] %v1534
          %1537 = vst [vmem:[#allocation29 + $0x8] sm:$0xff] %v1535
          %1538 = vst [vmem:[#allocation30] sm:$0xff] %v1534
          %1539 = vst [vmem:[#allocation30 + $0x8] sm:$0xff] %v1535
          %v1540 = vpack.c.bf16 %v1535, %v1534
          %v1541 = vld [vmem:[#allocation8] sm:$0xff]
          %v1542 = vld [vmem:[#allocation8 + $0x8] sm:$0xff]
          %v1543 = vld [vmem:[#allocation8 + $0x10] sm:$0xff]
          %v1544 = vld [vmem:[#allocation8 + $0x18] sm:$0xff]
          %v1545 = vld [vmem:[#allocation8 + $0x20] sm:$0xff]
          %v1546 = vld [vmem:[#allocation8 + $0x28] sm:$0xff]
          %v1547 = vld [vmem:[#allocation8 + $0x30] sm:$0xff]
          %v1548 = vld [vmem:[#allocation8 + $0x38] sm:$0xff]
          %v1549 = vld [vmem:[#allocation8 + $0x40] sm:$0xff]
          %v1550 = vld [vmem:[#allocation8 + $0x48] sm:$0xff]
          %v1551 = vld [vmem:[#allocation8 + $0x50] sm:$0xff]
          %v1552 = vld [vmem:[#allocation8 + $0x58] sm:$0xff]
          %v1553 = vld [vmem:[#allocation8 + $0x60] sm:$0xff]
          %v1554 = vld [vmem:[#allocation8 + $0x68] sm:$0xff]
          %v1555 = vld [vmem:[#allocation8 + $0x70] sm:$0xff]
          %v1556 = vld [vmem:[#allocation8 + $0x78] sm:$0xff]
          %v1557 = vld [vmem:[%s17] sm:$0x3]
          %v1559 = vlaneseq
          %v1560 = vshrl.u32 %v1559, 7
          %v1561 = vsub.s32 0, %v1560
          %v1562 = vrot.slane %v1557, %v1561
          %v1563 = vlaneseq
          %v1564 = vshrl.u32 %v1563, 7
          %v1565 = vsub.s32 1, %v1564
          %v1566 = vrot.slane %v1557, %v1565
          %v1585 = vunpack.c.l.b16 %v1541
          %v1586 = vunpack.c.h.b16 %v1541
          %v1587 = vunpack.c.l.b16 %v1542
          %v1588 = vunpack.c.h.b16 %v1542
          %v1589 = vunpack.c.l.b16 %v1543
          %v1590 = vunpack.c.h.b16 %v1543
          %v1591 = vunpack.c.l.b16 %v1544
          %v1592 = vunpack.c.h.b16 %v1544
          %v1593 = vunpack.c.l.b16 %v1545
          %v1594 = vunpack.c.h.b16 %v1545
          %v1595 = vunpack.c.l.b16 %v1546
          %v1596 = vunpack.c.h.b16 %v1546
          %v1597 = vunpack.c.l.b16 %v1547
          %v1598 = vunpack.c.h.b16 %v1547
          %v1599 = vunpack.c.l.b16 %v1548
          %v1600 = vunpack.c.h.b16 %v1548
          %v1601 = vunpack.c.l.b16 %v1549
          %v1602 = vunpack.c.h.b16 %v1549
          %v1603 = vunpack.c.l.b16 %v1550
          %v1604 = vunpack.c.h.b16 %v1550
          %v1605 = vunpack.c.l.b16 %v1551
          %v1606 = vunpack.c.h.b16 %v1551
          %v1607 = vunpack.c.l.b16 %v1552
          %v1608 = vunpack.c.h.b16 %v1552
          %v1609 = vunpack.c.l.b16 %v1553
          %v1610 = vunpack.c.h.b16 %v1553
          %v1611 = vunpack.c.l.b16 %v1554
          %v1612 = vunpack.c.h.b16 %v1554
          %v1613 = vunpack.c.l.b16 %v1555
          %v1614 = vunpack.c.h.b16 %v1555
          %v1615 = vunpack.c.l.b16 %v1556
          %v1616 = vunpack.c.h.b16 %v1556
          %v1617 = vpack.c.b16 %v1587, %v1585
          %v1618 = vpack.c.b16 %v1588, %v1586
          %v1619 = vpack.c.b16 %v1591, %v1589
          %v1620 = vpack.c.b16 %v1592, %v1590
          %v1621 = vpack.c.b16 %v1595, %v1593
          %v1622 = vpack.c.b16 %v1596, %v1594
          %v1623 = vpack.c.b16 %v1599, %v1597
          %v1624 = vpack.c.b16 %v1600, %v1598
          %v1625 = vpack.c.b16 %v1603, %v1601
          %v1626 = vpack.c.b16 %v1604, %v1602
          %v1627 = vpack.c.b16 %v1607, %v1605
          %v1628 = vpack.c.b16 %v1608, %v1606
          %v1629 = vpack.c.b16 %v1611, %v1609
          %v1630 = vpack.c.b16 %v1612, %v1610
          %v1631 = vpack.c.b16 %v1615, %v1613
          %v1632 = vpack.c.b16 %v1616, %v1614
          %1649 = vmatprep.subr.bf16.mxu0 %v1618
          %1650 = vmatpush1.bf16.msra.mxu0 %v1617
          %1651 = vmatprep.subr.bf16.mxu0 %v1620
          %1652 = vmatpush1.bf16.msra.mxu0 %v1619
          %1653 = vmatprep.subr.bf16.mxu0 %v1622
          %1654 = vmatpush1.bf16.msra.mxu0 %v1621
          %1655 = vmatprep.subr.bf16.mxu0 %v1624
          %1656 = vmatpush1.bf16.msra.mxu0 %v1623
          %1657 = vmatprep.subr.bf16.mxu0 %v1626
          %1658 = vmatpush1.bf16.msra.mxu0 %v1625
          %1659 = vmatprep.subr.bf16.mxu0 %v1628
          %1660 = vmatpush1.bf16.msra.mxu0 %v1627
          %1661 = vmatprep.subr.bf16.mxu0 %v1630
          %1662 = vmatpush1.bf16.msra.mxu0 %v1629
          %1663 = vmatprep.subr.bf16.mxu0 %v1632
          %1664 = vmatpush1.bf16.msra.mxu0 %v1631
          %1665 = vmatprep.subr.bf16.mxu0 0
          %1666 = vmatpush1.bf16.msra.mxu0 0
          %1667 = vmatprep.subr.bf16.mxu0 0
          %1668 = vmatpush1.bf16.msra.mxu0 0
          %1669 = vmatprep.subr.bf16.mxu0 0
          %1670 = vmatpush1.bf16.msra.mxu0 0
          %1671 = vmatprep.subr.bf16.mxu0 0
          %1672 = vmatpush1.bf16.msra.mxu0 0
          %1673 = vmatprep.subr.bf16.mxu0 0
          %1674 = vmatpush1.bf16.msra.mxu0 0
          %1675 = vmatprep.subr.bf16.mxu0 0
          %1676 = vmatpush1.bf16.msra.mxu0 0
          %1677 = vmatprep.subr.bf16.mxu0 0
          %1678 = vmatpush1.bf16.msra.mxu0 0
          %1679 = vmatprep.subr.bf16.mxu0 0
          %1680 = vmatpush1.bf16.msra.mxu0 0
          %1681 = vmatprep.mubr.bf16.mxu0 0
          %1682 = vmatmul.mubr.bf16.gmra.mrb[0].mxu0 %v1540
          %v1683 = vpop.f32.mrb[0].mxu0
          %v1684 = vadd.f32 %v1562, %v1683
          %v1685 = vpop.f32.mrb[0].mxu0
          %v1686 = vadd.f32 %v1566, %v1685
          %v1687 = vpop.f32.mrb[0].mxu0
          %v1688 = vadd.f32 %v1562, %v1687
          %v1689 = vpop.f32.mrb[0].mxu0
          %v1690 = vadd.f32 %v1566, %v1689
          %1691 = vdwg.mxu0
          %v1692 = vmax.f32 %v1684, 0.0
          %v1693 = vmax.f32 %v1686, 0.0
          %v1694 = vmax.f32 %v1688, 0.0
          %v1695 = vmax.f32 %v1690, 0.0
          %v1696 = vpack.c.bf16 %v1694, %v1692
          %v1697 = vpack.c.bf16 %v1695, %v1693
          %v1698 = vld [vmem:[#allocation10] sm:$0xf]
          %v1699 = vld [vmem:[#allocation10 + $0x4] sm:$0xf]
          %v1700 = vld [vmem:[#allocation10 + $0x8] sm:$0xf]
          %v1701 = vld [vmem:[#allocation10 + $0xc] sm:$0xf]
          %v1702 = vld [vmem:[#allocation10 + $0x10] sm:$0xf]
          %v1703 = vld [vmem:[#allocation10 + $0x14] sm:$0xf]
          %v1704 = vld [vmem:[#allocation10 + $0x18] sm:$0xf]
          %v1705 = vld [vmem:[#allocation10 + $0x1c] sm:$0xf]
          %v1706 = vld [vmem:[#allocation10 + $0x20] sm:$0xf]
          %v1707 = vld [vmem:[#allocation10 + $0x24] sm:$0xf]
          %v1708 = vld [vmem:[#allocation10 + $0x28] sm:$0xf]
          %v1709 = vld [vmem:[#allocation10 + $0x2c] sm:$0xf]
          %v1710 = vld [vmem:[#allocation10 + $0x30] sm:$0xf]
          %v1711 = vld [vmem:[#allocation10 + $0x34] sm:$0xf]
          %v1712 = vld [vmem:[#allocation10 + $0x38] sm:$0xf]
          %v1713 = vld [vmem:[#allocation10 + $0x3c] sm:$0xf]
          %v1714 = vld [vmem:[#allocation10 + $0x40] sm:$0xf]
          %v1715 = vld [vmem:[#allocation10 + $0x44] sm:$0xf]
          %v1716 = vld [vmem:[#allocation10 + $0x48] sm:$0xf]
          %v1717 = vld [vmem:[#allocation10 + $0x4c] sm:$0xf]
          %v1718 = vld [vmem:[#allocation10 + $0x50] sm:$0xf]
          %v1719 = vld [vmem:[#allocation10 + $0x54] sm:$0xf]
          %v1720 = vld [vmem:[#allocation10 + $0x58] sm:$0xf]
          %v1721 = vld [vmem:[#allocation10 + $0x5c] sm:$0xf]
          %v1722 = vld [vmem:[#allocation10 + $0x60] sm:$0xf]
          %v1723 = vld [vmem:[#allocation10 + $0x64] sm:$0xf]
          %v1724 = vld [vmem:[#allocation10 + $0x68] sm:$0xf]
          %v1725 = vld [vmem:[#allocation10 + $0x6c] sm:$0xf]
          %v1726 = vld [vmem:[#allocation10 + $0x70] sm:$0xf]
          %v1727 = vld [vmem:[#allocation10 + $0x74] sm:$0xf]
          %v1728 = vld [vmem:[#allocation10 + $0x78] sm:$0xf]
          %v1729 = vld [vmem:[#allocation10 + $0x7c] sm:$0xf]
          %v1730 = vld [vmem:[#allocation11] sm:$0x1]
          %v1732 = vlaneseq
          %v1733 = vshrl.u32 %v1732, 7
          %v1734 = vsub.s32 0, %v1733
          %v1735 = vrot.slane %v1730, %v1734
          %v1769 = vunpack.c.l.b16 %v1698
          %v1770 = vunpack.c.l.b16 %v1699
          %v1771 = vunpack.c.l.b16 %v1700
          %v1772 = vunpack.c.l.b16 %v1701
          %v1773 = vunpack.c.l.b16 %v1702
          %v1774 = vunpack.c.l.b16 %v1703
          %v1775 = vunpack.c.l.b16 %v1704
          %v1776 = vunpack.c.l.b16 %v1705
          %v1777 = vunpack.c.l.b16 %v1706
          %v1778 = vunpack.c.l.b16 %v1707
          %v1779 = vunpack.c.l.b16 %v1708
          %v1780 = vunpack.c.l.b16 %v1709
          %v1781 = vunpack.c.l.b16 %v1710
          %v1782 = vunpack.c.l.b16 %v1711
          %v1783 = vunpack.c.l.b16 %v1712
          %v1784 = vunpack.c.l.b16 %v1713
          %v1785 = vunpack.c.l.b16 %v1714
          %v1786 = vunpack.c.l.b16 %v1715
          %v1787 = vunpack.c.l.b16 %v1716
          %v1788 = vunpack.c.l.b16 %v1717
          %v1789 = vunpack.c.l.b16 %v1718
          %v1790 = vunpack.c.l.b16 %v1719
          %v1791 = vunpack.c.l.b16 %v1720
          %v1792 = vunpack.c.l.b16 %v1721
          %v1793 = vunpack.c.l.b16 %v1722
          %v1794 = vunpack.c.l.b16 %v1723
          %v1795 = vunpack.c.l.b16 %v1724
          %v1796 = vunpack.c.l.b16 %v1725
          %v1797 = vunpack.c.l.b16 %v1726
          %v1798 = vunpack.c.l.b16 %v1727
          %v1799 = vunpack.c.l.b16 %v1728
          %v1800 = vunpack.c.l.b16 %v1729
          %v1801 = vpack.c.b16 %v1770, %v1769
          %v1802 = vpack.c.b16 %v1772, %v1771
          %v1803 = vpack.c.b16 %v1774, %v1773
          %v1804 = vpack.c.b16 %v1776, %v1775
          %v1805 = vpack.c.b16 %v1778, %v1777
          %v1806 = vpack.c.b16 %v1780, %v1779
          %v1807 = vpack.c.b16 %v1782, %v1781
          %v1808 = vpack.c.b16 %v1784, %v1783
          %v1809 = vpack.c.b16 %v1786, %v1785
          %v1810 = vpack.c.b16 %v1788, %v1787
          %v1811 = vpack.c.b16 %v1790, %v1789
          %v1812 = vpack.c.b16 %v1792, %v1791
          %v1813 = vpack.c.b16 %v1794, %v1793
          %v1814 = vpack.c.b16 %v1796, %v1795
          %v1815 = vpack.c.b16 %v1798, %v1797
          %v1816 = vpack.c.b16 %v1800, %v1799
          %1833 = vmatprep.subr.bf16.mxu0 0
          %1834 = vmatpush1.bf16.msra.mxu0 %v1801
          %1835 = vmatprep.subr.bf16.mxu0 0
          %1836 = vmatpush1.bf16.msra.mxu0 %v1802
          %1837 = vmatprep.subr.bf16.mxu0 0
          %1838 = vmatpush1.bf16.msra.mxu0 %v1803
          %1839 = vmatprep.subr.bf16.mxu0 0
          %1840 = vmatpush1.bf16.msra.mxu0 %v1804
          %1841 = vmatprep.subr.bf16.mxu0 0
          %1842 = vmatpush1.bf16.msra.mxu0 %v1805
          %1843 = vmatprep.subr.bf16.mxu0 0
          %1844 = vmatpush1.bf16.msra.mxu0 %v1806
          %1845 = vmatprep.subr.bf16.mxu0 0
          %1846 = vmatpush1.bf16.msra.mxu0 %v1807
          %1847 = vmatprep.subr.bf16.mxu0 0
          %1848 = vmatpush1.bf16.msra.mxu0 %v1808
          %1849 = vmatprep.subr.bf16.mxu0 0
          %1850 = vmatpush1.bf16.msra.mxu0 %v1809
          %1851 = vmatprep.subr.bf16.mxu0 0
          %1852 = vmatpush1.bf16.msra.mxu0 %v1810
          %1853 = vmatprep.subr.bf16.mxu0 0
          %1854 = vmatpush1.bf16.msra.mxu0 %v1811
          %1855 = vmatprep.subr.bf16.mxu0 0
          %1856 = vmatpush1.bf16.msra.mxu0 %v1812
          %1857 = vmatprep.subr.bf16.mxu0 0
          %1858 = vmatpush1.bf16.msra.mxu0 %v1813
          %1859 = vmatprep.subr.bf16.mxu0 0
          %1860 = vmatpush1.bf16.msra.mxu0 %v1814
          %1861 = vmatprep.subr.bf16.mxu0 0
          %1862 = vmatpush1.bf16.msra.mxu0 %v1815
          %1863 = vmatprep.subr.bf16.mxu0 0
          %1864 = vmatpush1.bf16.msra.mxu0 %v1816
          %1865 = vmatprep.mubr.bf16.mxu0 %v1697
          %1866 = vmatmul.mubr.bf16.gmra.mrb[0].mxu0 %v1696
          %v1867 = vpop.f32.mrb[0].mxu0
          %v1868 = vadd.f32 %v1735, %v1867
          %v1869 = vpop.f32.mrb[0].mxu0
          %v1870 = vpop.f32.mrb[0].mxu0
          %v1871 = vadd.f32 %v1735, %v1870
          %v1872 = vpop.f32.mrb[0].mxu0
          %1873 = vdwg.mxu0
          %1874 = vst [vmem:[%s57] sm:$0xff] %v1868
          %1875 = vst [vmem:[%s57 + $0x8] sm:$0xff] %v1871
          %1876 = vst [vmem:[#allocation32] sm:$0xff] 0.0
          %1877 = vst [vmem:[#allocation32 + $0x8] sm:$0xff] 0.0
        $region216: #{empath_model_forward.1} parent=127 // pred_fallthru
          _
        %v1878 = vld [vmem:[#allocation30] sm:$0xff]
        %v1879 = vld [vmem:[#allocation30 + $0x8] sm:$0xff]
        %v1880 = vpack.c.bf16 %v1879, %v1878
        %v1881 = vld [vmem:[%s1190] sm:$0xff]
        %v1882 = vld [vmem:[%s1190 + $0x8] sm:$0xf]
        %v1883 = vld [vmem:[%s1190 + $0xc] sm:$0xff]
        %v1884 = vld [vmem:[%s1190 + $0x14] sm:$0xf]
        %v1885 = vld [vmem:[%s1190 + $0x18] sm:$0xff]
        %v1886 = vld [vmem:[%s1190 + $0x20] sm:$0xf]
        %v1887 = vld [vmem:[%s1190 + $0x24] sm:$0xff]
        %v1888 = vld [vmem:[%s1190 + $0x2c] sm:$0xf]
        %v1889 = vld [vmem:[%s1190 + $0x30] sm:$0xff]
        %v1890 = vld [vmem:[%s1190 + $0x38] sm:$0xf]
        %v1891 = vld [vmem:[%s1190 + $0x3c] sm:$0xff]
        %v1892 = vld [vmem:[%s1190 + $0x44] sm:$0xf]
        %v1893 = vld [vmem:[%s1190 + $0x48] sm:$0xff]
        %v1894 = vld [vmem:[%s1190 + $0x50] sm:$0xf]
        %v1895 = vld [vmem:[%s1190 + $0x54] sm:$0xff]
        %v1896 = vld [vmem:[%s1190 + $0x5c] sm:$0xf]
        %v1897 = vld [vmem:[%s1190 + $0x60] sm:$0xff]
        %v1898 = vld [vmem:[%s1190 + $0x68] sm:$0xf]
        %v1899 = vld [vmem:[%s1190 + $0x6c] sm:$0xff]
        %v1900 = vld [vmem:[%s1190 + $0x74] sm:$0xf]
        %v1901 = vld [vmem:[%s1190 + $0x78] sm:$0xff]
        %v1902 = vld [vmem:[%s1190 + $0x80] sm:$0xf]
        %v1903 = vld [vmem:[%s1190 + $0x84] sm:$0xff]
        %v1904 = vld [vmem:[%s1190 + $0x8c] sm:$0xf]
        %v1905 = vld [vmem:[%s1190 + $0x90] sm:$0xff]
        %v1906 = vld [vmem:[%s1190 + $0x98] sm:$0xf]
        %v1907 = vld [vmem:[%s1190 + $0x9c] sm:$0xff]
        %v1908 = vld [vmem:[%s1190 + $0xa4] sm:$0xf]
        %v1909 = vld [vmem:[%s1190 + $0xa8] sm:$0xff]
        %v1910 = vld [vmem:[%s1190 + $0xb0] sm:$0xf]
        %v1911 = vld [vmem:[%s1190 + $0xb4] sm:$0xff]
        %v1912 = vld [vmem:[%s1190 + $0xbc] sm:$0xf]
        %v1913 = vld [vmem:[%s1199] sm:$0x7]
        %v1915 = vlaneseq
        %v1916 = vshrl.u32 %v1915, 7
        %v1917 = vsub.s32 0, %v1916
        %v1918 = vrot.slane %v1913, %v1917
        %v1919 = vlaneseq
        %v1920 = vshrl.u32 %v1919, 7
        %v1921 = vsub.s32 1, %v1920
        %v1922 = vrot.slane %v1913, %v1921
        %v1923 = vlaneseq
        %v1924 = vshrl.u32 %v1923, 7
        %v1925 = vsub.s32 2, %v1924
        %v1926 = vrot.slane %v1913, %v1925
        %v1962 = vunpack.c.l.b16 %v1881
        %v1963 = vunpack.c.h.b16 %v1881
        %v1964 = vunpack.c.l.b16 %v1882
        %v1965 = vunpack.c.l.b16 %v1883
        %v1966 = vunpack.c.h.b16 %v1883
        %v1967 = vunpack.c.l.b16 %v1884
        %v1968 = vunpack.c.l.b16 %v1885
        %v1969 = vunpack.c.h.b16 %v1885
        %v1970 = vunpack.c.l.b16 %v1886
        %v1971 = vunpack.c.l.b16 %v1887
        %v1972 = vunpack.c.h.b16 %v1887
        %v1973 = vunpack.c.l.b16 %v1888
        %v1974 = vunpack.c.l.b16 %v1889
        %v1975 = vunpack.c.h.b16 %v1889
        %v1976 = vunpack.c.l.b16 %v1890
        %v1977 = vunpack.c.l.b16 %v1891
        %v1978 = vunpack.c.h.b16 %v1891
        %v1979 = vunpack.c.l.b16 %v1892
        %v1980 = vunpack.c.l.b16 %v1893
        %v1981 = vunpack.c.h.b16 %v1893
        %v1982 = vunpack.c.l.b16 %v1894
        %v1983 = vunpack.c.l.b16 %v1895
        %v1984 = vunpack.c.h.b16 %v1895
        %v1985 = vunpack.c.l.b16 %v1896
        %v1986 = vunpack.c.l.b16 %v1897
        %v1987 = vunpack.c.h.b16 %v1897
        %v1988 = vunpack.c.l.b16 %v1898
        %v1989 = vunpack.c.l.b16 %v1899
        %v1990 = vunpack.c.h.b16 %v1899
        %v1991 = vunpack.c.l.b16 %v1900
        %v1992 = vunpack.c.l.b16 %v1901
        %v1993 = vunpack.c.h.b16 %v1901
        %v1994 = vunpack.c.l.b16 %v1902
        %v1995 = vunpack.c.l.b16 %v1903
        %v1996 = vunpack.c.h.b16 %v1903
        %v1997 = vunpack.c.l.b16 %v1904
        %v1998 = vunpack.c.l.b16 %v1905
        %v1999 = vunpack.c.h.b16 %v1905
        %v2000 = vunpack.c.l.b16 %v1906
        %v2001 = vunpack.c.l.b16 %v1907
        %v2002 = vunpack.c.h.b16 %v1907
        %v2003 = vunpack.c.l.b16 %v1908
        %v2004 = vunpack.c.l.b16 %v1909
        %v2005 = vunpack.c.h.b16 %v1909
        %v2006 = vunpack.c.l.b16 %v1910
        %v2007 = vunpack.c.l.b16 %v1911
        %v2008 = vunpack.c.h.b16 %v1911
        %v2009 = vunpack.c.l.b16 %v1912
        %v2010 = vpack.c.b16 %v1965, %v1962
        %v2011 = vpack.c.b16 %v1966, %v1963
        %v2012 = vpack.c.b16 %v1967, %v1964
        %v2013 = vpack.c.b16 %v1971, %v1968
        %v2014 = vpack.c.b16 %v1972, %v1969
        %v2015 = vpack.c.b16 %v1973, %v1970
        %v2016 = vpack.c.b16 %v1977, %v1974
        %v2017 = vpack.c.b16 %v1978, %v1975
        %v2018 = vpack.c.b16 %v1979, %v1976
        %v2019 = vpack.c.b16 %v1983, %v1980
        %v2020 = vpack.c.b16 %v1984, %v1981
        %v2021 = vpack.c.b16 %v1985, %v1982
        %v2022 = vpack.c.b16 %v1989, %v1986
        %v2023 = vpack.c.b16 %v1990, %v1987
        %v2024 = vpack.c.b16 %v1991, %v1988
        %v2025 = vpack.c.b16 %v1995, %v1992
        %v2026 = vpack.c.b16 %v1996, %v1993
        %v2027 = vpack.c.b16 %v1997, %v1994
        %v2028 = vpack.c.b16 %v2001, %v1998
        %v2029 = vpack.c.b16 %v2002, %v1999
        %v2030 = vpack.c.b16 %v2003, %v2000
        %v2031 = vpack.c.b16 %v2007, %v2004
        %v2032 = vpack.c.b16 %v2008, %v2005
        %v2033 = vpack.c.b16 %v2009, %v2006
        %2058 = vmatprep.subr.bf16.mxu0 %v2011
        %2059 = vmatpush1.bf16.msra.mxu0 %v2010
        %2060 = vmatprep.subr.bf16.mxu0 %v2014
        %2061 = vmatpush1.bf16.msra.mxu0 %v2013
        %2062 = vmatprep.subr.bf16.mxu0 %v2017
        %2063 = vmatpush1.bf16.msra.mxu0 %v2016
        %2064 = vmatprep.subr.bf16.mxu0 %v2020
        %2065 = vmatpush1.bf16.msra.mxu0 %v2019
        %2066 = vmatprep.subr.bf16.mxu0 %v2023
        %2067 = vmatpush1.bf16.msra.mxu0 %v2022
        %2068 = vmatprep.subr.bf16.mxu0 %v2026
        %2069 = vmatpush1.bf16.msra.mxu0 %v2025
        %2070 = vmatprep.subr.bf16.mxu0 %v2029
        %2071 = vmatpush1.bf16.msra.mxu0 %v2028
        %2072 = vmatprep.subr.bf16.mxu0 %v2032
        %2073 = vmatpush1.bf16.msra.mxu0 %v2031
        %2074 = vmatprep.subr.bf16.mxu0 0
        %2075 = vmatpush1.bf16.msra.mxu0 0
        %2076 = vmatprep.subr.bf16.mxu0 0
        %2077 = vmatpush1.bf16.msra.mxu0 0
        %2078 = vmatprep.subr.bf16.mxu0 0
        %2079 = vmatpush1.bf16.msra.mxu0 0
        %2080 = vmatprep.subr.bf16.mxu0 0
        %2081 = vmatpush1.bf16.msra.mxu0 0
        %2082 = vmatprep.subr.bf16.mxu0 0
        %2083 = vmatpush1.bf16.msra.mxu0 0
        %2084 = vmatprep.subr.bf16.mxu0 0
        %2085 = vmatpush1.bf16.msra.mxu0 0
        %2086 = vmatprep.subr.bf16.mxu0 0
        %2087 = vmatpush1.bf16.msra.mxu0 0
        %2088 = vmatprep.subr.bf16.mxu0 0
        %2089 = vmatpush1.bf16.msra.mxu0 0
        %2090 = vmatprep.mubr.bf16.mxu0 0
        %2091 = vmatmul.mubr.bf16.gmra.mrb[0].mxu0 %v1880
        %v2092 = vpop.f32.mrb[0].mxu0
        %v2093 = vadd.f32 %v1918, %v2092
        %v2094 = vpop.f32.mrb[0].mxu0
        %v2095 = vadd.f32 %v1922, %v2094
        %v2096 = vpop.f32.mrb[0].mxu0
        %v2097 = vadd.f32 %v1918, %v2096
        %v2098 = vpop.f32.mrb[0].mxu0
        %v2099 = vadd.f32 %v1922, %v2098
        %2100 = vdwg.mxu0
        %2101 = vmatprep.subr.bf16.mxu0 0
        %2102 = vmatpush1.bf16.msra.mxu0 %v2012
        %2103 = vmatprep.subr.bf16.mxu0 0
        %2104 = vmatpush1.bf16.msra.mxu0 %v2015
        %2105 = vmatprep.subr.bf16.mxu0 0
        %2106 = vmatpush1.bf16.msra.mxu0 %v2018
        %2107 = vmatprep.subr.bf16.mxu0 0
        %2108 = vmatpush1.bf16.msra.mxu0 %v2021
        %2109 = vmatprep.subr.bf16.mxu0 0
        %2110 = vmatpush1.bf16.msra.mxu0 %v2024
        %2111 = vmatprep.subr.bf16.mxu0 0
        %2112 = vmatpush1.bf16.msra.mxu0 %v2027
        %2113 = vmatprep.subr.bf16.mxu0 0
        %2114 = vmatpush1.bf16.msra.mxu0 %v2030
        %2115 = vmatprep.subr.bf16.mxu0 0
        %2116 = vmatpush1.bf16.msra.mxu0 %v2033
        %2117 = vmatprep.subr.bf16.mxu0 0
        %2118 = vmatpush1.bf16.msra.mxu0 0
        %2119 = vmatprep.subr.bf16.mxu0 0
        %2120 = vmatpush1.bf16.msra.mxu0 0
        %2121 = vmatprep.subr.bf16.mxu0 0
        %2122 = vmatpush1.bf16.msra.mxu0 0
        %2123 = vmatprep.subr.bf16.mxu0 0
        %2124 = vmatpush1.bf16.msra.mxu0 0
        %2125 = vmatprep.subr.bf16.mxu0 0
        %2126 = vmatpush1.bf16.msra.mxu0 0
        %2127 = vmatprep.subr.bf16.mxu0 0
        %2128 = vmatpush1.bf16.msra.mxu0 0
        %2129 = vmatprep.subr.bf16.mxu0 0
        %2130 = vmatpush1.bf16.msra.mxu0 0
        %2131 = vmatprep.subr.bf16.mxu0 0
        %2132 = vmatpush1.bf16.msra.mxu0 0
        %2133 = vmatprep.mubr.bf16.mxu0 0
        %2134 = vmatmul.mubr.bf16.gmra.mrb[0].mxu0 %v1880
        %v2135 = vpop.f32.mrb[0].mxu0
        %v2136 = vadd.f32 %v1926, %v2135
        %v2137 = vpop.f32.mrb[0].mxu0
        %v2138 = vpop.f32.mrb[0].mxu0
        %v2139 = vadd.f32 %v1926, %v2138
        %v2140 = vpop.f32.mrb[0].mxu0
        %2141 = vdwg.mxu0
        %v2142 = vmul.f32 %v2093, 0.25
        %v2143 = vmul.f32 %v2097, 0.25
        %v2144 = vld [vmem:[%s5] sm:$0xff]
        %v2145 = vld [vmem:[%s5 + $0x8] sm:$0xff]
        %v2146 = vld [vmem:[%s5 + $0x10] sm:$0xff]
        %v2147 = vld [vmem:[%s5 + $0x18] sm:$0xff]
        %v2148 = vld [vmem:[%s5 + $0x20] sm:$0xff]
        %v2149 = vld [vmem:[%s5 + $0x28] sm:$0xff]
        %v2150 = vld [vmem:[%s5 + $0x30] sm:$0xff]
        %v2151 = vld [vmem:[%s5 + $0x38] sm:$0xff]
        %v2152 = vld [vmem:[%s5 + $0x40] sm:$0xff]
        %v2153 = vld [vmem:[%s5 + $0x48] sm:$0xff]
        %v2154 = vld [vmem:[%s5 + $0x50] sm:$0xff]
        %v2155 = vld [vmem:[%s5 + $0x58] sm:$0xff]
        %v2156 = vld [vmem:[%s5 + $0x60] sm:$0xff]
        %v2157 = vld [vmem:[%s5 + $0x68] sm:$0xff]
        %v2158 = vld [vmem:[%s5 + $0x70] sm:$0xff]
        %v2159 = vld [vmem:[%s5 + $0x78] sm:$0xff]
        %v2160 = vld [vmem:[%s3] sm:$0xf]
        %v2161 = vld [vmem:[%s3 + $0x4] sm:$0xf]
        %v2162 = vld [vmem:[%s3 + $0x8] sm:$0xf]
        %v2163 = vld [vmem:[%s3 + $0xc] sm:$0xf]
        %v2164 = vld [vmem:[%s3 + $0x10] sm:$0xf]
        %v2165 = vld [vmem:[%s3 + $0x14] sm:$0xf]
        %v2166 = vld [vmem:[%s3 + $0x18] sm:$0xf]
        %v2167 = vld [vmem:[%s3 + $0x1c] sm:$0xf]
        %v2168 = vld [vmem:[%s3 + $0x20] sm:$0xf]
        %v2169 = vld [vmem:[%s3 + $0x24] sm:$0xf]
        %v2170 = vld [vmem:[%s3 + $0x28] sm:$0xf]
        %v2171 = vld [vmem:[%s3 + $0x2c] sm:$0xf]
        %v2172 = vld [vmem:[%s3 + $0x30] sm:$0xf]
        %v2173 = vld [vmem:[%s3 + $0x34] sm:$0xf]
        %v2174 = vld [vmem:[%s3 + $0x38] sm:$0xf]
        %v2175 = vld [vmem:[%s3 + $0x3c] sm:$0xf]
        %v2176 = vpack.c.bf16 %v2099, %v2095
        %v2193 = vunpack.c.l.b16 %v2160
        %v2194 = vunpack.c.l.b16 %v2161
        %v2195 = vunpack.c.l.b16 %v2162
        %v2196 = vunpack.c.l.b16 %v2163
        %v2197 = vunpack.c.l.b16 %v2164
        %v2198 = vunpack.c.l.b16 %v2165
        %v2199 = vunpack.c.l.b16 %v2166
        %v2200 = vunpack.c.l.b16 %v2167
        %v2201 = vunpack.c.l.b16 %v2168
        %v2202 = vunpack.c.l.b16 %v2169
        %v2203 = vunpack.c.l.b16 %v2170
        %v2204 = vunpack.c.l.b16 %v2171
        %v2205 = vunpack.c.l.b16 %v2172
        %v2206 = vunpack.c.l.b16 %v2173
        %v2207 = vunpack.c.l.b16 %v2174
        %v2208 = vunpack.c.l.b16 %v2175
        %v2209 = vpack.c.b16 %v2194, %v2193
        %v2210 = vpack.c.b16 %v2196, %v2195
        %v2211 = vpack.c.b16 %v2198, %v2197
        %v2212 = vpack.c.b16 %v2200, %v2199
        %v2213 = vpack.c.b16 %v2202, %v2201
        %v2214 = vpack.c.b16 %v2204, %v2203
        %v2215 = vpack.c.b16 %v2206, %v2205
        %v2216 = vpack.c.b16 %v2208, %v2207
        %vm2217 = vcmask 130048
        %v2219 = vsel %vm2217, %v2209, 0
        %v2222 = vsel %vm2217, %v2210, 0
        %v2225 = vsel %vm2217, %v2211, 0
        %v2228 = vsel %vm2217, %v2212, 0
        %v2231 = vsel %vm2217, %v2213, 0
        %v2234 = vsel %vm2217, %v2214, 0
        %v2237 = vsel %vm2217, %v2215, 0
        %v2240 = vsel %vm2217, %v2216, 0
        %2242 = vmatprep.subr.bf16.mxu0 0
        %2243 = vmatpush1.bf16.msra.mxu0 %v2176
        %2244 = vmatprep.subr.bf16.mxu0 0
        %2245 = vmatpush1.bf16.msra.mxu0 0
        %2246 = vmatprep.subr.bf16.mxu0 0
        %2247 = vmatpush1.bf16.msra.mxu0 0
        %2248 = vmatprep.subr.bf16.mxu0 0
        %2249 = vmatpush1.bf16.msra.mxu0 0
        %2250 = vmatprep.subr.bf16.mxu0 0
        %2251 = vmatpush1.bf16.msra.mxu0 0
        %2252 = vmatprep.subr.bf16.mxu0 0
        %2253 = vmatpush1.bf16.msra.mxu0 0
        %2254 = vmatprep.subr.bf16.mxu0 0
        %2255 = vmatpush1.bf16.msra.mxu0 0
        %2256 = vmatprep.subr.bf16.mxu0 0
        %2257 = vmatpush1.bf16.msra.mxu0 0
        %2258 = vmatprep.subr.bf16.mxu0 0
        %2259 = vmatpush1.bf16.msra.mxu0 0
        %2260 = vmatprep.subr.bf16.mxu0 0
        %2261 = vmatpush1.bf16.msra.mxu0 0
        %2262 = vmatprep.subr.bf16.mxu0 0
        %2263 = vmatpush1.bf16.msra.mxu0 0
        %2264 = vmatprep.subr.bf16.mxu0 0
        %2265 = vmatpush1.bf16.msra.mxu0 0
        %2266 = vmatprep.subr.bf16.mxu0 0
        %2267 = vmatpush1.bf16.msra.mxu0 0
        %2268 = vmatprep.subr.bf16.mxu0 0
        %2269 = vmatpush1.bf16.msra.mxu0 0
        %2270 = vmatprep.subr.bf16.mxu0 0
        %2271 = vmatpush1.bf16.msra.mxu0 0
        %2272 = vmatprep.subr.bf16.mxu0 0
        %2273 = vmatpush1.bf16.msra.mxu0 0
        %2274 = vmatprep.mubr.bf16.mxu0 0
        %2275 = vmatmul.mubr.bf16.gmra.mrb[0].mxu0 %v2219
        %v2276 = vpop.f32.mrb[0].mxu0
        %v2277 = vadd.f32 0.0, %v2276
        %v2278 = vpop.f32.mrb[0].mxu0
        %v2279 = vpop.f32.mrb[0].mxu0
        %v2280 = vadd.f32 0.0, %v2279
        %v2281 = vpop.f32.mrb[0].mxu0
        %2282 = vmatprep.mubr.bf16.mxu0 0
        %2283 = vmatmul.mubr.bf16.gmra.mrb[0].mxu0 %v2222
        %v2284 = vpop.f32.mrb[0].mxu0
        %v2285 = vadd.f32 0.0, %v2284
        %v2286 = vpop.f32.mrb[0].mxu0
        %v2287 = vpop.f32.mrb[0].mxu0
        %v2288 = vadd.f32 0.0, %v2287
        %v2289 = vpop.f32.mrb[0].mxu0
        %2290 = vmatprep.mubr.bf16.mxu0 0
        %2291 = vmatmul.mubr.bf16.gmra.mrb[0].mxu0 %v2225
        %v2292 = vpop.f32.mrb[0].mxu0
        %v2293 = vadd.f32 0.0, %v2292
        %v2294 = vpop.f32.mrb[0].mxu0
        %v2295 = vpop.f32.mrb[0].mxu0
        %v2296 = vadd.f32 0.0, %v2295
        %v2297 = vpop.f32.mrb[0].mxu0
        %2298 = vmatprep.mubr.bf16.mxu0 0
        %2299 = vmatmul.mubr.bf16.gmra.mrb[0].mxu0 %v2228
        %v2300 = vpop.f32.mrb[0].mxu0
        %v2301 = vadd.f32 0.0, %v2300
        %v2302 = vpop.f32.mrb[0].mxu0
        %v2303 = vpop.f32.mrb[0].mxu0
        %v2304 = vadd.f32 0.0, %v2303
        %v2305 = vpop.f32.mrb[0].mxu0
        %2306 = vmatprep.mubr.bf16.mxu0 0
        %2307 = vmatmul.mubr.bf16.gmra.mrb[0].mxu0 %v2231
        %v2308 = vpop.f32.mrb[0].mxu0
        %v2309 = vadd.f32 0.0, %v2308
        %v2310 = vpop.f32.mrb[0].mxu0
        %v2311 = vpop.f32.mrb[0].mxu0
        %v2312 = vadd.f32 0.0, %v2311
        %v2313 = vpop.f32.mrb[0].mxu0
        %2314 = vmatprep.mubr.bf16.mxu0 0
        %2315 = vmatmul.mubr.bf16.gmra.mrb[0].mxu0 %v2234
        %v2316 = vpop.f32.mrb[0].mxu0
        %v2317 = vadd.f32 0.0, %v2316
        %v2318 = vpop.f32.mrb[0].mxu0
        %v2319 = vpop.f32.mrb[0].mxu0
        %v2320 = vadd.f32 0.0, %v2319
        %v2321 = vpop.f32.mrb[0].mxu0
        %2322 = vmatprep.mubr.bf16.mxu0 0
        %2323 = vmatmul.mubr.bf16.gmra.mrb[0].mxu0 %v2237
        %v2324 = vpop.f32.mrb[0].mxu0
        %v2325 = vadd.f32 0.0, %v2324
        %v2326 = vpop.f32.mrb[0].mxu0
        %v2327 = vpop.f32.mrb[0].mxu0
        %v2328 = vadd.f32 0.0, %v2327
        %v2329 = vpop.f32.mrb[0].mxu0
        %2330 = vmatprep.mubr.bf16.mxu0 0
        %2331 = vmatmul.mubr.bf16.gmra.mrb[0].mxu0 %v2240
        %v2332 = vpop.f32.mrb[0].mxu0
        %v2333 = vadd.f32 0.0, %v2332
        %v2334 = vpop.f32.mrb[0].mxu0
        %v2335 = vpop.f32.mrb[0].mxu0
        %v2336 = vadd.f32 0.0, %v2335
        %v2337 = vpop.f32.mrb[0].mxu0
        %2338 = vdwg.mxu0
        %v2339 = vpack.c.bf16 %v2139, %v2136
        %2340 = vmatprep.subr.bf16.mxu0 0
        %2341 = vmatpush1.bf16.msra.mxu0 %v2339
        %2342 = vmatprep.subr.bf16.mxu0 0
        %2343 = vmatpush1.bf16.msra.mxu0 0
        %2344 = vmatprep.subr.bf16.mxu0 0
        %2345 = vmatpush1.bf16.msra.mxu0 0
        %2346 = vmatprep.subr.bf16.mxu0 0
        %2347 = vmatpush1.bf16.msra.mxu0 0
        %2348 = vmatprep.subr.bf16.mxu0 0
        %2349 = vmatpush1.bf16.msra.mxu0 0
        %2350 = vmatprep.subr.bf16.mxu0 0
        %2351 = vmatpush1.bf16.msra.mxu0 0
        %2352 = vmatprep.subr.bf16.mxu0 0
        %2353 = vmatpush1.bf16.msra.mxu0 0
        %2354 = vmatprep.subr.bf16.mxu0 0
        %2355 = vmatpush1.bf16.msra.mxu0 0
        %2356 = vmatprep.subr.bf16.mxu0 0
        %2357 = vmatpush1.bf16.msra.mxu0 0
        %2358 = vmatprep.subr.bf16.mxu0 0
        %2359 = vmatpush1.bf16.msra.mxu0 0
        %2360 = vmatprep.subr.bf16.mxu0 0
        %2361 = vmatpush1.bf16.msra.mxu0 0
        %2362 = vmatprep.subr.bf16.mxu0 0
        %2363 = vmatpush1.bf16.msra.mxu0 0
        %2364 = vmatprep.subr.bf16.mxu0 0
        %2365 = vmatpush1.bf16.msra.mxu0 0
        %2366 = vmatprep.subr.bf16.mxu0 0
        %2367 = vmatpush1.bf16.msra.mxu0 0
        %2368 = vmatprep.subr.bf16.mxu0 0
        %2369 = vmatpush1.bf16.msra.mxu0 0
        %2370 = vmatprep.subr.bf16.mxu0 0
        %2371 = vmatpush1.bf16.msra.mxu0 0
        %2372 = vmatprep.mubr.bf16.mxu0 0
        %2373 = vmatmul.mubr.bf16.gmra.mrb[0].mxu0 %v2219
        %v2374 = vpop.f32.mrb[0].mxu0
        %v2375 = vadd.f32 0.0, %v2374
        %v2376 = vpop.f32.mrb[0].mxu0
        %v2377 = vpop.f32.mrb[0].mxu0
        %v2378 = vadd.f32 0.0, %v2377
        %v2379 = vpop.f32.mrb[0].mxu0
        %2380 = vmatprep.mubr.bf16.mxu0 0
        %2381 = vmatmul.mubr.bf16.gmra.mrb[0].mxu0 %v2222
        %v2382 = vpop.f32.mrb[0].mxu0
        %v2383 = vadd.f32 0.0, %v2382
        %v2384 = vpop.f32.mrb[0].mxu0
        %v2385 = vpop.f32.mrb[0].mxu0
        %v2386 = vadd.f32 0.0, %v2385
        %v2387 = vpop.f32.mrb[0].mxu0
        %2388 = vmatprep.mubr.bf16.mxu0 0
        %2389 = vmatmul.mubr.bf16.gmra.mrb[0].mxu0 %v2225
        %v2390 = vpop.f32.mrb[0].mxu0
        %v2391 = vadd.f32 0.0, %v2390
        %v2392 = vpop.f32.mrb[0].mxu0
        %v2393 = vpop.f32.mrb[0].mxu0
        %v2394 = vadd.f32 0.0, %v2393
        %v2395 = vpop.f32.mrb[0].mxu0
        %2396 = vmatprep.mubr.bf16.mxu0 0
        %2397 = vmatmul.mubr.bf16.gmra.mrb[0].mxu0 %v2228
        %v2398 = vpop.f32.mrb[0].mxu0
        %v2399 = vadd.f32 0.0, %v2398
        %v2400 = vpop.f32.mrb[0].mxu0
        %v2401 = vpop.f32.mrb[0].mxu0
        %v2402 = vadd.f32 0.0, %v2401
        %v2403 = vpop.f32.mrb[0].mxu0
        %2404 = vmatprep.mubr.bf16.mxu0 0
        %2405 = vmatmul.mubr.bf16.gmra.mrb[0].mxu0 %v2231
        %v2406 = vpop.f32.mrb[0].mxu0
        %v2407 = vadd.f32 0.0, %v2406
        %v2408 = vpop.f32.mrb[0].mxu0
        %v2409 = vpop.f32.mrb[0].mxu0
        %v2410 = vadd.f32 0.0, %v2409
        %v2411 = vpop.f32.mrb[0].mxu0
        %2412 = vmatprep.mubr.bf16.mxu0 0
        %2413 = vmatmul.mubr.bf16.gmra.mrb[0].mxu0 %v2234
        %v2414 = vpop.f32.mrb[0].mxu0
        %v2415 = vadd.f32 0.0, %v2414
        %v2416 = vpop.f32.mrb[0].mxu0
        %v2417 = vpop.f32.mrb[0].mxu0
        %v2418 = vadd.f32 0.0, %v2417
        %v2419 = vpop.f32.mrb[0].mxu0
        %2420 = vmatprep.mubr.bf16.mxu0 0
        %2421 = vmatmul.mubr.bf16.gmra.mrb[0].mxu0 %v2237
        %v2422 = vpop.f32.mrb[0].mxu0
        %v2423 = vadd.f32 0.0, %v2422
        %v2424 = vpop.f32.mrb[0].mxu0
        %v2425 = vpop.f32.mrb[0].mxu0
        %v2426 = vadd.f32 0.0, %v2425
        %v2427 = vpop.f32.mrb[0].mxu0
        %2428 = vmatprep.mubr.bf16.mxu0 0
        %2429 = vmatmul.mubr.bf16.gmra.mrb[0].mxu0 %v2240
        %v2430 = vpop.f32.mrb[0].mxu0
        %v2431 = vadd.f32 0.0, %v2430
        %v2432 = vpop.f32.mrb[0].mxu0
        %v2433 = vpop.f32.mrb[0].mxu0
        %v2434 = vadd.f32 0.0, %v2433
        %v2435 = vpop.f32.mrb[0].mxu0
        %2436 = vdwg.mxu0
        %v2437 = vmul.f32 %v2277, %v2144
        %v2438 = vmul.f32 %v2280, %v2145
        %v2439 = vmul.f32 %v2285, %v2146
        %v2440 = vmul.f32 %v2288, %v2147
        %v2441 = vmul.f32 %v2293, %v2148
        %v2442 = vmul.f32 %v2296, %v2149
        %v2443 = vmul.f32 %v2301, %v2150
        %v2444 = vmul.f32 %v2304, %v2151
        %v2445 = vmul.f32 %v2309, %v2152
        %v2446 = vmul.f32 %v2312, %v2153
        %v2447 = vmul.f32 %v2317, %v2154
        %v2448 = vmul.f32 %v2320, %v2155
        %v2449 = vmul.f32 %v2325, %v2156
        %v2450 = vmul.f32 %v2328, %v2157
        %v2451 = vmul.f32 %v2333, %v2158
        %v2452 = vmul.f32 %v2336, %v2159
        %v2453 = vpack.c.bf16 %v2438, %v2437
        %v2454 = vpack.c.bf16 %v2440, %v2439
        %v2455 = vpack.c.bf16 %v2442, %v2441
        %v2456 = vpack.c.bf16 %v2444, %v2443
        %v2457 = vpack.c.bf16 %v2446, %v2445
        %v2458 = vpack.c.bf16 %v2448, %v2447
        %v2459 = vpack.c.bf16 %v2450, %v2449
        %v2460 = vpack.c.bf16 %v2452, %v2451
        %v2461 = vmul.f32 %v2375, %v2144
        %v2462 = vmul.f32 %v2378, %v2145
        %v2463 = vmul.f32 %v2383, %v2146
        %v2464 = vmul.f32 %v2386, %v2147
        %v2465 = vmul.f32 %v2391, %v2148
        %v2466 = vmul.f32 %v2394, %v2149
        %v2467 = vmul.f32 %v2399, %v2150
        %v2468 = vmul.f32 %v2402, %v2151
        %v2469 = vmul.f32 %v2407, %v2152
        %v2470 = vmul.f32 %v2410, %v2153
        %v2471 = vmul.f32 %v2415, %v2154
        %v2472 = vmul.f32 %v2418, %v2155
        %v2473 = vmul.f32 %v2423, %v2156
        %v2474 = vmul.f32 %v2426, %v2157
        %v2475 = vmul.f32 %v2431, %v2158
        %v2476 = vmul.f32 %v2434, %v2159
        %v2477 = vpack.c.bf16 %v2462, %v2461
        %v2478 = vpack.c.bf16 %v2464, %v2463
        %v2479 = vpack.c.bf16 %v2466, %v2465
        %v2480 = vpack.c.bf16 %v2468, %v2467
        %v2481 = vpack.c.bf16 %v2470, %v2469
        %v2482 = vpack.c.bf16 %v2472, %v2471
        %v2483 = vpack.c.bf16 %v2474, %v2473
        %v2484 = vpack.c.bf16 %v2476, %v2475
        %v2485 = vpack.c.bf16 %v2143, %v2142
        %v2486 = vld [vmem:[%s7] sm:$0xff]
        %v2487 = vld [vmem:[%s7 + $0x8] sm:$0xff]
        %2488 = vmatprep.subr.bf16.mxu0 0
        %2489 = vmatpush1.bf16.xpose.msra.mxu0 %v2453
        %2490 = vmatprep.subr.bf16.mxu0 0
        %2491 = vmatpush1.bf16.xpose.msra.mxu0 %v2454
        %2492 = vmatprep.subr.bf16.mxu0 0
        %2493 = vmatpush1.bf16.xpose.msra.mxu0 %v2455
        %2494 = vmatprep.subr.bf16.mxu0 0
        %2495 = vmatpush1.bf16.xpose.msra.mxu0 %v2456
        %2496 = vmatprep.subr.bf16.mxu0 0
        %2497 = vmatpush1.bf16.xpose.msra.mxu0 %v2457
        %2498 = vmatprep.subr.bf16.mxu0 0
        %2499 = vmatpush1.bf16.xpose.msra.mxu0 %v2458
        %2500 = vmatprep.subr.bf16.mxu0 0
        %2501 = vmatpush1.bf16.xpose.msra.mxu0 %v2459
        %2502 = vmatprep.subr.bf16.mxu0 0
        %2503 = vmatpush1.bf16.xpose.msra.mxu0 %v2460
        %2504 = vmatprep.subr.bf16.mxu0 0
        %2505 = vmatpush1.bf16.xpose.msra.mxu0 0
        %2506 = vmatprep.subr.bf16.mxu0 0
        %2507 = vmatpush1.bf16.xpose.msra.mxu0 0
        %2508 = vmatprep.subr.bf16.mxu0 0
        %2509 = vmatpush1.bf16.xpose.msra.mxu0 0
        %2510 = vmatprep.subr.bf16.mxu0 0
        %2511 = vmatpush1.bf16.xpose.msra.mxu0 0
        %2512 = vmatprep.subr.bf16.mxu0 0
        %2513 = vmatpush1.bf16.xpose.msra.mxu0 0
        %2514 = vmatprep.subr.bf16.mxu0 0
        %2515 = vmatpush1.bf16.xpose.msra.mxu0 0
        %2516 = vmatprep.subr.bf16.mxu0 0
        %2517 = vmatpush1.bf16.xpose.msra.mxu0 0
        %2518 = vmatprep.subr.bf16.mxu0 0
        %2519 = vmatpush1.bf16.xpose.msra.mxu0 0
        %2520 = vmatprep.mubr.bf16.mxu0 0
        %2521 = vmatmul.mubr.bf16.gmra.mrb[0].mxu0 %v2485
        %v2522 = vpop.f32.mrb[0].mxu0
        %v2523 = vadd.f32 %v2486, %v2522
        %v2524 = vpop.f32.mrb[0].mxu0
        %v2525 = vpop.f32.mrb[0].mxu0
        %v2526 = vadd.f32 %v2487, %v2525
        %v2527 = vpop.f32.mrb[0].mxu0
        %2528 = vdwg.mxu0
        %2529 = vmax.xlane.f32.xlu0 %v2523
        %v2530 = vpop.xlane.xlu0 %2529
        %2531 = vmax.xlane.f32.xlu0 %v2526
        %v2532 = vpop.xlane.xlu0 %2531
        %v2533 = vsub.f32 %v2523, %v2530
        %v2534 = vsub.f32 %v2526, %v2532
        %v2535 = vmul.f32 %v2533, 1.442695
        %v2536 = vpow.pop %v2535
        %v2537 = vmul.f32 %v2534, 1.442695
        %v2538 = vpow.pop %v2537
        %v2539 = vld [vmem:[#allocation2] sm:$0xff]
        %v2540 = vld [vmem:[#allocation2 + $0x8] sm:$0xff]
        %v2541 = vld [vmem:[#allocation2 + $0x10] sm:$0xff]
        %v2542 = vld [vmem:[#allocation2 + $0x18] sm:$0xff]
        %v2543 = vld [vmem:[#allocation2 + $0x20] sm:$0xff]
        %v2544 = vld [vmem:[#allocation2 + $0x28] sm:$0xff]
        %v2545 = vld [vmem:[#allocation2 + $0x30] sm:$0xff]
        %v2546 = vld [vmem:[#allocation2 + $0x38] sm:$0xff]
        %v2547 = vld [vmem:[#allocation2 + $0x40] sm:$0xff]
        %v2548 = vld [vmem:[#allocation2 + $0x48] sm:$0xff]
        %v2549 = vld [vmem:[#allocation2 + $0x50] sm:$0xff]
        %v2550 = vld [vmem:[#allocation2 + $0x58] sm:$0xff]
        %v2551 = vld [vmem:[#allocation2 + $0x60] sm:$0xff]
        %v2552 = vld [vmem:[#allocation2 + $0x68] sm:$0xff]
        %v2553 = vld [vmem:[#allocation2 + $0x70] sm:$0xff]
        %v2554 = vld [vmem:[#allocation2 + $0x78] sm:$0xff]
        %2555 = vmatprep.subr.mxu0 0.0
        %2556 = vmatpush1.msra.mxu0 %v2539
        %2557 = vmatprep.subr.mxu0 0.0
        %2558 = vmatpush1.msra.mxu0 %v2540
        %2559 = vmatprep.subr.mxu0 0.0
        %2560 = vmatpush1.msra.mxu0 %v2541
        %2561 = vmatprep.subr.mxu0 0.0
        %2562 = vmatpush1.msra.mxu0 %v2542
        %2563 = vmatprep.subr.mxu0 0.0
        %2564 = vmatpush1.msra.mxu0 %v2543
        %2565 = vmatprep.subr.mxu0 0.0
        %2566 = vmatpush1.msra.mxu0 %v2544
        %2567 = vmatprep.subr.mxu0 0.0
        %2568 = vmatpush1.msra.mxu0 %v2545
        %2569 = vmatprep.subr.mxu0 0.0
        %2570 = vmatpush1.msra.mxu0 %v2546
        %2571 = vmatprep.subr.mxu0 0.0
        %2572 = vmatpush1.msra.mxu0 %v2547
        %2573 = vmatprep.subr.mxu0 0.0
        %2574 = vmatpush1.msra.mxu0 %v2548
        %2575 = vmatprep.subr.mxu0 0.0
        %2576 = vmatpush1.msra.mxu0 %v2549
        %2577 = vmatprep.subr.mxu0 0.0
        %2578 = vmatpush1.msra.mxu0 %v2550
        %2579 = vmatprep.subr.mxu0 0.0
        %2580 = vmatpush1.msra.mxu0 %v2551
        %2581 = vmatprep.subr.mxu0 0.0
        %2582 = vmatpush1.msra.mxu0 %v2552
        %2583 = vmatprep.subr.mxu0 0.0
        %2584 = vmatpush1.msra.mxu0 %v2553
        %2585 = vmatprep.subr.mxu0 0.0
        %2586 = vmatpush1.msra.mxu0 %v2554
        %2587 = vmatprep.subr.mxu0 0.0
        %2588 = vmatpush1.msra.mxu0 0.0
        %2589 = vmatprep.subr.mxu0 0.0
        %2590 = vmatpush1.msra.mxu0 0.0
        %2591 = vmatprep.subr.mxu0 0.0
        %2592 = vmatpush1.msra.mxu0 0.0
        %2593 = vmatprep.subr.mxu0 0.0
        %2594 = vmatpush1.msra.mxu0 0.0
        %2595 = vmatprep.subr.mxu0 0.0
        %2596 = vmatpush1.msra.mxu0 0.0
        %2597 = vmatprep.subr.mxu0 0.0
        %2598 = vmatpush1.msra.mxu0 0.0
        %2599 = vmatprep.subr.mxu0 0.0
        %2600 = vmatpush1.msra.mxu0 0.0
        %2601 = vmatprep.subr.mxu0 0.0
        %2602 = vmatpush1.msra.mxu0 0.0
        %2603 = vmatprep.subr.mxu0 0.0
        %2604 = vmatpush1.msra.mxu0 0.0
        %2605 = vmatprep.subr.mxu0 0.0
        %2606 = vmatpush1.msra.mxu0 0.0
        %2607 = vmatprep.subr.mxu0 0.0
        %2608 = vmatpush1.msra.mxu0 0.0
        %2609 = vmatprep.subr.mxu0 0.0
        %2610 = vmatpush1.msra.mxu0 0.0
        %2611 = vmatprep.subr.mxu0 0.0
        %2612 = vmatpush1.msra.mxu0 0.0
        %2613 = vmatprep.subr.mxu0 0.0
        %2614 = vmatpush1.msra.mxu0 0.0
        %2615 = vmatprep.subr.mxu0 0.0
        %2616 = vmatpush1.msra.mxu0 0.0
        %2617 = vmatprep.subr.mxu0 0.0
        %2618 = vmatpush1.msra.mxu0 0.0
        %2619 = vmatprep.mubr.f32.mxu0 0.0
        %2620 = vmatmul.mubr.f32.gmra.mrb[0].mxu0 %v2536
        %v2621 = vpop.f32.mrb[0].mxu0
        %v2622 = vadd.f32 0.0, %v2621
        %v2623 = vpop.f32.mrb[0].mxu0
        %2624 = vmatprep.mubr.f32.mxu0 0.0
        %2625 = vmatmul.mubr.f32.gmra.mrb[0].mxu0 %v2538
        %v2626 = vpop.f32.mrb[0].mxu0
        %v2627 = vadd.f32 0.0, %v2626
        %v2628 = vpop.f32.mrb[0].mxu0
        %2629 = vdwg.mxu0
        %v2630 = vmax.f32 %v2622, 1e-30
        %v2631 = vmax.f32 %v2627, 1e-30
        %v2632 = vrcp.pop %v2630
        %v2633 = vrcp.pop %v2631
        %v2634 = vmul.f32 %v2536, %v2632
        %v2635 = vmul.f32 %v2538, %v2633
        %v2636 = vpack.c.bf16 %v2635, %v2634
        %2637 = vmatprep.subr.bf16.mxu0 0
        %2638 = vmatpush1.bf16.msra.mxu0 %v2477
        %2639 = vmatprep.subr.bf16.mxu0 0
        %2640 = vmatpush1.bf16.msra.mxu0 %v2478
        %2641 = vmatprep.subr.bf16.mxu0 0
        %2642 = vmatpush1.bf16.msra.mxu0 %v2479
        %2643 = vmatprep.subr.bf16.mxu0 0
        %2644 = vmatpush1.bf16.msra.mxu0 %v2480
        %2645 = vmatprep.subr.bf16.mxu0 0
        %2646 = vmatpush1.bf16.msra.mxu0 %v2481
        %2647 = vmatprep.subr.bf16.mxu0 0
        %2648 = vmatpush1.bf16.msra.mxu0 %v2482
        %2649 = vmatprep.subr.bf16.mxu0 0
        %2650 = vmatpush1.bf16.msra.mxu0 %v2483
        %2651 = vmatprep.subr.bf16.mxu0 0
        %2652 = vmatpush1.bf16.msra.mxu0 %v2484
        %2653 = vmatprep.subr.bf16.mxu0 0
        %2654 = vmatpush1.bf16.msra.mxu0 0
        %2655 = vmatprep.subr.bf16.mxu0 0
        %2656 = vmatpush1.bf16.msra.mxu0 0
        %2657 = vmatprep.subr.bf16.mxu0 0
        %2658 = vmatpush1.bf16.msra.mxu0 0
        %2659 = vmatprep.subr.bf16.mxu0 0
        %2660 = vmatpush1.bf16.msra.mxu0 0
        %2661 = vmatprep.subr.bf16.mxu0 0
        %2662 = vmatpush1.bf16.msra.mxu0 0
        %2663 = vmatprep.subr.bf16.mxu0 0
        %2664 = vmatpush1.bf16.msra.mxu0 0
        %2665 = vmatprep.subr.bf16.mxu0 0
        %2666 = vmatpush1.bf16.msra.mxu0 0
        %2667 = vmatprep.subr.bf16.mxu0 0
        %2668 = vmatpush1.bf16.msra.mxu0 0
        %2669 = vmatprep.mubr.bf16.mxu0 0
        %2670 = vmatmul.mubr.bf16.gmra.mrb[0].mxu0 %v2636
        %v2671 = vpop.f32.mrb[0].mxu0
        %v2672 = vadd.f32 0.0, %v2671
        %v2673 = vpop.f32.mrb[0].mxu0
        %v2674 = vpop.f32.mrb[0].mxu0
        %v2675 = vadd.f32 0.0, %v2674
        %v2676 = vpop.f32.mrb[0].mxu0
        %2677 = vdwg.mxu0
        %v2678 = vpack.c.bf16 %v2675, %v2672
        %v2679 = vld [vmem:[%s1208] sm:$0xf]
        %v2680 = vld [vmem:[%s1208 + $0x4] sm:$0xf]
        %v2681 = vld [vmem:[%s1208 + $0x8] sm:$0xf]
        %v2682 = vld [vmem:[%s1208 + $0xc] sm:$0xf]
        %v2683 = vld [vmem:[%s1208 + $0x10] sm:$0xf]
        %v2684 = vld [vmem:[%s1208 + $0x14] sm:$0xf]
        %v2685 = vld [vmem:[%s1208 + $0x18] sm:$0xf]
        %v2686 = vld [vmem:[%s1208 + $0x1c] sm:$0xf]
        %v2687 = vld [vmem:[%s1208 + $0x20] sm:$0xf]
        %v2688 = vld [vmem:[%s1208 + $0x24] sm:$0xf]
        %v2689 = vld [vmem:[%s1208 + $0x28] sm:$0xf]
        %v2690 = vld [vmem:[%s1208 + $0x2c] sm:$0xf]
        %v2691 = vld [vmem:[%s1208 + $0x30] sm:$0xf]
        %v2692 = vld [vmem:[%s1208 + $0x34] sm:$0xf]
        %v2693 = vld [vmem:[%s1208 + $0x38] sm:$0xf]
        %v2694 = vld [vmem:[%s1208 + $0x3c] sm:$0xf]
        %v2695 = vld [vmem:[%s1413] sm:$0x1]
        %v2697 = vlaneseq
        %v2698 = vshrl.u32 %v2697, 7
        %v2699 = vsub.s32 0, %v2698
        %v2700 = vrot.slane %v2695, %v2699
        %v2718 = vunpack.c.l.b16 %v2679
        %v2719 = vunpack.c.l.b16 %v2680
        %v2720 = vunpack.c.l.b16 %v2681
        %v2721 = vunpack.c.l.b16 %v2682
        %v2722 = vunpack.c.l.b16 %v2683
        %v2723 = vunpack.c.l.b16 %v2684
        %v2724 = vunpack.c.l.b16 %v2685
        %v2725 = vunpack.c.l.b16 %v2686
        %v2726 = vunpack.c.l.b16 %v2687
        %v2727 = vunpack.c.l.b16 %v2688
        %v2728 = vunpack.c.l.b16 %v2689
        %v2729 = vunpack.c.l.b16 %v2690
        %v2730 = vunpack.c.l.b16 %v2691
        %v2731 = vunpack.c.l.b16 %v2692
        %v2732 = vunpack.c.l.b16 %v2693
        %v2733 = vunpack.c.l.b16 %v2694
        %v2734 = vpack.c.b16 %v2719, %v2718
        %v2735 = vpack.c.b16 %v2721, %v2720
        %v2736 = vpack.c.b16 %v2723, %v2722
        %v2737 = vpack.c.b16 %v2725, %v2724
        %v2738 = vpack.c.b16 %v2727, %v2726
        %v2739 = vpack.c.b16 %v2729, %v2728
        %v2740 = vpack.c.b16 %v2731, %v2730
        %v2741 = vpack.c.b16 %v2733, %v2732
        %2750 = vmatprep.subr.bf16.mxu0 0
        %2751 = vmatpush1.bf16.msra.mxu0 %v2734
        %2752 = vmatprep.subr.bf16.mxu0 0
        %2753 = vmatpush1.bf16.msra.mxu0 %v2735
        %2754 = vmatprep.subr.bf16.mxu0 0
        %2755 = vmatpush1.bf16.msra.mxu0 %v2736
        %2756 = vmatprep.subr.bf16.mxu0 0
        %2757 = vmatpush1.bf16.msra.mxu0 %v2737
        %2758 = vmatprep.subr.bf16.mxu0 0
        %2759 = vmatpush1.bf16.msra.mxu0 %v2738
        %2760 = vmatprep.subr.bf16.mxu0 0
        %2761 = vmatpush1.bf16.msra.mxu0 %v2739
        %2762 = vmatprep.subr.bf16.mxu0 0
        %2763 = vmatpush1.bf16.msra.mxu0 %v2740
        %2764 = vmatprep.subr.bf16.mxu0 0
        %2765 = vmatpush1.bf16.msra.mxu0 %v2741
        %2766 = vmatprep.subr.bf16.mxu0 0
        %2767 = vmatpush1.bf16.msra.mxu0 0
        %2768 = vmatprep.subr.bf16.mxu0 0
        %2769 = vmatpush1.bf16.msra.mxu0 0
        %2770 = vmatprep.subr.bf16.mxu0 0
        %2771 = vmatpush1.bf16.msra.mxu0 0
        %2772 = vmatprep.subr.bf16.mxu0 0
        %2773 = vmatpush1.bf16.msra.mxu0 0
        %2774 = vmatprep.subr.bf16.mxu0 0
        %2775 = vmatpush1.bf16.msra.mxu0 0
        %2776 = vmatprep.subr.bf16.mxu0 0
        %2777 = vmatpush1.bf16.msra.mxu0 0
        %2778 = vmatprep.subr.bf16.mxu0 0
        %2779 = vmatpush1.bf16.msra.mxu0 0
        %2780 = vmatprep.subr.bf16.mxu0 0
        %2781 = vmatpush1.bf16.msra.mxu0 0
        %2782 = vmatprep.mubr.bf16.mxu0 0
        %2783 = vmatmul.mubr.bf16.gmra.mrb[0].mxu0 %v2678
        %v2784 = vpop.f32.mrb[0].mxu0
        %v2785 = vadd.f32 %v2700, %v2784
        %v2786 = vpop.f32.mrb[0].mxu0
        %v2787 = vpop.f32.mrb[0].mxu0
        %v2788 = vadd.f32 %v2700, %v2787
        %v2789 = vpop.f32.mrb[0].mxu0
        %2790 = vdwg.mxu0
        %v2791 = vadd.f32 %v1878, %v2785
        %v2792 = vadd.f32 %v1879, %v2788
        %v2793 = vld [vmem:[%s1216] sm:$0x1]
        %v2794 = vld [vmem:[%s1224] sm:$0x1]
        %2795 = vadd.xlane.f32.xlu0 %v2791
        %v2796 = vpop.xlane.xlu0 %2795
        %2797 = vadd.xlane.f32.xlu0 %v2792
        %v2798 = vpop.xlane.xlu0 %2797
        %v2799 = vrcp.pop 128.0
        %v2800 = vmul.f32 %v2796, %v2799
        %v2801 = vmul.f32 %v2798, %v2799
        %v2802 = vsub.f32 %v2791, %v2800
        %v2803 = vsub.f32 %v2792, %v2801
        %v2804 = vmul.f32 %v2802, %v2802
        %v2805 = vmul.f32 %v2803, %v2803
        %2806 = vadd.xlane.f32.xlu0 %v2804
        %v2807 = vpop.xlane.xlu0 %2806
        %2808 = vadd.xlane.f32.xlu0 %v2805
        %v2809 = vpop.xlane.xlu0 %2808
        %v2810 = vmul.f32 %v2807, %v2799
        %v2811 = vmul.f32 %v2809, %v2799
        %v2812 = vadd.f32 %v2810, 1e-05
        %v2813 = vadd.f32 %v2811, 1e-05
        %v2814 = vrsqrt.pop %v2812
        %v2815 = vrsqrt.pop %v2813
        %v2816 = vmul.f32 %v2802, %v2814
        %v2817 = vmul.f32 %v2803, %v2815
        %v2819 = vlaneseq
        %v2820 = vshrl.u32 %v2819, 7
        %v2821 = vsub.s32 0, %v2820
        %v2822 = vrot.slane %v2793, %v2821
        %v2824 = vmul.f32 %v2816, %v2822
        %v2825 = vmul.f32 %v2817, %v2822
        %v2827 = vlaneseq
        %v2828 = vshrl.u32 %v2827, 7
        %v2829 = vsub.s32 0, %v2828
        %v2830 = vrot.slane %v2794, %v2829
        %v2832 = vadd.f32 %v2824, %v2830
        %v2833 = vadd.f32 %v2825, %v2830
        %v2834 = vpack.c.bf16 %v2833, %v2832
        %v2835 = vld [vmem:[%s1233] sm:$0xff]
        %v2836 = vld [vmem:[%s1233 + $0x8] sm:$0xff]
        %v2837 = vld [vmem:[%s1233 + $0x10] sm:$0xff]
        %v2838 = vld [vmem:[%s1233 + $0x18] sm:$0xff]
        %v2839 = vld [vmem:[%s1233 + $0x20] sm:$0xff]
        %v2840 = vld [vmem:[%s1233 + $0x28] sm:$0xff]
        %v2841 = vld [vmem:[%s1233 + $0x30] sm:$0xff]
        %v2842 = vld [vmem:[%s1233 + $0x38] sm:$0xff]
        %v2843 = vld [vmem:[%s1233 + $0x40] sm:$0xff]
        %v2844 = vld [vmem:[%s1233 + $0x48] sm:$0xff]
        %v2845 = vld [vmem:[%s1233 + $0x50] sm:$0xff]
        %v2846 = vld [vmem:[%s1233 + $0x58] sm:$0xff]
        %v2847 = vld [vmem:[%s1233 + $0x60] sm:$0xff]
        %v2848 = vld [vmem:[%s1233 + $0x68] sm:$0xff]
        %v2849 = vld [vmem:[%s1233 + $0x70] sm:$0xff]
        %v2850 = vld [vmem:[%s1233 + $0x78] sm:$0xff]
        %v2851 = vld [vmem:[%s1233 + $0x80] sm:$0xff]
        %v2852 = vld [vmem:[%s1233 + $0x88] sm:$0xff]
        %v2853 = vld [vmem:[%s1233 + $0x90] sm:$0xff]
        %v2854 = vld [vmem:[%s1233 + $0x98] sm:$0xff]
        %v2855 = vld [vmem:[%s1233 + $0xa0] sm:$0xff]
        %v2856 = vld [vmem:[%s1233 + $0xa8] sm:$0xff]
        %v2857 = vld [vmem:[%s1233 + $0xb0] sm:$0xff]
        %v2858 = vld [vmem:[%s1233 + $0xb8] sm:$0xff]
        %v2859 = vld [vmem:[%s1233 + $0xc0] sm:$0xff]
        %v2860 = vld [vmem:[%s1233 + $0xc8] sm:$0xff]
        %v2861 = vld [vmem:[%s1233 + $0xd0] sm:$0xff]
        %v2862 = vld [vmem:[%s1233 + $0xd8] sm:$0xff]
        %v2863 = vld [vmem:[%s1233 + $0xe0] sm:$0xff]
        %v2864 = vld [vmem:[%s1233 + $0xe8] sm:$0xff]
        %v2865 = vld [vmem:[%s1233 + $0xf0] sm:$0xff]
        %v2866 = vld [vmem:[%s1233 + $0xf8] sm:$0xff]
        %v2867 = vld [vmem:[%s1242] sm:$0xf]
        %v2869 = vlaneseq
        %v2870 = vshrl.u32 %v2869, 7
        %v2871 = vsub.s32 0, %v2870
        %v2872 = vrot.slane %v2867, %v2871
        %v2873 = vlaneseq
        %v2874 = vshrl.u32 %v2873, 7
        %v2875 = vsub.s32 1, %v2874
        %v2876 = vrot.slane %v2867, %v2875
        %v2877 = vlaneseq
        %v2878 = vshrl.u32 %v2877, 7
        %v2879 = vsub.s32 2, %v2878
        %v2880 = vrot.slane %v2867, %v2879
        %v2881 = vlaneseq
        %v2882 = vshrl.u32 %v2881, 7
        %v2883 = vsub.s32 3, %v2882
        %v2884 = vrot.slane %v2867, %v2883
        %v2921 = vunpack.c.l.b16 %v2835
        %v2922 = vunpack.c.h.b16 %v2835
        %v2923 = vunpack.c.l.b16 %v2836
        %v2924 = vunpack.c.h.b16 %v2836
        %v2925 = vunpack.c.l.b16 %v2837
        %v2926 = vunpack.c.h.b16 %v2837
        %v2927 = vunpack.c.l.b16 %v2838
        %v2928 = vunpack.c.h.b16 %v2838
        %v2929 = vunpack.c.l.b16 %v2839
        %v2930 = vunpack.c.h.b16 %v2839
        %v2931 = vunpack.c.l.b16 %v2840
        %v2932 = vunpack.c.h.b16 %v2840
        %v2933 = vunpack.c.l.b16 %v2841
        %v2934 = vunpack.c.h.b16 %v2841
        %v2935 = vunpack.c.l.b16 %v2842
        %v2936 = vunpack.c.h.b16 %v2842
        %v2937 = vunpack.c.l.b16 %v2843
        %v2938 = vunpack.c.h.b16 %v2843
        %v2939 = vunpack.c.l.b16 %v2844
        %v2940 = vunpack.c.h.b16 %v2844
        %v2941 = vunpack.c.l.b16 %v2845
        %v2942 = vunpack.c.h.b16 %v2845
        %v2943 = vunpack.c.l.b16 %v2846
        %v2944 = vunpack.c.h.b16 %v2846
        %v2945 = vunpack.c.l.b16 %v2847
        %v2946 = vunpack.c.h.b16 %v2847
        %v2947 = vunpack.c.l.b16 %v2848
        %v2948 = vunpack.c.h.b16 %v2848
        %v2949 = vunpack.c.l.b16 %v2849
        %v2950 = vunpack.c.h.b16 %v2849
        %v2951 = vunpack.c.l.b16 %v2850
        %v2952 = vunpack.c.h.b16 %v2850
        %v2953 = vunpack.c.l.b16 %v2851
        %v2954 = vunpack.c.h.b16 %v2851
        %v2955 = vunpack.c.l.b16 %v2852
        %v2956 = vunpack.c.h.b16 %v2852
        %v2957 = vunpack.c.l.b16 %v2853
        %v2958 = vunpack.c.h.b16 %v2853
        %v2959 = vunpack.c.l.b16 %v2854
        %v2960 = vunpack.c.h.b16 %v2854
        %v2961 = vunpack.c.l.b16 %v2855
        %v2962 = vunpack.c.h.b16 %v2855
        %v2963 = vunpack.c.l.b16 %v2856
        %v2964 = vunpack.c.h.b16 %v2856
        %v2965 = vunpack.c.l.b16 %v2857
        %v2966 = vunpack.c.h.b16 %v2857
        %v2967 = vunpack.c.l.b16 %v2858
        %v2968 = vunpack.c.h.b16 %v2858
        %v2969 = vunpack.c.l.b16 %v2859
        %v2970 = vunpack.c.h.b16 %v2859
        %v2971 = vunpack.c.l.b16 %v2860
        %v2972 = vunpack.c.h.b16 %v2860
        %v2973 = vunpack.c.l.b16 %v2861
        %v2974 = vunpack.c.h.b16 %v2861
        %v2975 = vunpack.c.l.b16 %v2862
        %v2976 = vunpack.c.h.b16 %v2862
        %v2977 = vunpack.c.l.b16 %v2863
        %v2978 = vunpack.c.h.b16 %v2863
        %v2979 = vunpack.c.l.b16 %v2864
        %v2980 = vunpack.c.h.b16 %v2864
        %v2981 = vunpack.c.l.b16 %v2865
        %v2982 = vunpack.c.h.b16 %v2865
        %v2983 = vunpack.c.l.b16 %v2866
        %v2984 = vunpack.c.h.b16 %v2866
        %v2985 = vpack.c.b16 %v2925, %v2921
        %v2986 = vpack.c.b16 %v2926, %v2922
        %v2987 = vpack.c.b16 %v2927, %v2923
        %v2988 = vpack.c.b16 %v2928, %v2924
        %v2989 = vpack.c.b16 %v2933, %v2929
        %v2990 = vpack.c.b16 %v2934, %v2930
        %v2991 = vpack.c.b16 %v2935, %v2931
        %v2992 = vpack.c.b16 %v2936, %v2932
        %v2993 = vpack.c.b16 %v2941, %v2937
        %v2994 = vpack.c.b16 %v2942, %v2938
        %v2995 = vpack.c.b16 %v2943, %v2939
        %v2996 = vpack.c.b16 %v2944, %v2940
        %v2997 = vpack.c.b16 %v2949, %v2945
        %v2998 = vpack.c.b16 %v2950, %v2946
        %v2999 = vpack.c.b16 %v2951, %v2947
        %v3000 = vpack.c.b16 %v2952, %v2948
        %v3001 = vpack.c.b16 %v2957, %v2953
        %v3002 = vpack.c.b16 %v2958, %v2954
        %v3003 = vpack.c.b16 %v2959, %v2955
        %v3004 = vpack.c.b16 %v2960, %v2956
        %v3005 = vpack.c.b16 %v2965, %v2961
        %v3006 = vpack.c.b16 %v2966, %v2962
        %v3007 = vpack.c.b16 %v2967, %v2963
        %v3008 = vpack.c.b16 %v2968, %v2964
        %v3009 = vpack.c.b16 %v2973, %v2969
        %v3010 = vpack.c.b16 %v2974, %v2970
        %v3011 = vpack.c.b16 %v2975, %v2971
        %v3012 = vpack.c.b16 %v2976, %v2972
        %v3013 = vpack.c.b16 %v2981, %v2977
        %v3014 = vpack.c.b16 %v2982, %v2978
        %v3015 = vpack.c.b16 %v2983, %v2979
        %v3016 = vpack.c.b16 %v2984, %v2980
        %3049 = vmatprep.subr.bf16.mxu0 %v2986
        %3050 = vmatpush1.bf16.msra.mxu0 %v2985
        %3051 = vmatprep.subr.bf16.mxu0 %v2990
        %3052 = vmatpush1.bf16.msra.mxu0 %v2989
        %3053 = vmatprep.subr.bf16.mxu0 %v2994
        %3054 = vmatpush1.bf16.msra.mxu0 %v2993
        %3055 = vmatprep.subr.bf16.mxu0 %v2998
        %3056 = vmatpush1.bf16.msra.mxu0 %v2997
        %3057 = vmatprep.subr.bf16.mxu0 %v3002
        %3058 = vmatpush1.bf16.msra.mxu0 %v3001
        %3059 = vmatprep.subr.bf16.mxu0 %v3006
        %3060 = vmatpush1.bf16.msra.mxu0 %v3005
        %3061 = vmatprep.subr.bf16.mxu0 %v3010
        %3062 = vmatpush1.bf16.msra.mxu0 %v3009
        %3063 = vmatprep.subr.bf16.mxu0 %v3014
        %3064 = vmatpush1.bf16.msra.mxu0 %v3013
        %3065 = vmatprep.subr.bf16.mxu0 0
        %3066 = vmatpush1.bf16.msra.mxu0 0
        %3067 = vmatprep.subr.bf16.mxu0 0
        %3068 = vmatpush1.bf16.msra.mxu0 0
        %3069 = vmatprep.subr.bf16.mxu0 0
        %3070 = vmatpush1.bf16.msra.mxu0 0
        %3071 = vmatprep.subr.bf16.mxu0 0
        %3072 = vmatpush1.bf16.msra.mxu0 0
        %3073 = vmatprep.subr.bf16.mxu0 0
        %3074 = vmatpush1.bf16.msra.mxu0 0
        %3075 = vmatprep.subr.bf16.mxu0 0
        %3076 = vmatpush1.bf16.msra.mxu0 0
        %3077 = vmatprep.subr.bf16.mxu0 0
        %3078 = vmatpush1.bf16.msra.mxu0 0
        %3079 = vmatprep.subr.bf16.mxu0 0
        %3080 = vmatpush1.bf16.msra.mxu0 0
        %3081 = vmatprep.mubr.bf16.mxu0 0
        %3082 = vmatmul.mubr.bf16.gmra.mrb[0].mxu0 %v2834
        %v3083 = vpop.f32.mrb[0].mxu0
        %v3084 = vadd.f32 %v2872, %v3083
        %v3085 = vpop.f32.mrb[0].mxu0
        %v3086 = vadd.f32 %v2876, %v3085
        %v3087 = vpop.f32.mrb[0].mxu0
        %v3088 = vadd.f32 %v2872, %v3087
        %v3089 = vpop.f32.mrb[0].mxu0
        %v3090 = vadd.f32 %v2876, %v3089
        %3091 = vdwg.mxu0
        %3092 = vmatprep.subr.bf16.mxu0 %v2988
        %3093 = vmatpush1.bf16.msra.mxu0 %v2987
        %3094 = vmatprep.subr.bf16.mxu0 %v2992
        %3095 = vmatpush1.bf16.msra.mxu0 %v2991
        %3096 = vmatprep.subr.bf16.mxu0 %v2996
        %3097 = vmatpush1.bf16.msra.mxu0 %v2995
        %3098 = vmatprep.subr.bf16.mxu0 %v3000
        %3099 = vmatpush1.bf16.msra.mxu0 %v2999
        %3100 = vmatprep.subr.bf16.mxu0 %v3004
        %3101 = vmatpush1.bf16.msra.mxu0 %v3003
        %3102 = vmatprep.subr.bf16.mxu0 %v3008
        %3103 = vmatpush1.bf16.msra.mxu0 %v3007
        %3104 = vmatprep.subr.bf16.mxu0 %v3012
        %3105 = vmatpush1.bf16.msra.mxu0 %v3011
        %3106 = vmatprep.subr.bf16.mxu0 %v3016
        %3107 = vmatpush1.bf16.msra.mxu0 %v3015
        %3108 = vmatprep.subr.bf16.mxu0 0
        %3109 = vmatpush1.bf16.msra.mxu0 0
        %3110 = vmatprep.subr.bf16.mxu0 0
        %3111 = vmatpush1.bf16.msra.mxu0 0
        %3112 = vmatprep.subr.bf16.mxu0 0
        %3113 = vmatpush1.bf16.msra.mxu0 0
        %3114 = vmatprep.subr.bf16.mxu0 0
        %3115 = vmatpush1.bf16.msra.mxu0 0
        %3116 = vmatprep.subr.bf16.mxu0 0
        %3117 = vmatpush1.bf16.msra.mxu0 0
        %3118 = vmatprep.subr.bf16.mxu0 0
        %3119 = vmatpush1.bf16.msra.mxu0 0
        %3120 = vmatprep.subr.bf16.mxu0 0
        %3121 = vmatpush1.bf16.msra.mxu0 0
        %3122 = vmatprep.subr.bf16.mxu0 0
        %3123 = vmatpush1.bf16.msra.mxu0 0
        %3124 = vmatprep.mubr.bf16.mxu0 0
        %3125 = vmatmul.mubr.bf16.gmra.mrb[0].mxu0 %v2834
        %v3126 = vpop.f32.mrb[0].mxu0
        %v3127 = vadd.f32 %v2880, %v3126
        %v3128 = vpop.f32.mrb[0].mxu0
        %v3129 = vadd.f32 %v2884, %v3128
        %v3130 = vpop.f32.mrb[0].mxu0
        %v3131 = vadd.f32 %v2880, %v3130
        %v3132 = vpop.f32.mrb[0].mxu0
        %v3133 = vadd.f32 %v2884, %v3132
        %3134 = vdwg.mxu0
        %v3135 = vmax.f32 %v3084, 0.0
        %v3136 = vmax.f32 %v3086, 0.0
        %v3137 = vmax.f32 %v3127, 0.0
        %v3138 = vmax.f32 %v3129, 0.0
        %v3139 = vmax.f32 %v3088, 0.0
        %v3140 = vmax.f32 %v3090, 0.0
        %v3141 = vmax.f32 %v3131, 0.0
        %v3142 = vmax.f32 %v3133, 0.0
        %v3143 = vpack.c.bf16 %v3139, %v3135
        %v3144 = vpack.c.bf16 %v3140, %v3136
        %v3145 = vpack.c.bf16 %v3141, %v3137
        %v3146 = vpack.c.bf16 %v3142, %v3138
        %v3147 = vld [vmem:[%s1251] sm:$0xf]
        %v3148 = vld [vmem:[%s1251 + $0x4] sm:$0xf]
        %v3149 = vld [vmem:[%s1251 + $0x8] sm:$0xf]
        %v3150 = vld [vmem:[%s1251 + $0xc] sm:$0xf]
        %v3151 = vld [vmem:[%s1251 + $0x10] sm:$0xf]
        %v3152 = vld [vmem:[%s1251 + $0x14] sm:$0xf]
        %v3153 = vld [vmem:[%s1251 + $0x18] sm:$0xf]
        %v3154 = vld [vmem:[%s1251 + $0x1c] sm:$0xf]
        %v3155 = vld [vmem:[%s1251 + $0x20] sm:$0xf]
        %v3156 = vld [vmem:[%s1251 + $0x24] sm:$0xf]
        %v3157 = vld [vmem:[%s1251 + $0x28] sm:$0xf]
        %v3158 = vld [vmem:[%s1251 + $0x2c] sm:$0xf]
        %v3159 = vld [vmem:[%s1251 + $0x30] sm:$0xf]
        %v3160 = vld [vmem:[%s1251 + $0x34] sm:$0xf]
        %v3161 = vld [vmem:[%s1251 + $0x38] sm:$0xf]
        %v3162 = vld [vmem:[%s1251 + $0x3c] sm:$0xf]
        %v3163 = vld [vmem:[%s1251 + $0x40] sm:$0xf]
        %v3164 = vld [vmem:[%s1251 + $0x44] sm:$0xf]
        %v3165 = vld [vmem:[%s1251 + $0x48] sm:$0xf]
        %v3166 = vld [vmem:[%s1251 + $0x4c] sm:$0xf]
        %v3167 = vld [vmem:[%s1251 + $0x50] sm:$0xf]
        %v3168 = vld [vmem:[%s1251 + $0x54] sm:$0xf]
        %v3169 = vld [vmem:[%s1251 + $0x58] sm:$0xf]
        %v3170 = vld [vmem:[%s1251 + $0x5c] sm:$0xf]
        %v3171 = vld [vmem:[%s1251 + $0x60] sm:$0xf]
        %v3172 = vld [vmem:[%s1251 + $0x64] sm:$0xf]
        %v3173 = vld [vmem:[%s1251 + $0x68] sm:$0xf]
        %v3174 = vld [vmem:[%s1251 + $0x6c] sm:$0xf]
        %v3175 = vld [vmem:[%s1251 + $0x70] sm:$0xf]
        %v3176 = vld [vmem:[%s1251 + $0x74] sm:$0xf]
        %v3177 = vld [vmem:[%s1251 + $0x78] sm:$0xf]
        %v3178 = vld [vmem:[%s1251 + $0x7c] sm:$0xf]
        %v3179 = vld [vmem:[%s1251 + $0x80] sm:$0xf]
        %v3180 = vld [vmem:[%s1251 + $0x84] sm:$0xf]
        %v3181 = vld [vmem:[%s1251 + $0x88] sm:$0xf]
        %v3182 = vld [vmem:[%s1251 + $0x8c] sm:$0xf]
        %v3183 = vld [vmem:[%s1251 + $0x90] sm:$0xf]
        %v3184 = vld [vmem:[%s1251 + $0x94] sm:$0xf]
        %v3185 = vld [vmem:[%s1251 + $0x98] sm:$0xf]
        %v3186 = vld [vmem:[%s1251 + $0x9c] sm:$0xf]
        %v3187 = vld [vmem:[%s1251 + $0xa0] sm:$0xf]
        %v3188 = vld [vmem:[%s1251 + $0xa4] sm:$0xf]
        %v3189 = vld [vmem:[%s1251 + $0xa8] sm:$0xf]
        %v3190 = vld [vmem:[%s1251 + $0xac] sm:$0xf]
        %v3191 = vld [vmem:[%s1251 + $0xb0] sm:$0xf]
        %v3192 = vld [vmem:[%s1251 + $0xb4] sm:$0xf]
        %v3193 = vld [vmem:[%s1251 + $0xb8] sm:$0xf]
        %v3194 = vld [vmem:[%s1251 + $0xbc] sm:$0xf]
        %v3195 = vld [vmem:[%s1251 + $0xc0] sm:$0xf]
        %v3196 = vld [vmem:[%s1251 + $0xc4] sm:$0xf]
        %v3197 = vld [vmem:[%s1251 + $0xc8] sm:$0xf]
        %v3198 = vld [vmem:[%s1251 + $0xcc] sm:$0xf]
        %v3199 = vld [vmem:[%s1251 + $0xd0] sm:$0xf]
        %v3200 = vld [vmem:[%s1251 + $0xd4] sm:$0xf]
        %v3201 = vld [vmem:[%s1251 + $0xd8] sm:$0xf]
        %v3202 = vld [vmem:[%s1251 + $0xdc] sm:$0xf]
        %v3203 = vld [vmem:[%s1251 + $0xe0] sm:$0xf]
        %v3204 = vld [vmem:[%s1251 + $0xe4] sm:$0xf]
        %v3205 = vld [vmem:[%s1251 + $0xe8] sm:$0xf]
        %v3206 = vld [vmem:[%s1251 + $0xec] sm:$0xf]
        %v3207 = vld [vmem:[%s1251 + $0xf0] sm:$0xf]
        %v3208 = vld [vmem:[%s1251 + $0xf4] sm:$0xf]
        %v3209 = vld [vmem:[%s1251 + $0xf8] sm:$0xf]
        %v3210 = vld [vmem:[%s1251 + $0xfc] sm:$0xf]
        %v3211 = vld [vmem:[%s1259] sm:$0x1]
        %v3213 = vlaneseq
        %v3214 = vshrl.u32 %v3213, 7
        %v3215 = vsub.s32 0, %v3214
        %v3216 = vrot.slane %v3211, %v3215
        %v3282 = vunpack.c.l.b16 %v3147
        %v3283 = vunpack.c.l.b16 %v3148
        %v3284 = vunpack.c.l.b16 %v3149
        %v3285 = vunpack.c.l.b16 %v3150
        %v3286 = vunpack.c.l.b16 %v3151
        %v3287 = vunpack.c.l.b16 %v3152
        %v3288 = vunpack.c.l.b16 %v3153
        %v3289 = vunpack.c.l.b16 %v3154
        %v3290 = vunpack.c.l.b16 %v3155
        %v3291 = vunpack.c.l.b16 %v3156
        %v3292 = vunpack.c.l.b16 %v3157
        %v3293 = vunpack.c.l.b16 %v3158
        %v3294 = vunpack.c.l.b16 %v3159
        %v3295 = vunpack.c.l.b16 %v3160
        %v3296 = vunpack.c.l.b16 %v3161
        %v3297 = vunpack.c.l.b16 %v3162
        %v3298 = vunpack.c.l.b16 %v3163
        %v3299 = vunpack.c.l.b16 %v3164
        %v3300 = vunpack.c.l.b16 %v3165
        %v3301 = vunpack.c.l.b16 %v3166
        %v3302 = vunpack.c.l.b16 %v3167
        %v3303 = vunpack.c.l.b16 %v3168
        %v3304 = vunpack.c.l.b16 %v3169
        %v3305 = vunpack.c.l.b16 %v3170
        %v3306 = vunpack.c.l.b16 %v3171
        %v3307 = vunpack.c.l.b16 %v3172
        %v3308 = vunpack.c.l.b16 %v3173
        %v3309 = vunpack.c.l.b16 %v3174
        %v3310 = vunpack.c.l.b16 %v3175
        %v3311 = vunpack.c.l.b16 %v3176
        %v3312 = vunpack.c.l.b16 %v3177
        %v3313 = vunpack.c.l.b16 %v3178
        %v3314 = vunpack.c.l.b16 %v3179
        %v3315 = vunpack.c.l.b16 %v3180
        %v3316 = vunpack.c.l.b16 %v3181
        %v3317 = vunpack.c.l.b16 %v3182
        %v3318 = vunpack.c.l.b16 %v3183
        %v3319 = vunpack.c.l.b16 %v3184
        %v3320 = vunpack.c.l.b16 %v3185
        %v3321 = vunpack.c.l.b16 %v3186
        %v3322 = vunpack.c.l.b16 %v3187
        %v3323 = vunpack.c.l.b16 %v3188
        %v3324 = vunpack.c.l.b16 %v3189
        %v3325 = vunpack.c.l.b16 %v3190
        %v3326 = vunpack.c.l.b16 %v3191
        %v3327 = vunpack.c.l.b16 %v3192
        %v3328 = vunpack.c.l.b16 %v3193
        %v3329 = vunpack.c.l.b16 %v3194
        %v3330 = vunpack.c.l.b16 %v3195
        %v3331 = vunpack.c.l.b16 %v3196
        %v3332 = vunpack.c.l.b16 %v3197
        %v3333 = vunpack.c.l.b16 %v3198
        %v3334 = vunpack.c.l.b16 %v3199
        %v3335 = vunpack.c.l.b16 %v3200
        %v3336 = vunpack.c.l.b16 %v3201
        %v3337 = vunpack.c.l.b16 %v3202
        %v3338 = vunpack.c.l.b16 %v3203
        %v3339 = vunpack.c.l.b16 %v3204
        %v3340 = vunpack.c.l.b16 %v3205
        %v3341 = vunpack.c.l.b16 %v3206
        %v3342 = vunpack.c.l.b16 %v3207
        %v3343 = vunpack.c.l.b16 %v3208
        %v3344 = vunpack.c.l.b16 %v3209
        %v3345 = vunpack.c.l.b16 %v3210
        %v3346 = vpack.c.b16 %v3283, %v3282
        %v3347 = vpack.c.b16 %v3285, %v3284
        %v3348 = vpack.c.b16 %v3287, %v3286
        %v3349 = vpack.c.b16 %v3289, %v3288
        %v3350 = vpack.c.b16 %v3291, %v3290
        %v3351 = vpack.c.b16 %v3293, %v3292
        %v3352 = vpack.c.b16 %v3295, %v3294
        %v3353 = vpack.c.b16 %v3297, %v3296
        %v3354 = vpack.c.b16 %v3299, %v3298
        %v3355 = vpack.c.b16 %v3301, %v3300
        %v3356 = vpack.c.b16 %v3303, %v3302
        %v3357 = vpack.c.b16 %v3305, %v3304
        %v3358 = vpack.c.b16 %v3307, %v3306
        %v3359 = vpack.c.b16 %v3309, %v3308
        %v3360 = vpack.c.b16 %v3311, %v3310
        %v3361 = vpack.c.b16 %v3313, %v3312
        %v3362 = vpack.c.b16 %v3315, %v3314
        %v3363 = vpack.c.b16 %v3317, %v3316
        %v3364 = vpack.c.b16 %v3319, %v3318
        %v3365 = vpack.c.b16 %v3321, %v3320
        %v3366 = vpack.c.b16 %v3323, %v3322
        %v3367 = vpack.c.b16 %v3325, %v3324
        %v3368 = vpack.c.b16 %v3327, %v3326
        %v3369 = vpack.c.b16 %v3329, %v3328
        %v3370 = vpack.c.b16 %v3331, %v3330
        %v3371 = vpack.c.b16 %v3333, %v3332
        %v3372 = vpack.c.b16 %v3335, %v3334
        %v3373 = vpack.c.b16 %v3337, %v3336
        %v3374 = vpack.c.b16 %v3339, %v3338
        %v3375 = vpack.c.b16 %v3341, %v3340
        %v3376 = vpack.c.b16 %v3343, %v3342
        %v3377 = vpack.c.b16 %v3345, %v3344
        %3410 = vmatprep.subr.bf16.mxu0 0
        %3411 = vmatpush1.bf16.msra.mxu0 %v3346
        %3412 = vmatprep.subr.bf16.mxu0 0
        %3413 = vmatpush1.bf16.msra.mxu0 %v3347
        %3414 = vmatprep.subr.bf16.mxu0 0
        %3415 = vmatpush1.bf16.msra.mxu0 %v3348
        %3416 = vmatprep.subr.bf16.mxu0 0
        %3417 = vmatpush1.bf16.msra.mxu0 %v3349
        %3418 = vmatprep.subr.bf16.mxu0 0
        %3419 = vmatpush1.bf16.msra.mxu0 %v3350
        %3420 = vmatprep.subr.bf16.mxu0 0
        %3421 = vmatpush1.bf16.msra.mxu0 %v3351
        %3422 = vmatprep.subr.bf16.mxu0 0
        %3423 = vmatpush1.bf16.msra.mxu0 %v3352
        %3424 = vmatprep.subr.bf16.mxu0 0
        %3425 = vmatpush1.bf16.msra.mxu0 %v3353
        %3426 = vmatprep.subr.bf16.mxu0 0
        %3427 = vmatpush1.bf16.msra.mxu0 %v3354
        %3428 = vmatprep.subr.bf16.mxu0 0
        %3429 = vmatpush1.bf16.msra.mxu0 %v3355
        %3430 = vmatprep.subr.bf16.mxu0 0
        %3431 = vmatpush1.bf16.msra.mxu0 %v3356
        %3432 = vmatprep.subr.bf16.mxu0 0
        %3433 = vmatpush1.bf16.msra.mxu0 %v3357
        %3434 = vmatprep.subr.bf16.mxu0 0
        %3435 = vmatpush1.bf16.msra.mxu0 %v3358
        %3436 = vmatprep.subr.bf16.mxu0 0
        %3437 = vmatpush1.bf16.msra.mxu0 %v3359
        %3438 = vmatprep.subr.bf16.mxu0 0
        %3439 = vmatpush1.bf16.msra.mxu0 %v3360
        %3440 = vmatprep.subr.bf16.mxu0 0
        %3441 = vmatpush1.bf16.msra.mxu0 %v3361
        %3442 = vmatprep.mubr.bf16.mxu0 %v3144
        %3443 = vmatmul.mubr.bf16.gmra.mrb[0].mxu0 %v3143
        %v3444 = vpop.f32.mrb[0].mxu0
        %v3445 = vadd.f32 %v3216, %v3444
        %v3446 = vpop.f32.mrb[0].mxu0
        %v3447 = vpop.f32.mrb[0].mxu0
        %v3448 = vadd.f32 %v3216, %v3447
        %v3449 = vpop.f32.mrb[0].mxu0
        %3450 = vdwg.mxu0
        %3451 = vmatprep.subr.bf16.mxu0 0
        %3452 = vmatpush1.bf16.msra.mxu0 %v3362
        %3453 = vmatprep.subr.bf16.mxu0 0
        %3454 = vmatpush1.bf16.msra.mxu0 %v3363
        %3455 = vmatprep.subr.bf16.mxu0 0
        %3456 = vmatpush1.bf16.msra.mxu0 %v3364
        %3457 = vmatprep.subr.bf16.mxu0 0
        %3458 = vmatpush1.bf16.msra.mxu0 %v3365
        %3459 = vmatprep.subr.bf16.mxu0 0
        %3460 = vmatpush1.bf16.msra.mxu0 %v3366
        %3461 = vmatprep.subr.bf16.mxu0 0
        %3462 = vmatpush1.bf16.msra.mxu0 %v3367
        %3463 = vmatprep.subr.bf16.mxu0 0
        %3464 = vmatpush1.bf16.msra.mxu0 %v3368
        %3465 = vmatprep.subr.bf16.mxu0 0
        %3466 = vmatpush1.bf16.msra.mxu0 %v3369
        %3467 = vmatprep.subr.bf16.mxu0 0
        %3468 = vmatpush1.bf16.msra.mxu0 %v3370
        %3469 = vmatprep.subr.bf16.mxu0 0
        %3470 = vmatpush1.bf16.msra.mxu0 %v3371
        %3471 = vmatprep.subr.bf16.mxu0 0
        %3472 = vmatpush1.bf16.msra.mxu0 %v3372
        %3473 = vmatprep.subr.bf16.mxu0 0
        %3474 = vmatpush1.bf16.msra.mxu0 %v3373
        %3475 = vmatprep.subr.bf16.mxu0 0
        %3476 = vmatpush1.bf16.msra.mxu0 %v3374
        %3477 = vmatprep.subr.bf16.mxu0 0
        %3478 = vmatpush1.bf16.msra.mxu0 %v3375
        %3479 = vmatprep.subr.bf16.mxu0 0
        %3480 = vmatpush1.bf16.msra.mxu0 %v3376
        %3481 = vmatprep.subr.bf16.mxu0 0
        %3482 = vmatpush1.bf16.msra.mxu0 %v3377
        %3483 = vmatprep.mubr.bf16.mxu0 %v3146
        %3484 = vmatmul.mubr.bf16.gmra.mrb[0].mxu0 %v3145
        %v3485 = vpop.f32.mrb[0].mxu0
        %v3486 = vadd.f32 %v3445, %v3485
        %v3487 = vpop.f32.mrb[0].mxu0
        %v3488 = vpop.f32.mrb[0].mxu0
        %v3489 = vadd.f32 %v3448, %v3488
        %v3490 = vpop.f32.mrb[0].mxu0
        %3491 = vdwg.mxu0
        %v3492 = vadd.f32 %v2832, %v3486
        %v3493 = vadd.f32 %v2833, %v3489
        %v3494 = vld [vmem:[%s1267] sm:$0x1]
        %v3495 = vld [vmem:[%s1275] sm:$0x1]
        %3496 = vadd.xlane.f32.xlu0 %v3492
        %v3497 = vpop.xlane.xlu0 %3496
        %3498 = vadd.xlane.f32.xlu0 %v3493
        %v3499 = vpop.xlane.xlu0 %3498
        %v3500 = vmul.f32 %v3497, %v2799
        %v3501 = vmul.f32 %v3499, %v2799
        %v3502 = vsub.f32 %v3492, %v3500
        %v3503 = vsub.f32 %v3493, %v3501
        %v3504 = vmul.f32 %v3502, %v3502
        %v3505 = vmul.f32 %v3503, %v3503
        %3506 = vadd.xlane.f32.xlu0 %v3504
        %v3507 = vpop.xlane.xlu0 %3506
        %3508 = vadd.xlane.f32.xlu0 %v3505
        %v3509 = vpop.xlane.xlu0 %3508
        %v3510 = vmul.f32 %v3507, %v2799
        %v3511 = vmul.f32 %v3509, %v2799
        %v3512 = vadd.f32 %v3510, 1e-05
        %v3513 = vadd.f32 %v3511, 1e-05
        %v3514 = vrsqrt.pop %v3512
        %v3515 = vrsqrt.pop %v3513
        %v3516 = vmul.f32 %v3502, %v3514
        %v3517 = vmul.f32 %v3503, %v3515
        %v3519 = vlaneseq
        %v3520 = vshrl.u32 %v3519, 7
        %v3521 = vsub.s32 0, %v3520
        %v3522 = vrot.slane %v3494, %v3521
        %v3524 = vmul.f32 %v3516, %v3522
        %v3525 = vmul.f32 %v3517, %v3522
        %v3527 = vlaneseq
        %v3528 = vshrl.u32 %v3527, 7
        %v3529 = vsub.s32 0, %v3528
        %v3530 = vrot.slane %v3495, %v3529
        %v3532 = vadd.f32 %v3524, %v3530
        %v3533 = vadd.f32 %v3525, %v3530
        %3534 = vst [vmem:[#allocation30] sm:$0xff] %v3532
        %3535 = vst [vmem:[#allocation30 + $0x8] sm:$0xff] %v3533
        %p3536 = scmp.eq.s32.totalorder %s80, 3
        // Predicated region
        $region217: #{empath_model_forward.1} parent=127 // pred_check
          %p3537 = pneg %p3536
        $region218: #{empath_model_forward.1} parent=127 // pred_check_branch
          %3539 = sbr.rel (%p3537) target = $region220
        $region219: #{empath_model_forward.1} parent=127 // pred_region
          %v3540 = vpack.c.bf16 %v3533, %v3532
          %v3541 = vld [vmem:[#allocation24] sm:$0xff]
          %v3542 = vld [vmem:[#allocation24 + $0x8] sm:$0xff]
          %v3543 = vld [vmem:[#allocation24 + $0x10] sm:$0xff]
          %v3544 = vld [vmem:[#allocation24 + $0x18] sm:$0xff]
          %v3545 = vld [vmem:[#allocation24 + $0x20] sm:$0xff]
          %v3546 = vld [vmem:[#allocation24 + $0x28] sm:$0xff]
          %v3547 = vld [vmem:[#allocation24 + $0x30] sm:$0xff]
          %v3548 = vld [vmem:[#allocation24 + $0x38] sm:$0xff]
          %v3549 = vld [vmem:[#allocation24 + $0x40] sm:$0xff]
          %v3550 = vld [vmem:[#allocation24 + $0x48] sm:$0xff]
          %v3551 = vld [vmem:[#allocation24 + $0x50] sm:$0xff]
          %v3552 = vld [vmem:[#allocation24 + $0x58] sm:$0xff]
          %v3553 = vld [vmem:[#allocation24 + $0x60] sm:$0xff]
          %v3554 = vld [vmem:[#allocation24 + $0x68] sm:$0xff]
          %v3555 = vld [vmem:[#allocation24 + $0x70] sm:$0xff]
          %v3556 = vld [vmem:[#allocation24 + $0x78] sm:$0xff]
          %v3557 = vld [vmem:[#allocation25] sm:$0x3]
          %v3559 = vlaneseq
          %v3560 = vshrl.u32 %v3559, 7
          %v3561 = vsub.s32 0, %v3560
          %v3562 = vrot.slane %v3557, %v3561
          %v3563 = vlaneseq
          %v3564 = vshrl.u32 %v3563, 7
          %v3565 = vsub.s32 1, %v3564
          %v3566 = vrot.slane %v3557, %v3565
          %v3585 = vunpack.c.l.b16 %v3541
          %v3586 = vunpack.c.h.b16 %v3541
          %v3587 = vunpack.c.l.b16 %v3542
          %v3588 = vunpack.c.h.b16 %v3542
          %v3589 = vunpack.c.l.b16 %v3543
          %v3590 = vunpack.c.h.b16 %v3543
          %v3591 = vunpack.c.l.b16 %v3544
          %v3592 = vunpack.c.h.b16 %v3544
          %v3593 = vunpack.c.l.b16 %v3545
          %v3594 = vunpack.c.h.b16 %v3545
          %v3595 = vunpack.c.l.b16 %v3546
          %v3596 = vunpack.c.h.b16 %v3546
          %v3597 = vunpack.c.l.b16 %v3547
          %v3598 = vunpack.c.h.b16 %v3547
          %v3599 = vunpack.c.l.b16 %v3548
          %v3600 = vunpack.c.h.b16 %v3548
          %v3601 = vunpack.c.l.b16 %v3549
          %v3602 = vunpack.c.h.b16 %v3549
          %v3603 = vunpack.c.l.b16 %v3550
          %v3604 = vunpack.c.h.b16 %v3550
          %v3605 = vunpack.c.l.b16 %v3551
          %v3606 = vunpack.c.h.b16 %v3551
          %v3607 = vunpack.c.l.b16 %v3552
          %v3608 = vunpack.c.h.b16 %v3552
          %v3609 = vunpack.c.l.b16 %v3553
          %v3610 = vunpack.c.h.b16 %v3553
          %v3611 = vunpack.c.l.b16 %v3554
          %v3612 = vunpack.c.h.b16 %v3554
          %v3613 = vunpack.c.l.b16 %v3555
          %v3614 = vunpack.c.h.b16 %v3555
          %v3615 = vunpack.c.l.b16 %v3556
          %v3616 = vunpack.c.h.b16 %v3556
          %v3617 = vpack.c.b16 %v3587, %v3585
          %v3618 = vpack.c.b16 %v3588, %v3586
          %v3619 = vpack.c.b16 %v3591, %v3589
          %v3620 = vpack.c.b16 %v3592, %v3590
          %v3621 = vpack.c.b16 %v3595, %v3593
          %v3622 = vpack.c.b16 %v3596, %v3594
          %v3623 = vpack.c.b16 %v3599, %v3597
          %v3624 = vpack.c.b16 %v3600, %v3598
          %v3625 = vpack.c.b16 %v3603, %v3601
          %v3626 = vpack.c.b16 %v3604, %v3602
          %v3627 = vpack.c.b16 %v3607, %v3605
          %v3628 = vpack.c.b16 %v3608, %v3606
          %v3629 = vpack.c.b16 %v3611, %v3609
          %v3630 = vpack.c.b16 %v3612, %v3610
          %v3631 = vpack.c.b16 %v3615, %v3613
          %v3632 = vpack.c.b16 %v3616, %v3614
          %3649 = vmatprep.subr.bf16.mxu0 %v3618
          %3650 = vmatpush1.bf16.msra.mxu0 %v3617
          %3651 = vmatprep.subr.bf16.mxu0 %v3620
          %3652 = vmatpush1.bf16.msra.mxu0 %v3619
          %3653 = vmatprep.subr.bf16.mxu0 %v3622
          %3654 = vmatpush1.bf16.msra.mxu0 %v3621
          %3655 = vmatprep.subr.bf16.mxu0 %v3624
          %3656 = vmatpush1.bf16.msra.mxu0 %v3623
          %3657 = vmatprep.subr.bf16.mxu0 %v3626
          %3658 = vmatpush1.bf16.msra.mxu0 %v3625
          %3659 = vmatprep.subr.bf16.mxu0 %v3628
          %3660 = vmatpush1.bf16.msra.mxu0 %v3627
          %3661 = vmatprep.subr.bf16.mxu0 %v3630
          %3662 = vmatpush1.bf16.msra.mxu0 %v3629
          %3663 = vmatprep.subr.bf16.mxu0 %v3632
          %3664 = vmatpush1.bf16.msra.mxu0 %v3631
          %3665 = vmatprep.subr.bf16.mxu0 0
          %3666 = vmatpush1.bf16.msra.mxu0 0
          %3667 = vmatprep.subr.bf16.mxu0 0
          %3668 = vmatpush1.bf16.msra.mxu0 0
          %3669 = vmatprep.subr.bf16.mxu0 0
          %3670 = vmatpush1.bf16.msra.mxu0 0
          %3671 = vmatprep.subr.bf16.mxu0 0
          %3672 = vmatpush1.bf16.msra.mxu0 0
          %3673 = vmatprep.subr.bf16.mxu0 0
          %3674 = vmatpush1.bf16.msra.mxu0 0
          %3675 = vmatprep.subr.bf16.mxu0 0
          %3676 = vmatpush1.bf16.msra.mxu0 0
          %3677 = vmatprep.subr.bf16.mxu0 0
          %3678 = vmatpush1.bf16.msra.mxu0 0
          %3679 = vmatprep.subr.bf16.mxu0 0
          %3680 = vmatpush1.bf16.msra.mxu0 0
          %3681 = vmatprep.mubr.bf16.mxu0 0
          %3682 = vmatmul.mubr.bf16.gmra.mrb[0].mxu0 %v3540
          %v3683 = vpop.f32.mrb[0].mxu0
          %v3684 = vadd.f32 %v3562, %v3683
          %v3685 = vpop.f32.mrb[0].mxu0
          %v3686 = vadd.f32 %v3566, %v3685
          %v3687 = vpop.f32.mrb[0].mxu0
          %v3688 = vadd.f32 %v3562, %v3687
          %v3689 = vpop.f32.mrb[0].mxu0
          %v3690 = vadd.f32 %v3566, %v3689
          %3691 = vdwg.mxu0
          %v3692 = vmax.f32 %v3684, 0.0
          %v3693 = vmax.f32 %v3686, 0.0
          %v3694 = vmax.f32 %v3688, 0.0
          %v3695 = vmax.f32 %v3690, 0.0
          %v3696 = vpack.c.bf16 %v3694, %v3692
          %v3697 = vpack.c.bf16 %v3695, %v3693
          %v3698 = vld [vmem:[#allocation26] sm:$0xf]
          %v3699 = vld [vmem:[#allocation26 + $0x4] sm:$0xf]
          %v3700 = vld [vmem:[#allocation26 + $0x8] sm:$0xf]
          %v3701 = vld [vmem:[#allocation26 + $0xc] sm:$0xf]
          %v3702 = vld [vmem:[#allocation26 + $0x10] sm:$0xf]
          %v3703 = vld [vmem:[#allocation26 + $0x14] sm:$0xf]
          %v3704 = vld [vmem:[#allocation26 + $0x18] sm:$0xf]
          %v3705 = vld [vmem:[#allocation26 + $0x1c] sm:$0xf]
          %v3706 = vld [vmem:[#allocation26 + $0x20] sm:$0xf]
          %v3707 = vld [vmem:[#allocation26 + $0x24] sm:$0xf]
          %v3708 = vld [vmem:[#allocation26 + $0x28] sm:$0xf]
          %v3709 = vld [vmem:[#allocation26 + $0x2c] sm:$0xf]
          %v3710 = vld [vmem:[#allocation26 + $0x30] sm:$0xf]
          %v3711 = vld [vmem:[#allocation26 + $0x34] sm:$0xf]
          %v3712 = vld [vmem:[#allocation26 + $0x38] sm:$0xf]
          %v3713 = vld [vmem:[#allocation26 + $0x3c] sm:$0xf]
          %v3714 = vld [vmem:[#allocation26 + $0x40] sm:$0xf]
          %v3715 = vld [vmem:[#allocation26 + $0x44] sm:$0xf]
          %v3716 = vld [vmem:[#allocation26 + $0x48] sm:$0xf]
          %v3717 = vld [vmem:[#allocation26 + $0x4c] sm:$0xf]
          %v3718 = vld [vmem:[#allocation26 + $0x50] sm:$0xf]
          %v3719 = vld [vmem:[#allocation26 + $0x54] sm:$0xf]
          %v3720 = vld [vmem:[#allocation26 + $0x58] sm:$0xf]
          %v3721 = vld [vmem:[#allocation26 + $0x5c] sm:$0xf]
          %v3722 = vld [vmem:[#allocation26 + $0x60] sm:$0xf]
          %v3723 = vld [vmem:[#allocation26 + $0x64] sm:$0xf]
          %v3724 = vld [vmem:[#allocation26 + $0x68] sm:$0xf]
          %v3725 = vld [vmem:[#allocation26 + $0x6c] sm:$0xf]
          %v3726 = vld [vmem:[#allocation26 + $0x70] sm:$0xf]
          %v3727 = vld [vmem:[#allocation26 + $0x74] sm:$0xf]
          %v3728 = vld [vmem:[#allocation26 + $0x78] sm:$0xf]
          %v3729 = vld [vmem:[#allocation26 + $0x7c] sm:$0xf]
          %v3730 = vld [vmem:[#allocation27] sm:$0x1]
          %v3732 = vlaneseq
          %v3733 = vshrl.u32 %v3732, 7
          %v3734 = vsub.s32 0, %v3733
          %v3735 = vrot.slane %v3730, %v3734
          %v3769 = vunpack.c.l.b16 %v3698
          %v3770 = vunpack.c.l.b16 %v3699
          %v3771 = vunpack.c.l.b16 %v3700
          %v3772 = vunpack.c.l.b16 %v3701
          %v3773 = vunpack.c.l.b16 %v3702
          %v3774 = vunpack.c.l.b16 %v3703
          %v3775 = vunpack.c.l.b16 %v3704
          %v3776 = vunpack.c.l.b16 %v3705
          %v3777 = vunpack.c.l.b16 %v3706
          %v3778 = vunpack.c.l.b16 %v3707
          %v3779 = vunpack.c.l.b16 %v3708
          %v3780 = vunpack.c.l.b16 %v3709
          %v3781 = vunpack.c.l.b16 %v3710
          %v3782 = vunpack.c.l.b16 %v3711
          %v3783 = vunpack.c.l.b16 %v3712
          %v3784 = vunpack.c.l.b16 %v3713
          %v3785 = vunpack.c.l.b16 %v3714
          %v3786 = vunpack.c.l.b16 %v3715
          %v3787 = vunpack.c.l.b16 %v3716
          %v3788 = vunpack.c.l.b16 %v3717
          %v3789 = vunpack.c.l.b16 %v3718
          %v3790 = vunpack.c.l.b16 %v3719
          %v3791 = vunpack.c.l.b16 %v3720
          %v3792 = vunpack.c.l.b16 %v3721
          %v3793 = vunpack.c.l.b16 %v3722
          %v3794 = vunpack.c.l.b16 %v3723
          %v3795 = vunpack.c.l.b16 %v3724
          %v3796 = vunpack.c.l.b16 %v3725
          %v3797 = vunpack.c.l.b16 %v3726
          %v3798 = vunpack.c.l.b16 %v3727
          %v3799 = vunpack.c.l.b16 %v3728
          %v3800 = vunpack.c.l.b16 %v3729
          %v3801 = vpack.c.b16 %v3770, %v3769
          %v3802 = vpack.c.b16 %v3772, %v3771
          %v3803 = vpack.c.b16 %v3774, %v3773
          %v3804 = vpack.c.b16 %v3776, %v3775
          %v3805 = vpack.c.b16 %v3778, %v3777
          %v3806 = vpack.c.b16 %v3780, %v3779
          %v3807 = vpack.c.b16 %v3782, %v3781
          %v3808 = vpack.c.b16 %v3784, %v3783
          %v3809 = vpack.c.b16 %v3786, %v3785
          %v3810 = vpack.c.b16 %v3788, %v3787
          %v3811 = vpack.c.b16 %v3790, %v3789
          %v3812 = vpack.c.b16 %v3792, %v3791
          %v3813 = vpack.c.b16 %v3794, %v3793
          %v3814 = vpack.c.b16 %v3796, %v3795
          %v3815 = vpack.c.b16 %v3798, %v3797
          %v3816 = vpack.c.b16 %v3800, %v3799
          %3833 = vmatprep.subr.bf16.mxu0 0
          %3834 = vmatpush1.bf16.msra.mxu0 %v3801
          %3835 = vmatprep.subr.bf16.mxu0 0
          %3836 = vmatpush1.bf16.msra.mxu0 %v3802
          %3837 = vmatprep.subr.bf16.mxu0 0
          %3838 = vmatpush1.bf16.msra.mxu0 %v3803
          %3839 = vmatprep.subr.bf16.mxu0 0
          %3840 = vmatpush1.bf16.msra.mxu0 %v3804
          %3841 = vmatprep.subr.bf16.mxu0 0
          %3842 = vmatpush1.bf16.msra.mxu0 %v3805
          %3843 = vmatprep.subr.bf16.mxu0 0
          %3844 = vmatpush1.bf16.msra.mxu0 %v3806
          %3845 = vmatprep.subr.bf16.mxu0 0
          %3846 = vmatpush1.bf16.msra.mxu0 %v3807
          %3847 = vmatprep.subr.bf16.mxu0 0
          %3848 = vmatpush1.bf16.msra.mxu0 %v3808
          %3849 = vmatprep.subr.bf16.mxu0 0
          %3850 = vmatpush1.bf16.msra.mxu0 %v3809
          %3851 = vmatprep.subr.bf16.mxu0 0
          %3852 = vmatpush1.bf16.msra.mxu0 %v3810
          %3853 = vmatprep.subr.bf16.mxu0 0
          %3854 = vmatpush1.bf16.msra.mxu0 %v3811
          %3855 = vmatprep.subr.bf16.mxu0 0
          %3856 = vmatpush1.bf16.msra.mxu0 %v3812
          %3857 = vmatprep.subr.bf16.mxu0 0
          %3858 = vmatpush1.bf16.msra.mxu0 %v3813
          %3859 = vmatprep.subr.bf16.mxu0 0
          %3860 = vmatpush1.bf16.msra.mxu0 %v3814
          %3861 = vmatprep.subr.bf16.mxu0 0
          %3862 = vmatpush1.bf16.msra.mxu0 %v3815
          %3863 = vmatprep.subr.bf16.mxu0 0
          %3864 = vmatpush1.bf16.msra.mxu0 %v3816
          %3865 = vmatprep.mubr.bf16.mxu0 %v3697
          %3866 = vmatmul.mubr.bf16.gmra.mrb[0].mxu0 %v3696
          %v3867 = vpop.f32.mrb[0].mxu0
          %v3868 = vadd.f32 %v3735, %v3867
          %v3869 = vpop.f32.mrb[0].mxu0
          %v3870 = vpop.f32.mrb[0].mxu0
          %v3871 = vadd.f32 %v3735, %v3870
          %v3872 = vpop.f32.mrb[0].mxu0
          %3873 = vdwg.mxu0
          %3874 = vst [vmem:[#allocation32] sm:$0xff] %v3868
          %3875 = vst [vmem:[#allocation32 + $0x8] sm:$0xff] %v3871
        $region220: #{empath_model_forward.1} parent=127 // pred_fallthru
          _
        // Predicated region
        $region221: #{empath_model_forward.1} parent=127 // pred_check
          %p3876 = pneg %p720
        $region222: #{empath_model_forward.1} parent=127 // pred_check_branch
          %3878 = sbr.rel (%p3876) target = $region224
        $region223: #{empath_model_forward.1} parent=127 // pred_region
          %s3880 = ssub.s32 256, 256
          %3881 = vsyncadd [#allocation4], %s3880
          %s3882 = sshll.u32 [#allocation29], 4
          %s3883 = int_to_ptr.vmem [resolvable:$true] %s3882
          %3888 = dma.vmem_to_hbm [thread:$0]  %s3883, 256, %s55, [#allocation4], 128, 128, 8
        $region224: #{empath_model_forward.1} parent=127 // pred_fallthru
          _
        // Predicated region
        $region225: #{empath_model_forward.1} parent=127 // pred_check
          %p3889 = pneg %p741
        $region226: #{empath_model_forward.1} parent=127 // pred_check_branch
          %3891 = sbr.rel (%p3889) target = $region228
        $region227: #{empath_model_forward.1} parent=127 // pred_region
          _
        $region228: #{empath_model_forward.1} parent=127 // pred_fallthru
          _
        // Predicated region
        $region229: #{empath_model_forward.1} parent=127 // pred_check
          %p3892 = pneg %p762
        $region230: #{empath_model_forward.1} parent=127 // pred_check_branch
          %3894 = sbr.rel (%p3892) target = $region232
        $region231: #{empath_model_forward.1} parent=127 // pred_region
          %s3896 = ssub.s32 256, 256
          %3897 = vsyncadd [#allocation31], %s3896
          %s3898 = sshll.u32 [#allocation30], 4
          %s3899 = int_to_ptr.vmem [resolvable:$true] %s3898
          %3904 = dma.vmem_to_hbm [thread:$0]  %s3899, 256, %s59, [#allocation31], 128, 128, 8
        $region232: #{empath_model_forward.1} parent=127 // pred_fallthru
          _
        // Predicated region
        $region233: #{empath_model_forward.1} parent=127 // pred_check
          %p3905 = pneg %p783
        $region234: #{empath_model_forward.1} parent=127 // pred_check_branch
          %3907 = sbr.rel (%p3905) target = $region236
        $region235: #{empath_model_forward.1} parent=127 // pred_region
          %s3909 = ssub.s32 256, 256
          %3910 = vsyncadd [#allocation31], %s3909
          %s3911 = sshll.u32 [#allocation32], 4
          %s3912 = int_to_ptr.vmem [resolvable:$true] %s3911
          %3917 = dma.vmem_to_hbm [thread:$0]  %s3912, 256, %s61, [#allocation31], 128, 128, 8
        $region236: #{empath_model_forward.1} parent=127 // pred_fallthru
          _
        // Predicated region
        $region237: #{empath_model_forward.1} parent=127 // pred_check
          %p3918 = pneg %p720
        $region238: #{empath_model_forward.1} parent=127 // pred_check_branch
          %3920 = sbr.rel (%p3918) target = $region240
        $region239: #{empath_model_forward.1} parent=127 // pred_region
          %3921 = dma.done [#allocation4], 256
        $region240: #{empath_model_forward.1} parent=127 // pred_fallthru
          _
        // Predicated region
        $region241: #{empath_model_forward.1} parent=127 // pred_check
          %p3922 = pneg %p741
        $region242: #{empath_model_forward.1} parent=127 // pred_check_branch
          %3924 = sbr.rel (%p3922) target = $region244
        $region243: #{empath_model_forward.1} parent=127 // pred_region
          _
        $region244: #{empath_model_forward.1} parent=127 // pred_fallthru
          _
        // Predicated region
        $region245: #{empath_model_forward.1} parent=127 // pred_check
          %p3925 = pneg %p762
        $region246: #{empath_model_forward.1} parent=127 // pred_check_branch
          %3927 = sbr.rel (%p3925) target = $region248
        $region247: #{empath_model_forward.1} parent=127 // pred_region
          %3928 = dma.done [#allocation31], 256
        $region248: #{empath_model_forward.1} parent=127 // pred_fallthru
          _
        // Predicated region
        $region249: #{empath_model_forward.1} parent=127 // pred_check
          %p3929 = pneg %p783
        $region250: #{empath_model_forward.1} parent=127 // pred_check_branch
          %3931 = sbr.rel (%p3929) target = $region252
        $region251: #{empath_model_forward.1} parent=127 // pred_region
          %3932 = dma.done [#allocation31], 256
        $region252: #{empath_model_forward.1} parent=127 // pred_fallthru
          _
      $region128: #{empath_model_forward.1} parent=5 // pred_fallthru
        _
      %p3933 = scmp.le.s32.totalorder 2, %s75
      // Predicated region
      $region253: #{empath_model_forward.1} parent=5 // pred_check
        %p3934 = pneg %p3933
      $region254: #{empath_model_forward.1} parent=5 // pred_check_branch
        %3936 = sbr.rel (%p3934) target = $region256
      $region255: #{empath_model_forward.1} parent=5 // pred_region
        %s3937 = ssub.s32 %s75, 2
      $region256: #{empath_model_forward.1} parent=5 // pred_fallthru
        _
    $region6: #{empath_model_forward.1} parent=1 // loop_footer
      %s79 = sadd.s32 1, %s75
    $region7: #{empath_model_forward.1} parent=1 // loop_footer_branch
      %74 = sbr.rel target = $region3
    $region8: #{empath_model_forward.1} parent=1 // loop_exit
      _
    %3938 = vsyncpa [#allocation3], 1
    %s3939 = scalar_lea.sflag [#allocation3], 1
    %3940 = vsyncpa %s3939, 1
    %3941 = vsyncpa [#allocation6], 1
    %3942 = vsyncpa [#allocation9], 1
    %3943 = vsyncpa [#allocation12], 1
    %3944 = vsyncpa [#allocation28], 1
    %3945 = vsyncpa [#allocation4], 1
    %s3946 = scalar_lea.sflag [#allocation4], 1
    %3947 = vsyncpa %s3946, 1
    %3948 = vsyncpa [#allocation31], 1

</llo_original>
